<compile_context>
chip_gen: v6e
topology: v6e:2x2x1
jax: 0.10.0
libtpu: 0.0.40
codegen_flags: <defaults>
</compile_context>

<pallas_src>
import functools
import math

import jax
import jax.numpy as jnp
from jax.experimental import pallas as pl
from jax.experimental.pallas import tpu as pltpu


NEG_SLOPE = 0.2            # LeakyReLU slope used throughout the net
MXU_DTYPE = jnp.bfloat16   # matmul operand dtype (accumulation stays f32)
VMEM_LIMIT = 48 * 1024 * 1024


def _row_tile(H, W):
    """Largest divisor of H keeping a (rows*W, ~32ch) f32 accumulator <=~64KB."""
    target = max(8, 512 // max(W, 1))
    th = 1
    for cand in range(1, H + 1):
        if H % cand == 0 and cand <= target:
            th = cand
    return th


def _zero_index_map(nd, grid_rank):
    if grid_rank == 1:
        return lambda n: (0,) * nd
    return lambda n, r: (0,) * nd


# ----------------------------------------------------------------------------
# Generic 3x3 conv kernel (fea_conv, LR_conv, up convs, HR convs)
# ----------------------------------------------------------------------------
def _conv3x3_kernel(*refs, H, W, TH, cin, cout, has_act, neg_slope, has_res):
    x_ref, w_ref, b_ref = refs[:3]
    idx = 3
    r_ref = None
    if has_res:
        r_ref = refs[idx]
        idx += 1
    o_ref = refs[idx]
    pad_ref = refs[idx + 1]

    rt = pl.program_id(1)

    # Zero-padded copy of the whole image, built once per image at the first
    # row tile and kept VMEM-resident across all row tiles.  The 1-pixel halo
    # is never written -> zero padding semantics.
    @pl.when(rt == 0)
    def _():
        pad_ref[...] = jnp.zeros((H + 2, W + 2, cin), pad_ref.dtype)
        pad_ref[1:H + 1, 1:W + 1, :] = x_ref[0].astype(pad_ref.dtype)

    r0 = pl.multiple_of(rt * TH, TH)

    # 9 tap matmuls, back-to-back into one f32 accumulator (MXU/MRB friendly),
    # bf16 operands, f32 accumulation.
    acc = jnp.zeros((TH * W, cout), jnp.float32)
    for dy in range(3):
        for dx in range(3):
            patch = pad_ref[pl.ds(r0 + dy, TH), dx:dx + W, :]
            patch = patch.reshape(TH * W, cin).astype(MXU_DTYPE)
            acc = acc + jnp.dot(patch, w_ref[dy * 3 + dx],
                                preferred_element_type=jnp.float32)

    # f32 epilogue: bias -> LeakyReLU -> residual.
    acc = acc + b_ref[...].astype(jnp.float32)
    if has_act:
        acc = jnp.where(acc >= 0.0, acc, acc * neg_slope)
    if has_res:
        acc = acc + r_ref[0].reshape(TH * W, cout).astype(jnp.float32)

    # TODO(synk): lane-dense (TH, W*cout) store layout would avoid masked vst
    # for cout<128; this kernel is tap-load/MXU bound (stores <1/9 of VMEM
    # traffic), so the known-good (TH, W, cout) store is kept.
    o_ref[0] = acc.reshape(TH, W, cout).astype(o_ref.dtype)


def conv3x3_pallas(x, cp, *, act_slope=None, residual=None):
    """3x3 conv (stride 1, zero pad 1) + bias [+ LeakyReLU] [+ residual]."""
    N, H, W, cin = x.shape
    cout = cp["w"].shape[-1]
    TH = _row_tile(H, W)
    n_rt = H // TH

    operands = [x, cp["w_lo"], cp["b"]]
    in_specs = [
        pl.BlockSpec((1, H, W, cin), lambda n, r: (n, 0, 0, 0)),   # resident
        pl.BlockSpec((9, cin, cout), lambda n, r: (0, 0, 0)),
        pl.BlockSpec((1, cout), lambda n, r: (0, 0)),
    ]
    if residual is not None:
        operands.append(residual)
        in_specs.append(pl.BlockSpec((1, TH, W, cout),
                                     lambda n, r: (n, r, 0, 0)))

    kernel = functools.partial(
        _conv3x3_kernel, H=H, W=W, TH=TH, cin=cin, cout=cout,
        has_act=act_slope is not None,
        neg_slope=0.0 if act_slope is None else float(act_slope),
        has_res=residual is not None)

    return pl.pallas_call(
        kernel,
        out_shape=jax.ShapeDtypeStruct((N, H, W, cout), x.dtype),
        grid_spec=pltpu.PrefetchScalarGridSpec(
            num_scalar_prefetch=0,
            grid=(N, n_rt),
            in_specs=in_specs,
            out_specs=pl.BlockSpec((1, TH, W, cout), lambda n, r: (n, r, 0, 0)),
            scratch_shapes=[pltpu.VMEM((H + 2, W + 2, cin), jnp.float32)],
        ),
        compiler_params=pltpu.CompilerParams(
            dimension_semantics=("parallel", "arbitrary"),
            vmem_limit_bytes=VMEM_LIMIT),
    )(*operands)


# ----------------------------------------------------------------------------
# Fused ResidualDenseBlock_5C kernel (6 convs, VMEM-resident intermediates)
# ----------------------------------------------------------------------------
def _rdb_kernel(*refs, nc, gc, H, W, rows, neg_slope, has_outer, outer_scale):
    idx = 0
    x_ref = refs[idx]; idx += 1
    outer_ref = None
    if has_outer:
        outer_ref = refs[idx]; idx += 1
    w1, b1, w2, b2, w1x1, w3, b3, w4, b4, w5, b5 = refs[idx:idx + 11]
    idx += 11
    o_ref = refs[idx]
    cat_ref = refs[idx + 1]

    ctot = nc + 4 * gc
    n_chunks = H // rows

    # Shared zero-padded "torch.cat" buffer: channels [0:nc]=x, then x1..x4.
    # Halo is zeroed once and never written -> zero padding for every conv,
    # no per-conv re-pad, no HBM round trips for intermediates.
    cat_ref[...] = jnp.zeros((H + 2, W + 2, ctot), cat_ref.dtype)
    cat_ref[1:H + 1, 1:W + 1, 0:nc] = x_ref[0].astype(cat_ref.dtype)

    def lrelu(v):
        return jnp.where(v >= 0.0, v, v * neg_slope)

    def conv_chunk(cin, w_ref, b_ref, r0, k=3):
        """Conv over output rows [r0, r0+rows), reading the cat channel prefix.

        All concat sources are fused into the contraction (K = cin, up to
        nc+4*gc); taps accumulate back-to-back into one f32 accumulator."""
        cout = w_ref.shape[-1]
        acc = jnp.zeros((rows * W, cout), jnp.float32)
        if k == 3:
            for dy in range(3):
                for dx in range(3):
                    patch = cat_ref[r0 + dy:r0 + dy + rows, dx:dx + W, 0:cin]
                    patch = patch.reshape(rows * W, cin).astype(MXU_DTYPE)
                    acc = acc + jnp.dot(patch, w_ref[dy * 3 + dx],
                                        preferred_element_type=jnp.float32)
        else:  # 1x1 conv reads the un-padded interior
            patch = cat_ref[r0 + 1:r0 + 1 + rows, 1:W + 1, 0:cin]
            patch = patch.reshape(rows * W, cin).astype(MXU_DTYPE)
            acc = jnp.dot(patch, w_ref[0], preferred_element_type=jnp.float32)
        if b_ref is not None:
            acc = acc + b_ref[...].astype(jnp.float32)
        return acc

    def store_feature(val, r0, c0, cw):
        cat_ref[r0 + 1:r0 + 1 + rows, 1:W + 1, c0:c0 + cw] = (
            val.reshape(rows, W, cw).astype(cat_ref.dtype))

    def load_feature(r0, c0, cw):
        v = cat_ref[r0 + 1:r0 + 1 + rows, 1:W + 1, c0:c0 + cw]
        return v.reshape(rows * W, cw).astype(jnp.float32)

    # Row chunking only bounds the live f32 accumulator (<= ~64 KB); every
    # conv stage completes over all chunks before the next stage reads it.
    # x1 = lrelu(conv1(x))
    for c in range(n_chunks):
        r0 = c * rows
        store_feature(lrelu(conv_chunk(nc, w1, b1, r0)), r0, nc, gc)
    # x2 = lrelu(conv2(cat(x, x1))) + conv1x1(x)
    for c in range(n_chunks):
        r0 = c * rows
        v = lrelu(conv_chunk(nc + gc, w2, b2, r0))
        v = v + conv_chunk(nc, w1x1, None, r0, k=1)
        store_feature(v, r0, nc + gc, gc)
    # x3 = lrelu(conv3(cat(x, x1, x2)))
    for c in range(n_chunks):
        r0 = c * rows
        store_feature(lrelu(conv_chunk(nc + 2 * gc, w3, b3, r0)), r0,
                      nc + 2 * gc, gc)
    # x4 = lrelu(conv4(cat(x, x1, x2, x3))) + x2
    for c in range(n_chunks):
        r0 = c * rows
        v = lrelu(conv_chunk(nc + 3 * gc, w4, b4, r0))
        v = v + load_feature(r0, nc + gc, gc)
        store_feature(v, r0, nc + 3 * gc, gc)
    # x5 = conv5(cat(x, x1, x2, x3, x4));  out = x5*0.2 + x
    # RRDB-level `out*0.2 + rrdb_input` is fused here for the third block.
    # TODO(synk): training-time GaussianNoise omitted (inference forward).
    for c in range(n_chunks):
        r0 = c * rows
        v = conv_chunk(nc + 4 * gc, w5, b5, r0)
        xin = x_ref[0, r0:r0 + rows].reshape(rows * W, nc).astype(jnp.float32)
        v = v * 0.2 + xin
        if has_outer:
            outer = outer_ref[0, r0:r0 + rows].reshape(rows * W, nc)
            v = v * outer_scale + outer.astype(jnp.float32)
        o_ref[0, r0:r0 + rows] = v.reshape(rows, W, nc).astype(o_ref.dtype)


def rdb_pallas(p, x, outer_residual=None, outer_scale=0.2):
    """ResidualDenseBlock_5C as ONE fused pallas_call per image."""
    N, H, W, nc = x.shape
    gc = p["w1"].shape[-1]
    ctot = nc + 4 * gc
    rows = _row_tile(H, W)
    has_outer = outer_residual is not None

    operands = [x]
    in_specs = [pl.BlockSpec((1, H, W, nc), lambda n: (n, 0, 0, 0))]
    if has_outer:
        operands.append(outer_residual)
        in_specs.append(pl.BlockSpec((1, H, W, nc), lambda n: (n, 0, 0, 0)))
    for name in ("w1", "b1", "w2", "b2", "w1x1", "w3", "b3", "w4", "b4",
                 "w5", "b5"):
        arr = p[name + "_lo"] if name.startswith("w") else p[name]
        operands.append(arr)
        in_specs.append(pl.BlockSpec(arr.shape, _zero_index_map(arr.ndim, 1)))

    kernel = functools.partial(
        _rdb_kernel, nc=nc, gc=gc, H=H, W=W, rows=rows,
        neg_slope=NEG_SLOPE, has_outer=has_outer,
        outer_scale=float(outer_scale))

    # TODO(synk): for large LR resolutions, add a spatial grid axis with an
    # expanding-halo recompute so the cat scratch is a row tile, not the image.
    return pl.pallas_call(
        kernel,
        out_shape=jax.ShapeDtypeStruct((N, H, W, nc), x.dtype),
        grid_spec=pltpu.PrefetchScalarGridSpec(
            num_scalar_prefetch=0,
            grid=(N,),
            in_specs=in_specs,
            out_specs=pl.BlockSpec((1, H, W, nc), lambda n: (n, 0, 0, 0)),
            scratch_shapes=[pltpu.VMEM((H + 2, W + 2, ctot), jnp.float32)],
        ),
        compiler_params=pltpu.CompilerParams(
            dimension_semantics=("parallel",),
            vmem_limit_bytes=VMEM_LIMIT),
    )(*operands)


# ----------------------------------------------------------------------------
# Pure-JAX reference backends (verification)
# ----------------------------------------------------------------------------
def conv_ref(x, w, b, *, k=3, act_slope=None, residual=None):
    cin, cout = w.shape[1], w.shape[2]
    w4 = w.reshape(k, k, cin, cout)
    pd = (k - 1) // 2
    y = jax.lax.conv_general_dilated(
        x, w4, window_strides=(1, 1), padding=[(pd, pd), (pd, pd)],
        dimension_numbers=("NHWC", "HWIO", "NHWC"),
        precision=jax.lax.Precision.HIGHEST)
    if b is not None:
        y = y + b.reshape(1, 1, 1, cout)
    if act_slope is not None:
        y = jnp.where(y >= 0.0, y, y * act_slope)
    if residual is not None:
        y = y + residual
    return y


def conv3x3_ref(x, cp, *, act_slope=None, residual=None):
    return conv_ref(x, cp["w"], cp["b"], act_slope=act_slope, residual=residual)


def rdb_ref(p, x, outer_residual=None, outer_scale=0.2):
    ns = NEG_SLOPE
    x1 = conv_ref(x, p["w1"], p["b1"], act_slope=ns)
    x2 = conv_ref(jnp.concatenate([x, x1], -1), p["w2"], p["b2"], act_slope=ns)
    x2 = x2 + conv_ref(x, p["w1x1"], None, k=1)
    x3 = conv_ref(jnp.concatenate([x, x1, x2], -1), p["w3"], p["b3"],
                  act_slope=ns)
    x4 = conv_ref(jnp.concatenate([x, x1, x2, x3], -1), p["w4"], p["b4"],
                  act_slope=ns) + x2
    x5 = conv_ref(jnp.concatenate([x, x1, x2, x3, x4], -1), p["w5"], p["b5"])
    out = x5 * 0.2 + x
    if outer_residual is not None:
        out = out * outer_scale + outer_residual
    return out


# ----------------------------------------------------------------------------
# Model forward (mirrors RRDBNet: upconv upsample, norm=None, leakyrelu, CNA)
# ----------------------------------------------------------------------------
def upsample_nearest_2x(x):
    # TODO(synk): nn.Upsample(nearest, 2x) is pure data movement; kept in XLA.
    N, H, W, C = x.shape
    x = jnp.broadcast_to(x[:, :, None, :, None, :], (N, H, 2, W, 2, C))
    return x.reshape(N, 2 * H, 2 * W, C)


def rrdb_forward(p, x, rdb_fn):
    out = rdb_fn(p["rdb1"], x)
    out = rdb_fn(p["rdb2"], out)
    # RRDB's `out.mul(0.2) + x` is fused into the last block's epilogue.
    return rdb_fn(p["rdb3"], out, outer_residual=x, outer_scale=0.2)


def rrdbnet_forward(params, x_nchw, conv_fn, rdb_fn):
    x = jnp.transpose(x_nchw, (0, 2, 3, 1))                # NCHW -> NHWC
    fea = conv_fn(x, params["fea"])
    trunk = fea
    for p_rrdb in params["rrdbs"]:
        trunk = rrdb_forward(p_rrdb, trunk, rdb_fn)
    # LR_conv + ShortcutBlock residual, fused into the conv epilogue.
    fea = conv_fn(trunk, params["lr"], residual=fea)
    for p_up in params["ups"]:
        fea = conv_fn(upsample_nearest_2x(fea), p_up, act_slope=NEG_SLOPE)
    fea = conv_fn(fea, params["hr0"], act_slope=NEG_SLOPE)
    out = conv_fn(fea, params["hr1"])
    return jnp.transpose(out, (0, 3, 1, 2))                # NHWC -> NCHW


# ----------------------------------------------------------------------------
# Parameters
# ----------------------------------------------------------------------------
def _init_conv(key, cin, cout, k=3, bias=True):
    kw, kb = jax.random.split(key)
    std = math.sqrt(2.0 / (cin * k * k))
    w = std * jax.random.normal(kw, (k * k, cin, cout), jnp.float32)
    b = 0.05 * jax.random.normal(kb, (1, cout), jnp.float32) if bias else None
    return {"w": w, "w_lo": w.astype(MXU_DTYPE), "b": b}


def _init_rdb(key, nc, gc):
    k = jax.random.split(key, 6)
    c1 = _init_conv(k[0], nc, gc)
    c2 = _init_conv(k[1], nc + gc, gc)
    c1x1 = _init_conv(k[2], nc, gc, k=1, bias=False)
    c3 = _init_conv(k[3], nc + 2 * gc, gc)
    c4 = _init_conv(k[4], nc + 3 * gc, gc)
    c5 = _init_conv(k[5], nc + 4 * gc, nc)
    return {
        "w1": c1["w"], "w1_lo": c1["w_lo"], "b1": c1["b"],
        "w2": c2["w"], "w2_lo": c2["w_lo"], "b2": c2["b"],
        "w1x1": c1x1["w"], "w1x1_lo": c1x1["w_lo"],
        "w3": c3["w"], "w3_lo": c3["w_lo"], "b3": c3["b"],
        "w4": c4["w"], "w4_lo": c4["w_lo"], "b4": c4["b"],
        "w5": c5["w"], "w5_lo": c5["w_lo"], "b5": c5["b"],
    }


def init_rrdbnet(key, in_nc, out_nc, nf, nb, gc=32, upscale=4):
    n_up = 1 if upscale == 3 else int(math.log(upscale, 2))
    keys = jax.random.split(key, nb + n_up + 4)
    rrdbs = []
    for i in range(nb):
        ks = jax.random.split(keys[1 + i], 3)
        rrdbs.append({"rdb1": _init_rdb(ks[0], nf, gc),
                      "rdb2": _init_rdb(ks[1], nf, gc),
                      "rdb3": _init_rdb(ks[2], nf, gc)})
    return {
        "fea": _init_conv(keys[0], in_nc, nf),
        "rrdbs": rrdbs,
        "lr": _init_conv(keys[1 + nb], nf, nf),
        "ups": [_init_conv(keys[2 + nb + i], nf, nf) for i in range(n_up)],
        "hr0": _init_conv(keys[2 + nb + n_up], nf, nf),
        "hr1": _init_conv(keys[3 + nb + n_up], nf, out_nc),
    }


# ----------------------------------------------------------------------------
if __name__ == "__main__":
    root = jax.random.PRNGKey(0)
    k_param, k_x = jax.random.split(root)

    # Small config consistent with the module: in_nc=out_nc=3, nf=32, nb=1,
    # gc=32, upscale=4.  Input (2, 3, 16, 16) -> output (2, 3, 64, 64).
    params = init_rrdbnet(k_param, in_nc=3, out_nc=3, nf=32, nb=1, gc=32,
                          upscale=4)
    x = jax.random.normal(k_x, (2, 3, 16, 16), dtype=jnp.float32)

    pallas_fwd = jax.jit(
        lambda v: rrdbnet_forward(params, v, conv3x3_pallas, rdb_pallas))
    ref_fwd = jax.jit(
        lambda v: rrdbnet_forward(params, v, conv3x3_ref, rdb_ref))

    def nmax_err(a, b):
        return float(jnp.max(jnp.abs(a - b)) / (jnp.max(jnp.abs(b)) + 1e-8))

    # Per-stage checks (bf16 MXU operands vs f32 reference) so real
    # regressions aren't masked by the loose end-to-end tolerance.
    x_nhwc = jnp.transpose(x, (0, 2, 3, 1))
    fea_p = jax.block_until_ready(
        jax.jit(lambda v: conv3x3_pallas(v, params["fea"]))(x_nhwc))
    fea_r = jax.block_until_ready(
        jax.jit(lambda v: conv3x3_ref(v, params["fea"]))(x_nhwc))
    e0 = nmax_err(fea_p, fea_r)
    assert e0 < 2e-2, f"fea_conv mismatch: {e0}"

    p_rdb = params["rrdbs"][0]["rdb1"]
    rdb_p = jax.block_until_ready(
        jax.jit(lambda v: rdb_pallas(p_rdb, v))(fea_r))
    rdb_r = jax.block_until_ready(
        jax.jit(lambda v: rdb_ref(p_rdb, v))(fea_r))
    e1 = nmax_err(rdb_p, rdb_r)
    assert e1 < 2e-2, f"dense block mismatch: {e1}"

    # End-to-end.
    out = jax.block_until_ready(pallas_fwd(x))
    ref = jax.block_until_ready(ref_fwd(x))
    assert out.shape == (2, 3, 64, 64), out.shape
    err = nmax_err(out, ref)
    assert err < 5e-2, f"pallas vs reference mismatch: normalized max err={err}"
    print("KERNEL_OK")
</pallas_src>

<mosaic_0001>
module attributes {stable_mosaic.version = 11 : i64} {
  func.func @_conv3x3_kernel(%arg0: i32, %arg1: i32, %arg2: memref<1x16x16x3xf32, #tpu.memory_space<vmem>>, %arg3: memref<9x3x32xbf16, #tpu.memory_space<vmem>>, %arg4: memref<1x32xf32, #tpu.memory_space<vmem>>, %arg5: memref<1x16x16x32xf32, #tpu.memory_space<vmem>>, %arg6: memref<18x18x3xf32, #tpu.memory_space<vmem>>) attributes {dimension_semantics = [#tpu.dimension_semantics<parallel>, #tpu.dimension_semantics<arbitrary>], iteration_bounds = array<i64: 2, 1>, scalar_prefetch = 0 : i64, scratch_operands = 1 : i64, tpu.core_type = #tpu.core_type<tc>, window_params = [{transform_indices = @transform_0, window_bounds = array<i64: 1, 16, 16, 3>}, {pipeline_mode = #tpu.pipeline_mode<synchronous>, transform_indices = @transform_1, window_bounds = array<i64: 9, 3, 32>}, {pipeline_mode = #tpu.pipeline_mode<synchronous>, transform_indices = @transform_2, window_bounds = array<i64: 1, 32>}, {transform_indices = @transform_3, window_bounds = array<i64: 1, 16, 16, 32>}]} {
    %c0_i32 = arith.constant 0 : i32
    %0 = arith.cmpi eq, %arg1, %c0_i32 : i32
    %1 = arith.extui %0 : i1 to i32
    %c0_i32_0 = arith.constant 0 : i32
    %2 = arith.cmpi ne, %1, %c0_i32_0 : i32
    scf.if %2 {
      %cst_59 = arith.constant 0.000000e+00 : f32
      %94 = vector.broadcast %cst_59 : f32 to vector<18x18x3xf32>
      %c0_60 = arith.constant 0 : index
      %c0_61 = arith.constant 0 : index
      %c0_62 = arith.constant 0 : index
      %95 = vector.load %arg6[%c0_60, %c0_61, %c0_62] : memref<18x18x3xf32, #tpu.memory_space<vmem>>, vector<18x18x3xf32>
      tpu.vector_store %arg6[%c0_60, %c0_61, %c0_62], %94 {strides = array<i32>} : memref<18x18x3xf32, #tpu.memory_space<vmem>>, vector<18x18x3xf32>,
      %c0_63 = arith.constant 0 : index
      %c0_64 = arith.constant 0 : index
      %c0_65 = arith.constant 0 : index
      %c0_66 = arith.constant 0 : index
      %96 = vector.load %arg2[%c0_63, %c0_64, %c0_65, %c0_66] : memref<1x16x16x3xf32, #tpu.memory_space<vmem>>, vector<1x16x16x3xf32>
      %97 = vector.shape_cast %96 : vector<1x16x16x3xf32> to vector<16x16x3xf32>
      %c1_67 = arith.constant 1 : index
      %c1_68 = arith.constant 1 : index
      %c0_69 = arith.constant 0 : index
      %98 = vector.load %arg6[%c1_67, %c1_68, %c0_69] : memref<18x18x3xf32, #tpu.memory_space<vmem>>, vector<16x16x3xf32>
      tpu.vector_store %arg6[%c1_67, %c1_68, %c0_69], %97 {strides = array<i32>} : memref<18x18x3xf32, #tpu.memory_space<vmem>>, vector<16x16x3xf32>,
    } else {
    }
    %c16_i32 = arith.constant 16 : i32
    %3 = arith.muli %arg1, %c16_i32 : i32
    %4 = tpu.assume_multiple %3, 16 : i32
    %cst = arith.constant 0.000000e+00 : f32
    %5 = vector.broadcast %cst : f32 to vector<256x32xf32>
    %c0_i32_1 = arith.constant 0 : i32
    %6 = arith.addi %4, %c0_i32_1 : i32
    %7 = arith.index_cast %6 : i32 to index
    %c0 = arith.constant 0 : index
    %c0_2 = arith.constant 0 : index
    %8 = vector.load %arg6[%7, %c0, %c0_2] : memref<18x18x3xf32, #tpu.memory_space<vmem>>, vector<16x16x3xf32>
    %9 = vector.shape_cast %8 : vector<16x16x3xf32> to vector<256x3xf32>
    %10 = arith.truncf %9 : vector<256x3xf32> to vector<256x3xbf16>
    %c0_3 = arith.constant 0 : index
    %c0_4 = arith.constant 0 : index
    %c0_5 = arith.constant 0 : index
    %11 = vector.load %arg3[%c0_3, %c0_4, %c0_5] : memref<9x3x32xbf16, #tpu.memory_space<vmem>>, vector<1x3x32xbf16>
    %12 = vector.shape_cast %11 : vector<1x3x32xbf16> to vector<3x32xbf16>
    %cst_6 = arith.constant dense<0.000000e+00> : vector<256x32xf32>
    %13 = tpu.matmul %10, %12, %cst_6 {dimension_numbers = #tpu.dot_dimension_numbers<[1], [0], [0], [1], [0, 0, 1, 1], [], []>} : vector<256x3xbf16>, vector<3x32xbf16>, vector<256x32xf32> -> vector<256x32xf32>
    %14 = arith.addf %5, %13 : vector<256x32xf32>
    %c0_i32_7 = arith.constant 0 : i32
    %15 = arith.addi %4, %c0_i32_7 : i32
    %16 = arith.index_cast %15 : i32 to index
    %c1 = arith.constant 1 : index
    %c0_8 = arith.constant 0 : index
    %17 = vector.load %arg6[%16, %c1, %c0_8] : memref<18x18x3xf32, #tpu.memory_space<vmem>>, vector<16x16x3xf32>
    %18 = vector.shape_cast %17 : vector<16x16x3xf32> to vector<256x3xf32>
    %19 = arith.truncf %18 : vector<256x3xf32> to vector<256x3xbf16>
    %c1_9 = arith.constant 1 : index
    %c0_10 = arith.constant 0 : index
    %c0_11 = arith.constant 0 : index
    %20 = vector.load %arg3[%c1_9, %c0_10, %c0_11] : memref<9x3x32xbf16, #tpu.memory_space<vmem>>, vector<1x3x32xbf16>
    %21 = vector.shape_cast %20 : vector<1x3x32xbf16> to vector<3x32xbf16>
    %cst_12 = arith.constant dense<0.000000e+00> : vector<256x32xf32>
    %22 = tpu.matmul %19, %21, %cst_12 {dimension_numbers = #tpu.dot_dimension_numbers<[1], [0], [0], [1], [0, 0, 1, 1], [], []>} : vector<256x3xbf16>, vector<3x32xbf16>, vector<256x32xf32> -> vector<256x32xf32>
    %23 = arith.addf %14, %22 : vector<256x32xf32>
    %c0_i32_13 = arith.constant 0 : i32
    %24 = arith.addi %4, %c0_i32_13 : i32
    %25 = arith.index_cast %24 : i32 to index
    %c2 = arith.constant 2 : index
    %c0_14 = arith.constant 0 : index
    %26 = vector.load %arg6[%25, %c2, %c0_14] : memref<18x18x3xf32, #tpu.memory_space<vmem>>, vector<16x16x3xf32>
    %27 = vector.shape_cast %26 : vector<16x16x3xf32> to vector<256x3xf32>
    %28 = arith.truncf %27 : vector<256x3xf32> to vector<256x3xbf16>
    %c2_15 = arith.constant 2 : index
    %c0_16 = arith.constant 0 : index
    %c0_17 = arith.constant 0 : index
    %29 = vector.load %arg3[%c2_15, %c0_16, %c0_17] : memref<9x3x32xbf16, #tpu.memory_space<vmem>>, vector<1x3x32xbf16>
    %30 = vector.shape_cast %29 : vector<1x3x32xbf16> to vector<3x32xbf16>
    %cst_18 = arith.constant dense<0.000000e+00> : vector<256x32xf32>
    %31 = tpu.matmul %28, %30, %cst_18 {dimension_numbers = #tpu.dot_dimension_numbers<[1], [0], [0], [1], [0, 0, 1, 1], [], []>} : vector<256x3xbf16>, vector<3x32xbf16>, vector<256x32xf32> -> vector<256x32xf32>
    %32 = arith.addf %23, %31 : vector<256x32xf32>
    %c1_i32 = arith.constant 1 : i32
    %33 = arith.addi %4, %c1_i32 : i32
    %34 = arith.index_cast %33 : i32 to index
    %c0_19 = arith.constant 0 : index
    %c0_20 = arith.constant 0 : index
    %35 = vector.load %arg6[%34, %c0_19, %c0_20] : memref<18x18x3xf32, #tpu.memory_space<vmem>>, vector<16x16x3xf32>
    %36 = vector.shape_cast %35 : vector<16x16x3xf32> to vector<256x3xf32>
    %37 = arith.truncf %36 : vector<256x3xf32> to vector<256x3xbf16>
    %c3 = arith.constant 3 : index
    %c0_21 = arith.constant 0 : index
    %c0_22 = arith.constant 0 : index
    %38 = vector.load %arg3[%c3, %c0_21, %c0_22] : memref<9x3x32xbf16, #tpu.memory_space<vmem>>, vector<1x3x32xbf16>
    %39 = vector.shape_cast %38 : vector<1x3x32xbf16> to vector<3x32xbf16>
    %cst_23 = arith.constant dense<0.000000e+00> : vector<256x32xf32>
    %40 = tpu.matmul %37, %39, %cst_23 {dimension_numbers = #tpu.dot_dimension_numbers<[1], [0], [0], [1], [0, 0, 1, 1], [], []>} : vector<256x3xbf16>, vector<3x32xbf16>, vector<256x32xf32> -> vector<256x32xf32>
    %41 = arith.addf %32, %40 : vector<256x32xf32>
    %c1_i32_24 = arith.constant 1 : i32
    %42 = arith.addi %4, %c1_i32_24 : i32
    %43 = arith.index_cast %42 : i32 to index
    %c1_25 = arith.constant 1 : index
    %c0_26 = arith.constant 0 : index
    %44 = vector.load %arg6[%43, %c1_25, %c0_26] : memref<18x18x3xf32, #tpu.memory_space<vmem>>, vector<16x16x3xf32>
    %45 = vector.shape_cast %44 : vector<16x16x3xf32> to vector<256x3xf32>
    %46 = arith.truncf %45 : vector<256x3xf32> to vector<256x3xbf16>
    %c4 = arith.constant 4 : index
    %c0_27 = arith.constant 0 : index
    %c0_28 = arith.constant 0 : index
    %47 = vector.load %arg3[%c4, %c0_27, %c0_28] : memref<9x3x32xbf16, #tpu.memory_space<vmem>>, vector<1x3x32xbf16>
    %48 = vector.shape_cast %47 : vector<1x3x32xbf16> to vector<3x32xbf16>
    %cst_29 = arith.constant dense<0.000000e+00> : vector<256x32xf32>
    %49 = tpu.matmul %46, %48, %cst_29 {dimension_numbers = #tpu.dot_dimension_numbers<[1], [0], [0], [1], [0, 0, 1, 1], [], []>} : vector<256x3xbf16>, vector<3x32xbf16>, vector<256x32xf32> -> vector<256x32xf32>
    %50 = arith.addf %41, %49 : vector<256x32xf32>
    %c1_i32_30 = arith.constant 1 : i32
    %51 = arith.addi %4, %c1_i32_30 : i32
    %52 = arith.index_cast %51 : i32 to index
    %c2_31 = arith.constant 2 : index
    %c0_32 = arith.constant 0 : index
    %53 = vector.load %arg6[%52, %c2_31, %c0_32] : memref<18x18x3xf32, #tpu.memory_space<vmem>>, vector<16x16x3xf32>
    %54 = vector.shape_cast %53 : vector<16x16x3xf32> to vector<256x3xf32>
    %55 = arith.truncf %54 : vector<256x3xf32> to vector<256x3xbf16>
    %c5 = arith.constant 5 : index
    %c0_33 = arith.constant 0 : index
    %c0_34 = arith.constant 0 : index
    %56 = vector.load %arg3[%c5, %c0_33, %c0_34] : memref<9x3x32xbf16, #tpu.memory_space<vmem>>, vector<1x3x32xbf16>
    %57 = vector.shape_cast %56 : vector<1x3x32xbf16> to vector<3x32xbf16>
    %cst_35 = arith.constant dense<0.000000e+00> : vector<256x32xf32>
    %58 = tpu.matmul %55, %57, %cst_35 {dimension_numbers = #tpu.dot_dimension_numbers<[1], [0], [0], [1], [0, 0, 1, 1], [], []>} : vector<256x3xbf16>, vector<3x32xbf16>, vector<256x32xf32> -> vector<256x32xf32>
    %59 = arith.addf %50, %58 : vector<256x32xf32>
    %c2_i32 = arith.constant 2 : i32
    %60 = arith.addi %4, %c2_i32 : i32
    %61 = arith.index_cast %60 : i32 to index
    %c0_36 = arith.constant 0 : index
    %c0_37 = arith.constant 0 : index
    %62 = vector.load %arg6[%61, %c0_36, %c0_37] : memref<18x18x3xf32, #tpu.memory_space<vmem>>, vector<16x16x3xf32>
    %63 = vector.shape_cast %62 : vector<16x16x3xf32> to vector<256x3xf32>
    %64 = arith.truncf %63 : vector<256x3xf32> to vector<256x3xbf16>
    %c6 = arith.constant 6 : index
    %c0_38 = arith.constant 0 : index
    %c0_39 = arith.constant 0 : index
    %65 = vector.load %arg3[%c6, %c0_38, %c0_39] : memref<9x3x32xbf16, #tpu.memory_space<vmem>>, vector<1x3x32xbf16>
    %66 = vector.shape_cast %65 : vector<1x3x32xbf16> to vector<3x32xbf16>
    %cst_40 = arith.constant dense<0.000000e+00> : vector<256x32xf32>
    %67 = tpu.matmul %64, %66, %cst_40 {dimension_numbers = #tpu.dot_dimension_numbers<[1], [0], [0], [1], [0, 0, 1, 1], [], []>} : vector<256x3xbf16>, vector<3x32xbf16>, vector<256x32xf32> -> vector<256x32xf32>
    %68 = arith.addf %59, %67 : vector<256x32xf32>
    %c2_i32_41 = arith.constant 2 : i32
    %69 = arith.addi %4, %c2_i32_41 : i32
    %70 = arith.index_cast %69 : i32 to index
    %c1_42 = arith.constant 1 : index
    %c0_43 = arith.constant 0 : index
    %71 = vector.load %arg6[%70, %c1_42, %c0_43] : memref<18x18x3xf32, #tpu.memory_space<vmem>>, vector<16x16x3xf32>
    %72 = vector.shape_cast %71 : vector<16x16x3xf32> to vector<256x3xf32>
    %73 = arith.truncf %72 : vector<256x3xf32> to vector<256x3xbf16>
    %c7 = arith.constant 7 : index
    %c0_44 = arith.constant 0 : index
    %c0_45 = arith.constant 0 : index
    %74 = vector.load %arg3[%c7, %c0_44, %c0_45] : memref<9x3x32xbf16, #tpu.memory_space<vmem>>, vector<1x3x32xbf16>
    %75 = vector.shape_cast %74 : vector<1x3x32xbf16> to vector<3x32xbf16>
    %cst_46 = arith.constant dense<0.000000e+00> : vector<256x32xf32>
    %76 = tpu.matmul %73, %75, %cst_46 {dimension_numbers = #tpu.dot_dimension_numbers<[1], [0], [0], [1], [0, 0, 1, 1], [], []>} : vector<256x3xbf16>, vector<3x32xbf16>, vector<256x32xf32> -> vector<256x32xf32>
    %77 = arith.addf %68, %76 : vector<256x32xf32>
    %c2_i32_47 = arith.constant 2 : i32
    %78 = arith.addi %4, %c2_i32_47 : i32
    %79 = arith.index_cast %78 : i32 to index
    %c2_48 = arith.constant 2 : index
    %c0_49 = arith.constant 0 : index
    %80 = vector.load %arg6[%79, %c2_48, %c0_49] : memref<18x18x3xf32, #tpu.memory_space<vmem>>, vector<16x16x3xf32>
    %81 = vector.shape_cast %80 : vector<16x16x3xf32> to vector<256x3xf32>
    %82 = arith.truncf %81 : vector<256x3xf32> to vector<256x3xbf16>
    %c8 = arith.constant 8 : index
    %c0_50 = arith.constant 0 : index
    %c0_51 = arith.constant 0 : index
    %83 = vector.load %arg3[%c8, %c0_50, %c0_51] : memref<9x3x32xbf16, #tpu.memory_space<vmem>>, vector<1x3x32xbf16>
    %84 = vector.shape_cast %83 : vector<1x3x32xbf16> to vector<3x32xbf16>
    %cst_52 = arith.constant dense<0.000000e+00> : vector<256x32xf32>
    %85 = tpu.matmul %82, %84, %cst_52 {dimension_numbers = #tpu.dot_dimension_numbers<[1], [0], [0], [1], [0, 0, 1, 1], [], []>} : vector<256x3xbf16>, vector<3x32xbf16>, vector<256x32xf32> -> vector<256x32xf32>
    %86 = arith.addf %77, %85 : vector<256x32xf32>
    %c0_53 = arith.constant 0 : index
    %c0_54 = arith.constant 0 : index
    %87 = vector.load %arg4[%c0_53, %c0_54] : memref<1x32xf32, #tpu.memory_space<vmem>>, vector<1x32xf32>
    %88 = vector.broadcast %87 : vector<1x32xf32> to vector<256x32xf32>
    %89 = arith.addf %86, %88 : vector<256x32xf32>
    %90 = vector.shape_cast %89 : vector<256x32xf32> to vector<16x16x32xf32>
    %c0_55 = arith.constant 0 : index
    %c0_56 = arith.constant 0 : index
    %c0_57 = arith.constant 0 : index
    %c0_58 = arith.constant 0 : index
    %91 = vector.load %arg5[%c0_55, %c0_56, %c0_57, %c0_58] : memref<1x16x16x32xf32, #tpu.memory_space<vmem>>, vector<1x16x16x32xf32>
    %92 = vector.shape_cast %91 : vector<1x16x16x32xf32> to vector<16x16x32xf32>
    %93 = vector.shape_cast %90 : vector<16x16x32xf32> to vector<1x16x16x32xf32>
    tpu.vector_store %arg5[%c0_55, %c0_56, %c0_57, %c0_58], %93 {strides = array<i32>} : memref<1x16x16x32xf32, #tpu.memory_space<vmem>>, vector<1x16x16x32xf32>,
    return
  }
  func.func @transform_0(%arg0: i32, %arg1: i32) -> (i32, i32, i32, i32) {
    %c0_i32 = arith.constant 0 : i32
    %c0_i32_0 = arith.constant 0 : i32
    %c0_i32_1 = arith.constant 0 : i32
    %c0_i32_2 = arith.constant 0 : i32
    return %arg0, %c0_i32, %c0_i32_0, %c0_i32_1 : i32, i32, i32, i32
  }
  func.func @transform_1(%arg0: i32, %arg1: i32) -> (i32, i32, i32) {
    %c0_i32 = arith.constant 0 : i32
    %c0_i32_0 = arith.constant 0 : i32
    %c0_i32_1 = arith.constant 0 : i32
    %c0_i32_2 = arith.constant 0 : i32
    return %c0_i32, %c0_i32_0, %c0_i32_1 : i32, i32, i32
  }
  func.func @transform_2(%arg0: i32, %arg1: i32) -> (i32, i32) {
    %c0_i32 = arith.constant 0 : i32
    %c0_i32_0 = arith.constant 0 : i32
    %c0_i32_1 = arith.constant 0 : i32
    return %c0_i32, %c0_i32_0 : i32, i32
  }
  func.func @transform_3(%arg0: i32, %arg1: i32) -> (i32, i32, i32, i32) {
    %c0_i32 = arith.constant 0 : i32
    %c0_i32_0 = arith.constant 0 : i32
    %c0_i32_1 = arith.constant 0 : i32
    return %arg0, %arg1, %c0_i32, %c0_i32_0 : i32, i32, i32, i32
  }
}

</mosaic_0001>

<llo_original>
// kernel: _lambda_.1
$region0: #{_lambda_.1}
  #allocation0 [shape = 'u32[]', space=smem, size = 0x4, offset = 0x4, fixed_abs, tag = 'smem constant byte address 0x4 - core index']
  #allocation1 [shape = 'u32[144,128]{1,0:T(1,128)}', space=vmem, size = 0x12000, scoped, tag = 'internal scratch']
  #allocation2 [shape = 'f32[18,18,3]{2,1,0:T(8,128)}', space=vmem, size = 0x36000, scoped, tag = 'scratch operand']
  %s0 = inlined_call_operand.vmem [shape: f32[2,16,16,3], index: 0, kind: input, shape index: {}]
  %s1 = inlined_call_operand.vmem [shape: bf16[9,3,32], index: 1, kind: input, shape index: {}]
  %s2 = inlined_call_operand.vmem [shape: f32[1,32], index: 2, kind: input, shape index: {}]
  %s3 = inlined_call_operand.hbm [shape: f32[2,16,16,32], index: 3, kind: output, shape index: {}]
  %s4 = sld [smem:[#allocation0]]
  $region49: #{_lambda_.1} parent=0
    _
  %s6 = ssub.s32 1, %s4
  %s7 = scalar_select 0, %s6, %s4
  $region1: #{_lambda_.1} parent=0
    #allocation3 [shape = 'u8[262144]{0}', space=vmem, size = 0x40000, scoped, tag = 'output window, operand 0']
    #allocation4 [shape = 's32[2]{0}', space=sflag, size = 0x8, scoped, tag = 'scoped memory for _lambda_.1']
    %8 = vsyncpa [#allocation4], 0
    %s9 = scalar_lea.sflag [#allocation4], 1
    %10 = vsyncpa %s9, 0
    loop: start=0, step=1, limit=4
    $region2: #{_lambda_.1} parent=1 // loop_pre_header
      _
    $region3: #{_lambda_.1} parent=1 // loop_header
      %s12 = sphi 0, %s16
      %p13 = scmp.ge.s32.totalorder %s12, 4
      %s19 = sphi 0, %s31
      %s20 = sphi 0, %s27
      %s21 = sphi 0, %s19
      %s22 = sphi 0, %s20
      %s23 = sphi 0, %s21
      %s24 = sphi 0, %s22
      %s34 = sphi 0, %s36
      %s37 = sphi 0, %s34
      %s38 = sphi 0, %s37
      %s54 = sphi 0, %s38
      %s58 = sphi 0, %s58
      %s60 = sphi 0, %s58
      %s61 = sphi 0, %s60
      %s75 = sphi 0, %s61
      %s79 = sphi 0, %s79
      %s81 = sphi 0, %s79
      %s82 = sphi 0, %s81
      %s96 = sphi 0, %s82
      %s104 = sphi 0, %s106
      %s107 = sphi 0, %s104
      %s108 = sphi 0, %s107
      %s124 = sphi 0, %s108
    $region4: #{_lambda_.1} parent=1 // loop_header_branch
      %15 = sbr.rel (%p13) target = $region8
    $region5: #{_lambda_.1} parent=1 // loop_body
      %s17 = ssub.s32 %s12, 1
      %s18 = ssub.s32 %s12, 2
      %s25 = sadd.s32 1, %s20
      %p26 = scmp.ge.s32.totalorder %s25, 1
      %s27 = scalar_select %p26, 0, %s25
      %s28 = sadd.s32 1, %s19
      %s29 = scalar_select %p26, %s28, %s19
      %p30 = scmp.ge.s32.totalorder %s29, 2
      %s31 = scalar_select %p30, 0, %s29
      %s32 = ssub.s32 %s19, %s31
      %p33 = scmp.eq.s32.totalorder %s32, 0
      %s35 = sadd.s32 %s34, 1
      %s36 = scalar_select %p33, %s34, %s35
      %p39 = pneg %p33
      %p40 = scmp.eq.s32.totalorder %s12, 1
      %p41 = por %p39, %p40
      %p42 = scmp.ne.s32.totalorder %s34, %s37
      %p43 = scmp.eq.s32.totalorder %s12, 0
      %p44 = por %p42, %p43
      %p45 = scmp.ne.s32.totalorder %s34, %s37
      %p46 = scmp.eq.s32.totalorder %s17, 1
      %p47 = por %p45, %p46
      %p48 = scmp.ne.s32.totalorder %s37, %s38
      %p49 = scmp.eq.s32.totalorder %s17, 0
      %p50 = por %p48, %p49
      %p51 = scmp.ne.s32.totalorder %s37, %s38
      %p52 = scmp.eq.s32.totalorder %s18, 1
      %p53 = por %p51, %p52
      %p55 = scmp.ne.s32.totalorder %s38, %s54
      %p56 = scmp.eq.s32.totalorder %s18, 0
      %p57 = por %p55, %p56
      %s59 = sadd.s32 %s58, 1
      %p62 = scmp.eq.s32.totalorder %s12, 1
      %p63 = scmp.ne.s32.totalorder %s58, %s60
      %p64 = scmp.eq.s32.totalorder %s12, 0
      %p65 = por %p63, %p64
      %p66 = scmp.ne.s32.totalorder %s58, %s60
      %p67 = scmp.eq.s32.totalorder %s17, 1
      %p68 = por %p66, %p67
      %p69 = scmp.ne.s32.totalorder %s60, %s61
      %p70 = scmp.eq.s32.totalorder %s17, 0
      %p71 = por %p69, %p70
      %p72 = scmp.ne.s32.totalorder %s60, %s61
      %p73 = scmp.eq.s32.totalorder %s18, 1
      %p74 = por %p72, %p73
      %p76 = scmp.ne.s32.totalorder %s61, %s75
      %p77 = scmp.eq.s32.totalorder %s18, 0
      %p78 = por %p76, %p77
      %s80 = sadd.s32 %s79, 1
      %p83 = scmp.eq.s32.totalorder %s12, 1
      %p84 = scmp.ne.s32.totalorder %s79, %s81
      %p85 = scmp.eq.s32.totalorder %s12, 0
      %p86 = por %p84, %p85
      %p87 = scmp.ne.s32.totalorder %s79, %s81
      %p88 = scmp.eq.s32.totalorder %s17, 1
      %p89 = por %p87, %p88
      %p90 = scmp.ne.s32.totalorder %s81, %s82
      %p91 = scmp.eq.s32.totalorder %s17, 0
      %p92 = por %p90, %p91
      %p93 = scmp.ne.s32.totalorder %s81, %s82
      %p94 = scmp.eq.s32.totalorder %s18, 1
      %p95 = por %p93, %p94
      %p97 = scmp.ne.s32.totalorder %s82, %s96
      %p98 = scmp.eq.s32.totalorder %s18, 0
      %p99 = por %p97, %p98
      %s100 = ssub.s32 %s19, %s31
      %s101 = ssub.s32 %s20, %s27
      %s102 = sor.u32 %s100, %s101
      %p103 = scmp.eq.s32.totalorder %s102, 0
      %s105 = sadd.s32 %s104, 1
      %s106 = scalar_select %p103, %s104, %s105
      %p109 = pneg %p103
      %p110 = scmp.eq.s32.totalorder %s12, 1
      %p111 = por %p109, %p110
      %p112 = scmp.ne.s32.totalorder %s104, %s107
      %p113 = scmp.eq.s32.totalorder %s12, 0
      %p114 = por %p112, %p113
      %p115 = scmp.ne.s32.totalorder %s104, %s107
      %p116 = scmp.eq.s32.totalorder %s17, 1
      %p117 = por %p115, %p116
      %p118 = scmp.ne.s32.totalorder %s107, %s108
      %p119 = scmp.eq.s32.totalorder %s17, 0
      %p120 = por %p118, %p119
      %p121 = scmp.ne.s32.totalorder %s107, %s108
      %p122 = scmp.eq.s32.totalorder %s18, 1
      %p123 = por %p121, %p122
      %p125 = scmp.ne.s32.totalorder %s108, %s124
      %p126 = scmp.eq.s32.totalorder %s18, 0
      %p127 = por %p125, %p126
      %p128 = scmp.le.s32.totalorder 1, %s12
      %p129 = scmp.lt.s32.totalorder %s12, 3
      %p130 = pnand %p128, %p129
      %p131 = pneg %p130
      // Predicated region
      $region9: #{_lambda_.1} parent=5 // pred_check
        _
      $region10: #{_lambda_.1} parent=5 // pred_check_branch
        %133 = sbr.rel (%p130) target = $region12
      $region11: #{_lambda_.1} parent=5 // pred_region
        %s134 = ssub.s32 %s12, 1
        // Predicated region
        $region13: #{_lambda_.1} parent=11 // pred_check
          %p135 = pneg %p71
        $region14: #{_lambda_.1} parent=11 // pred_check_branch
          %137 = sbr.rel (%p135) target = $region16
        $region15: #{_lambda_.1} parent=11 // pred_region
          _
        $region16: #{_lambda_.1} parent=11 // pred_fallthru
          _
        // Predicated region
        $region17: #{_lambda_.1} parent=11 // pred_check
          %p138 = pneg %p92
        $region18: #{_lambda_.1} parent=11 // pred_check_branch
          %140 = sbr.rel (%p138) target = $region20
        $region19: #{_lambda_.1} parent=11 // pred_region
          _
        $region20: #{_lambda_.1} parent=11 // pred_fallthru
          _
      $region12: #{_lambda_.1} parent=5 // pred_fallthru
        _
      %p141 = scmp.lt.s32.totalorder %s12, 2
      // Predicated region
      $region21: #{_lambda_.1} parent=5 // pred_check
        %p142 = pneg %p141
      $region22: #{_lambda_.1} parent=5 // pred_check_branch
        %144 = sbr.rel (%p142) target = $region24
      $region23: #{_lambda_.1} parent=5 // pred_region
        // Predicated region
        $region25: #{_lambda_.1} parent=23 // pred_check
          %p145 = pneg %p44
        $region26: #{_lambda_.1} parent=23 // pred_check_branch
          %147 = sbr.rel (%p145) target = $region28
        $region27: #{_lambda_.1} parent=23 // pred_region
          %p148 = scmp.lt.s32.totalorder %s19, 1
          %s149 = scalar_select %p148, %s19, 1
          %s150 = smul.addr %s149, 32
          %s151 = smul.addr %s150, 8
          %s152 = scalar_lea.vmem %s0, %s151
        $region28: #{_lambda_.1} parent=23 // pred_fallthru
          _
      $region24: #{_lambda_.1} parent=5 // pred_fallthru
        _
      %p153 = scmp.le.s32.totalorder 1, %s12
      %p154 = scmp.lt.s32.totalorder %s12, 3
      %p155 = pnand %p153, %p154
      %p156 = pneg %p155
      // Predicated region
      $region29: #{_lambda_.1} parent=5 // pred_check
        _
      $region30: #{_lambda_.1} parent=5 // pred_check_branch
        %158 = sbr.rel (%p155) target = $region32
      $region31: #{_lambda_.1} parent=5 // pred_region
        %s159 = ssub.s32 %s12, 1
        %p160 = scmp.lt.s32.totalorder %s21, 1
        %s161 = scalar_select %p160, %s21, 1
        %s162 = smul.addr %s161, 32
        %s163 = smul.addr %s162, 8
        %s164 = scalar_lea.vmem %s0, %s163
        %p165 = pneg %p50
        %p166 = pneg %p47
        %p167 = pneg %p71
        %p168 = pneg %p68
        %p169 = pneg %p92
        %p170 = pneg %p89
        %p171 = pneg %p120
        %p172 = pneg %p117
        %s173 = sand.u32 %s107, 1
        %s174 = scalar_lea.sflag [#allocation4], %s173
        %s175 = sand.u32 %s107, 1
        %s176 = smul.addr %s175, 256
        %s177 = scalar_lea.vmem [#allocation3], %s176
        %p178 = scmp.lt.s32.totalorder %s21, 1
        %s179 = scalar_select %p178, %s21, 1
        %s180 = smul.addr %s179, 32
        %s181 = smul.addr %s180, 8
        %s182 = scalar_lea.vmem %s0, %s181
        %s183 = smul.u32 16, %s22
        %p185 = scmp.eq.s32.totalorder %s22, 0
        // Predicated region
        $region33: #{_lambda_.1} parent=31 // pred_check
          %p186 = pneg %p185
        $region34: #{_lambda_.1} parent=31 // pred_check_branch
          %188 = sbr.rel (%p186) target = $region36
        $region35: #{_lambda_.1} parent=31 // pred_region
          %vm189 = vcmask 23552
          %190 = vst.msk [vmem:[#allocation2] sm:$0xff] %vm189, 0.0
          %191 = vst.msk [vmem:[#allocation2 + $0x8] sm:$0xff] %vm189, 0.0
          %vm192 = vcmask 17408
          %193 = vst.msk [vmem:[#allocation2 + $0x10] sm:$0x3] %vm192, 0.0
          %194 = vst.msk [vmem:[#allocation2 + $0x18] sm:$0xff] %vm189, 0.0
          %195 = vst.msk [vmem:[#allocation2 + $0x20] sm:$0xff] %vm189, 0.0
          %196 = vst.msk [vmem:[#allocation2 + $0x28] sm:$0x3] %vm192, 0.0
          %197 = vst.msk [vmem:[#allocation2 + $0x30] sm:$0xff] %vm189, 0.0
          %198 = vst.msk [vmem:[#allocation2 + $0x38] sm:$0xff] %vm189, 0.0
          %199 = vst.msk [vmem:[#allocation2 + $0x40] sm:$0x3] %vm192, 0.0
          %200 = vst.msk [vmem:[#allocation2 + $0x48] sm:$0xff] %vm189, 0.0
          %201 = vst.msk [vmem:[#allocation2 + $0x50] sm:$0xff] %vm189, 0.0
          %202 = vst.msk [vmem:[#allocation2 + $0x58] sm:$0x3] %vm192, 0.0
          %203 = vst.msk [vmem:[#allocation2 + $0x60] sm:$0xff] %vm189, 0.0
          %204 = vst.msk [vmem:[#allocation2 + $0x68] sm:$0xff] %vm189, 0.0
          %205 = vst.msk [vmem:[#allocation2 + $0x70] sm:$0x3] %vm192, 0.0
          %206 = vst.msk [vmem:[#allocation2 + $0x78] sm:$0xff] %vm189, 0.0
          %207 = vst.msk [vmem:[#allocation2 + $0x80] sm:$0xff] %vm189, 0.0
          %208 = vst.msk [vmem:[#allocation2 + $0x88] sm:$0x3] %vm192, 0.0
          %209 = vst.msk [vmem:[#allocation2 + $0x90] sm:$0xff] %vm189, 0.0
          %210 = vst.msk [vmem:[#allocation2 + $0x98] sm:$0xff] %vm189, 0.0
          %211 = vst.msk [vmem:[#allocation2 + $0xa0] sm:$0x3] %vm192, 0.0
          %212 = vst.msk [vmem:[#allocation2 + $0xa8] sm:$0xff] %vm189, 0.0
          %213 = vst.msk [vmem:[#allocation2 + $0xb0] sm:$0xff] %vm189, 0.0
          %214 = vst.msk [vmem:[#allocation2 + $0xb8] sm:$0x3] %vm192, 0.0
          %215 = vst.msk [vmem:[#allocation2 + $0xc0] sm:$0xff] %vm189, 0.0
          %216 = vst.msk [vmem:[#allocation2 + $0xc8] sm:$0xff] %vm189, 0.0
          %217 = vst.msk [vmem:[#allocation2 + $0xd0] sm:$0x3] %vm192, 0.0
          %218 = vst.msk [vmem:[#allocation2 + $0xd8] sm:$0xff] %vm189, 0.0
          %219 = vst.msk [vmem:[#allocation2 + $0xe0] sm:$0xff] %vm189, 0.0
          %220 = vst.msk [vmem:[#allocation2 + $0xe8] sm:$0x3] %vm192, 0.0
          %221 = vst.msk [vmem:[#allocation2 + $0xf0] sm:$0xff] %vm189, 0.0
          %222 = vst.msk [vmem:[#allocation2 + $0xf8] sm:$0xff] %vm189, 0.0
          %223 = vst.msk [vmem:[#allocation2 + $0x100] sm:$0x3] %vm192, 0.0
          %224 = vst.msk [vmem:[#allocation2 + $0x108] sm:$0xff] %vm189, 0.0
          %225 = vst.msk [vmem:[#allocation2 + $0x110] sm:$0xff] %vm189, 0.0
          %226 = vst.msk [vmem:[#allocation2 + $0x118] sm:$0x3] %vm192, 0.0
          %227 = vst.msk [vmem:[#allocation2 + $0x120] sm:$0xff] %vm189, 0.0
          %228 = vst.msk [vmem:[#allocation2 + $0x128] sm:$0xff] %vm189, 0.0
          %229 = vst.msk [vmem:[#allocation2 + $0x130] sm:$0x3] %vm192, 0.0
          %230 = vst.msk [vmem:[#allocation2 + $0x138] sm:$0xff] %vm189, 0.0
          %231 = vst.msk [vmem:[#allocation2 + $0x140] sm:$0xff] %vm189, 0.0
          %232 = vst.msk [vmem:[#allocation2 + $0x148] sm:$0x3] %vm192, 0.0
          %233 = vst.msk [vmem:[#allocation2 + $0x150] sm:$0xff] %vm189, 0.0
          %234 = vst.msk [vmem:[#allocation2 + $0x158] sm:$0xff] %vm189, 0.0
          %235 = vst.msk [vmem:[#allocation2 + $0x160] sm:$0x3] %vm192, 0.0
          %236 = vst.msk [vmem:[#allocation2 + $0x168] sm:$0xff] %vm189, 0.0
          %237 = vst.msk [vmem:[#allocation2 + $0x170] sm:$0xff] %vm189, 0.0
          %238 = vst.msk [vmem:[#allocation2 + $0x178] sm:$0x3] %vm192, 0.0
          %239 = vst.msk [vmem:[#allocation2 + $0x180] sm:$0xff] %vm189, 0.0
          %240 = vst.msk [vmem:[#allocation2 + $0x188] sm:$0xff] %vm189, 0.0
          %241 = vst.msk [vmem:[#allocation2 + $0x190] sm:$0x3] %vm192, 0.0
          %242 = vst.msk [vmem:[#allocation2 + $0x198] sm:$0xff] %vm189, 0.0
          %243 = vst.msk [vmem:[#allocation2 + $0x1a0] sm:$0xff] %vm189, 0.0
          %244 = vst.msk [vmem:[#allocation2 + $0x1a8] sm:$0x3] %vm192, 0.0
          %v245 = vld [vmem:[%s182] sm:$0xff]
          %v246 = vld [vmem:[%s182 + $0x8] sm:$0xff]
          %v247 = vld [vmem:[%s182 + $0x10] sm:$0xff]
          %v248 = vld [vmem:[%s182 + $0x18] sm:$0xff]
          %v249 = vld [vmem:[%s182 + $0x20] sm:$0xff]
          %v250 = vld [vmem:[%s182 + $0x28] sm:$0xff]
          %v251 = vld [vmem:[%s182 + $0x30] sm:$0xff]
          %v252 = vld [vmem:[%s182 + $0x38] sm:$0xff]
          %v253 = vld [vmem:[%s182 + $0x40] sm:$0xff]
          %v254 = vld [vmem:[%s182 + $0x48] sm:$0xff]
          %v255 = vld [vmem:[%s182 + $0x50] sm:$0xff]
          %v256 = vld [vmem:[%s182 + $0x58] sm:$0xff]
          %v257 = vld [vmem:[%s182 + $0x60] sm:$0xff]
          %v258 = vld [vmem:[%s182 + $0x68] sm:$0xff]
          %v259 = vld [vmem:[%s182 + $0x70] sm:$0xff]
          %v260 = vld [vmem:[%s182 + $0x78] sm:$0xff]
          %v261 = vld [vmem:[%s182 + $0x80] sm:$0xff]
          %v262 = vld [vmem:[%s182 + $0x88] sm:$0xff]
          %v263 = vld [vmem:[%s182 + $0x90] sm:$0xff]
          %v264 = vld [vmem:[%s182 + $0x98] sm:$0xff]
          %v265 = vld [vmem:[%s182 + $0xa0] sm:$0xff]
          %v266 = vld [vmem:[%s182 + $0xa8] sm:$0xff]
          %v267 = vld [vmem:[%s182 + $0xb0] sm:$0xff]
          %v268 = vld [vmem:[%s182 + $0xb8] sm:$0xff]
          %v269 = vld [vmem:[%s182 + $0xc0] sm:$0xff]
          %v270 = vld [vmem:[%s182 + $0xc8] sm:$0xff]
          %v271 = vld [vmem:[%s182 + $0xd0] sm:$0xff]
          %v272 = vld [vmem:[%s182 + $0xd8] sm:$0xff]
          %v273 = vld [vmem:[%s182 + $0xe0] sm:$0xff]
          %v274 = vld [vmem:[%s182 + $0xe8] sm:$0xff]
          %v275 = vld [vmem:[%s182 + $0xf0] sm:$0xff]
          %v276 = vld [vmem:[%s182 + $0xf8] sm:$0xff]
          %s277 = scalar_lea.vmem [#allocation2], 24
          %278 = vst.msk [vmem:[%s277 + $0x1] sm:$0xff] %vm189, %v245
          %279 = vst.msk [vmem:[%s277 + $0x9] sm:$0xff] %vm189, %v246
          %280 = vst.msk [vmem:[%s277 + $0x19] sm:$0xff] %vm189, %v247
          %281 = vst.msk [vmem:[%s277 + $0x21] sm:$0xff] %vm189, %v248
          %282 = vst.msk [vmem:[%s277 + $0x31] sm:$0xff] %vm189, %v249
          %283 = vst.msk [vmem:[%s277 + $0x39] sm:$0xff] %vm189, %v250
          %284 = vst.msk [vmem:[%s277 + $0x49] sm:$0xff] %vm189, %v251
          %285 = vst.msk [vmem:[%s277 + $0x51] sm:$0xff] %vm189, %v252
          %286 = vst.msk [vmem:[%s277 + $0x61] sm:$0xff] %vm189, %v253
          %287 = vst.msk [vmem:[%s277 + $0x69] sm:$0xff] %vm189, %v254
          %288 = vst.msk [vmem:[%s277 + $0x79] sm:$0xff] %vm189, %v255
          %289 = vst.msk [vmem:[%s277 + $0x81] sm:$0xff] %vm189, %v256
          %290 = vst.msk [vmem:[%s277 + $0x91] sm:$0xff] %vm189, %v257
          %291 = vst.msk [vmem:[%s277 + $0x99] sm:$0xff] %vm189, %v258
          %292 = vst.msk [vmem:[%s277 + $0xa9] sm:$0xff] %vm189, %v259
          %293 = vst.msk [vmem:[%s277 + $0xb1] sm:$0xff] %vm189, %v260
          %294 = vst.msk [vmem:[%s277 + $0xc1] sm:$0xff] %vm189, %v261
          %295 = vst.msk [vmem:[%s277 + $0xc9] sm:$0xff] %vm189, %v262
          %296 = vst.msk [vmem:[%s277 + $0xd9] sm:$0xff] %vm189, %v263
          %297 = vst.msk [vmem:[%s277 + $0xe1] sm:$0xff] %vm189, %v264
          %298 = vst.msk [vmem:[%s277 + $0xf1] sm:$0xff] %vm189, %v265
          %299 = vst.msk [vmem:[%s277 + $0xf9] sm:$0xff] %vm189, %v266
          %300 = vst.msk [vmem:[%s277 + $0x109] sm:$0xff] %vm189, %v267
          %301 = vst.msk [vmem:[%s277 + $0x111] sm:$0xff] %vm189, %v268
          %302 = vst.msk [vmem:[%s277 + $0x121] sm:$0xff] %vm189, %v269
          %303 = vst.msk [vmem:[%s277 + $0x129] sm:$0xff] %vm189, %v270
          %304 = vst.msk [vmem:[%s277 + $0x139] sm:$0xff] %vm189, %v271
          %305 = vst.msk [vmem:[%s277 + $0x141] sm:$0xff] %vm189, %v272
          %306 = vst.msk [vmem:[%s277 + $0x151] sm:$0xff] %vm189, %v273
          %307 = vst.msk [vmem:[%s277 + $0x159] sm:$0xff] %vm189, %v274
          %308 = vst.msk [vmem:[%s277 + $0x169] sm:$0xff] %vm189, %v275
          %309 = vst.msk [vmem:[%s277 + $0x171] sm:$0xff] %vm189, %v276
        $region36: #{_lambda_.1} parent=31 // pred_fallthru
          _
        %s310 = smul.u32 %s22, 16
        %s311 = smul.u32 %s310, 24
        %s312 = scalar_lea.vmem [#allocation2], %s311
        %v313 = vld [vmem:[%s312] sm:$0xff]
        %v314 = vld [vmem:[%s312 + $0x8] sm:$0xff]
        %v315 = vld [vmem:[%s312 + $0x18] sm:$0xff]
        %v316 = vld [vmem:[%s312 + $0x20] sm:$0xff]
        %v317 = vld [vmem:[%s312 + $0x30] sm:$0xff]
        %v318 = vld [vmem:[%s312 + $0x38] sm:$0xff]
        %v319 = vld [vmem:[%s312 + $0x48] sm:$0xff]
        %v320 = vld [vmem:[%s312 + $0x50] sm:$0xff]
        %v321 = vld [vmem:[%s312 + $0x60] sm:$0xff]
        %v322 = vld [vmem:[%s312 + $0x68] sm:$0xff]
        %v323 = vld [vmem:[%s312 + $0x78] sm:$0xff]
        %v324 = vld [vmem:[%s312 + $0x80] sm:$0xff]
        %v325 = vld [vmem:[%s312 + $0x90] sm:$0xff]
        %v326 = vld [vmem:[%s312 + $0x98] sm:$0xff]
        %v327 = vld [vmem:[%s312 + $0xa8] sm:$0xff]
        %v328 = vld [vmem:[%s312 + $0xb0] sm:$0xff]
        %v329 = vld [vmem:[%s312 + $0xc0] sm:$0xff]
        %v330 = vld [vmem:[%s312 + $0xc8] sm:$0xff]
        %v331 = vld [vmem:[%s312 + $0xd8] sm:$0xff]
        %v332 = vld [vmem:[%s312 + $0xe0] sm:$0xff]
        %v333 = vld [vmem:[%s312 + $0xf0] sm:$0xff]
        %v334 = vld [vmem:[%s312 + $0xf8] sm:$0xff]
        %v335 = vld [vmem:[%s312 + $0x108] sm:$0xff]
        %v336 = vld [vmem:[%s312 + $0x110] sm:$0xff]
        %v337 = vld [vmem:[%s312 + $0x120] sm:$0xff]
        %v338 = vld [vmem:[%s312 + $0x128] sm:$0xff]
        %v339 = vld [vmem:[%s312 + $0x138] sm:$0xff]
        %v340 = vld [vmem:[%s312 + $0x140] sm:$0xff]
        %v341 = vld [vmem:[%s312 + $0x150] sm:$0xff]
        %v342 = vld [vmem:[%s312 + $0x158] sm:$0xff]
        %v343 = vld [vmem:[%s312 + $0x168] sm:$0xff]
        %v344 = vld [vmem:[%s312 + $0x170] sm:$0xff]
        %v345 = vpack.c.bf16 %v314, %v313
        %v346 = vpack.c.bf16 %v316, %v315
        %v347 = vpack.c.bf16 %v318, %v317
        %v348 = vpack.c.bf16 %v320, %v319
        %v349 = vpack.c.bf16 %v322, %v321
        %v350 = vpack.c.bf16 %v324, %v323
        %v351 = vpack.c.bf16 %v326, %v325
        %v352 = vpack.c.bf16 %v328, %v327
        %v353 = vpack.c.bf16 %v330, %v329
        %v354 = vpack.c.bf16 %v332, %v331
        %v355 = vpack.c.bf16 %v334, %v333
        %v356 = vpack.c.bf16 %v336, %v335
        %v357 = vpack.c.bf16 %v338, %v337
        %v358 = vpack.c.bf16 %v340, %v339
        %v359 = vpack.c.bf16 %v342, %v341
        %v360 = vpack.c.bf16 %v344, %v343
        %v361 = vld [vmem:[%s1] sm:$0x3]
        %v362 = vld [vmem:[%s312 + $0x1] sm:$0xff]
        %v363 = vld [vmem:[%s312 + $0x9] sm:$0xff]
        %v364 = vld [vmem:[%s312 + $0x19] sm:$0xff]
        %v365 = vld [vmem:[%s312 + $0x21] sm:$0xff]
        %v366 = vld [vmem:[%s312 + $0x31] sm:$0xff]
        %v367 = vld [vmem:[%s312 + $0x39] sm:$0xff]
        %v368 = vld [vmem:[%s312 + $0x49] sm:$0xff]
        %v369 = vld [vmem:[%s312 + $0x51] sm:$0xff]
        %v370 = vld [vmem:[%s312 + $0x61] sm:$0xff]
        %v371 = vld [vmem:[%s312 + $0x69] sm:$0xff]
        %v372 = vld [vmem:[%s312 + $0x79] sm:$0xff]
        %v373 = vld [vmem:[%s312 + $0x81] sm:$0xff]
        %v374 = vld [vmem:[%s312 + $0x91] sm:$0xff]
        %v375 = vld [vmem:[%s312 + $0x99] sm:$0xff]
        %v376 = vld [vmem:[%s312 + $0xa9] sm:$0xff]
        %v377 = vld [vmem:[%s312 + $0xb1] sm:$0xff]
        %v378 = vld [vmem:[%s312 + $0xc1] sm:$0xff]
        %v379 = vld [vmem:[%s312 + $0xc9] sm:$0xff]
        %v380 = vld [vmem:[%s312 + $0xd9] sm:$0xff]
        %v381 = vld [vmem:[%s312 + $0xe1] sm:$0xff]
        %v382 = vld [vmem:[%s312 + $0xf1] sm:$0xff]
        %v383 = vld [vmem:[%s312 + $0xf9] sm:$0xff]
        %v384 = vld [vmem:[%s312 + $0x109] sm:$0xff]
        %v385 = vld [vmem:[%s312 + $0x111] sm:$0xff]
        %v386 = vld [vmem:[%s312 + $0x121] sm:$0xff]
        %v387 = vld [vmem:[%s312 + $0x129] sm:$0xff]
        %v388 = vld [vmem:[%s312 + $0x139] sm:$0xff]
        %v389 = vld [vmem:[%s312 + $0x141] sm:$0xff]
        %v390 = vld [vmem:[%s312 + $0x151] sm:$0xff]
        %v391 = vld [vmem:[%s312 + $0x159] sm:$0xff]
        %v392 = vld [vmem:[%s312 + $0x169] sm:$0xff]
        %v393 = vld [vmem:[%s312 + $0x171] sm:$0xff]
        %v394 = vpack.c.bf16 %v363, %v362
        %v395 = vpack.c.bf16 %v365, %v364
        %v396 = vpack.c.bf16 %v367, %v366
        %v397 = vpack.c.bf16 %v369, %v368
        %v398 = vpack.c.bf16 %v371, %v370
        %v399 = vpack.c.bf16 %v373, %v372
        %v400 = vpack.c.bf16 %v375, %v374
        %v401 = vpack.c.bf16 %v377, %v376
        %v402 = vpack.c.bf16 %v379, %v378
        %v403 = vpack.c.bf16 %v381, %v380
        %v404 = vpack.c.bf16 %v383, %v382
        %v405 = vpack.c.bf16 %v385, %v384
        %v406 = vpack.c.bf16 %v387, %v386
        %v407 = vpack.c.bf16 %v389, %v388
        %v408 = vpack.c.bf16 %v391, %v390
        %v409 = vpack.c.bf16 %v393, %v392
        %s410 = scalar_lea.vmem %s1, 2
        %v411 = vld [vmem:[%s410] sm:$0x3]
        %vm412 = vcmask 23552
        %v414 = vsel %vm412, %v394, 0
        %v417 = vsel %vm412, %v395, 0
        %v420 = vsel %vm412, %v396, 0
        %v423 = vsel %vm412, %v397, 0
        %v426 = vsel %vm412, %v398, 0
        %v429 = vsel %vm412, %v399, 0
        %v432 = vsel %vm412, %v400, 0
        %v435 = vsel %vm412, %v401, 0
        %v438 = vsel %vm412, %v402, 0
        %v441 = vsel %vm412, %v403, 0
        %v444 = vsel %vm412, %v404, 0
        %v447 = vsel %vm412, %v405, 0
        %v450 = vsel %vm412, %v406, 0
        %v453 = vsel %vm412, %v407, 0
        %v456 = vsel %vm412, %v408, 0
        %v459 = vsel %vm412, %v409, 0
        %vm461 = vcmask 1040384
        %vm462 = vcmask 1041408
        %v463 = vsel %vm461, 4294967295, 65535
        %v464 = vsel %vm462, %v463, 0
        %v466 = vand.u32 %v411, %v464
        %468 = vmatprep.subr.bf16.mxu0 0
        %469 = vmatpush1.bf16.msra.mxu0 0
        %470 = vmatprep.subr.bf16.mxu0 0
        %471 = vmatpush1.bf16.msra.mxu0 0
        %472 = vmatprep.subr.bf16.mxu0 0
        %473 = vmatpush1.bf16.msra.mxu0 0
        %474 = vmatprep.subr.bf16.mxu0 0
        %475 = vmatpush1.bf16.msra.mxu0 0
        %476 = vmatprep.subr.bf16.mxu0 0
        %477 = vmatpush1.bf16.msra.mxu0 0
        %478 = vmatprep.subr.bf16.mxu0 0
        %479 = vmatpush1.bf16.msra.mxu0 0
        %480 = vmatprep.subr.bf16.mxu0 0
        %481 = vmatpush1.bf16.msra.mxu0 0
        %482 = vmatprep.subr.bf16.mxu0 0
        %483 = vmatpush1.bf16.msra.mxu0 %v466
        %484 = vmatprep.subr.bf16.mxu0 0
        %485 = vmatpush2.bf16.msra.mxu0 0
        %486 = vmatprep.subr.bf16.mxu0 0
        %487 = vmatpush2.bf16.msra.mxu0 0
        %488 = vmatprep.subr.bf16.mxu0 0
        %489 = vmatpush2.bf16.msra.mxu0 0
        %490 = vmatprep.subr.bf16.mxu0 0
        %491 = vmatpush2.bf16.msra.mxu0 0
        %492 = vmatprep.subr.bf16.mxu0 0
        %493 = vmatpush2.bf16.msra.mxu0 0
        %494 = vmatprep.subr.bf16.mxu0 0
        %495 = vmatpush2.bf16.msra.mxu0 0
        %496 = vmatprep.subr.bf16.mxu0 0
        %497 = vmatpush2.bf16.msra.mxu0 0
        %498 = vmatprep.subr.bf16.mxu0 0
        %499 = vmatpush2.bf16.msra.mxu0 0
        %500 = vmatprep.mubr.bf16.mxu0 0
        %501 = vmatmul.mubr.bf16.gmra.mxu0 %v414
        %v502 = vpop.f32.mrf.mxu0
        %v503 = vadd.f32 0.0, %v502
        %v504 = vpop.f32.mrf.mxu0
        %v505 = vpop.f32.mrf.mxu0
        %v506 = vadd.f32 0.0, %v505
        %v507 = vpop.f32.mrf.mxu0
        %508 = vmatprep.mubr.bf16.mxu0 0
        %509 = vmatmul.mubr.bf16.gmra.mxu0 %v417
        %v510 = vpop.f32.mrf.mxu0
        %v511 = vadd.f32 0.0, %v510
        %v512 = vpop.f32.mrf.mxu0
        %v513 = vpop.f32.mrf.mxu0
        %v514 = vadd.f32 0.0, %v513
        %v515 = vpop.f32.mrf.mxu0
        %516 = vmatprep.mubr.bf16.mxu0 0
        %517 = vmatmul.mubr.bf16.gmra.mxu0 %v420
        %v518 = vpop.f32.mrf.mxu0
        %v519 = vadd.f32 0.0, %v518
        %v520 = vpop.f32.mrf.mxu0
        %v521 = vpop.f32.mrf.mxu0
        %v522 = vadd.f32 0.0, %v521
        %v523 = vpop.f32.mrf.mxu0
        %524 = vmatprep.mubr.bf16.mxu0 0
        %525 = vmatmul.mubr.bf16.gmra.mxu0 %v423
        %v526 = vpop.f32.mrf.mxu0
        %v527 = vadd.f32 0.0, %v526
        %v528 = vpop.f32.mrf.mxu0
        %v529 = vpop.f32.mrf.mxu0
        %v530 = vadd.f32 0.0, %v529
        %v531 = vpop.f32.mrf.mxu0
        %532 = vmatprep.mubr.bf16.mxu0 0
        %533 = vmatmul.mubr.bf16.gmra.mxu0 %v426
        %v534 = vpop.f32.mrf.mxu0
        %v535 = vadd.f32 0.0, %v534
        %v536 = vpop.f32.mrf.mxu0
        %v537 = vpop.f32.mrf.mxu0
        %v538 = vadd.f32 0.0, %v537
        %v539 = vpop.f32.mrf.mxu0
        %540 = vmatprep.mubr.bf16.mxu0 0
        %541 = vmatmul.mubr.bf16.gmra.mxu0 %v429
        %v542 = vpop.f32.mrf.mxu0
        %v543 = vadd.f32 0.0, %v542
        %v544 = vpop.f32.mrf.mxu0
        %v545 = vpop.f32.mrf.mxu0
        %v546 = vadd.f32 0.0, %v545
        %v547 = vpop.f32.mrf.mxu0
        %548 = vmatprep.mubr.bf16.mxu0 0
        %549 = vmatmul.mubr.bf16.gmra.mxu0 %v432
        %v550 = vpop.f32.mrf.mxu0
        %v551 = vadd.f32 0.0, %v550
        %v552 = vpop.f32.mrf.mxu0
        %v553 = vpop.f32.mrf.mxu0
        %v554 = vadd.f32 0.0, %v553
        %v555 = vpop.f32.mrf.mxu0
        %556 = vmatprep.mubr.bf16.mxu0 0
        %557 = vmatmul.mubr.bf16.gmra.mxu0 %v435
        %v558 = vpop.f32.mrf.mxu0
        %v559 = vadd.f32 0.0, %v558
        %v560 = vpop.f32.mrf.mxu0
        %v561 = vpop.f32.mrf.mxu0
        %v562 = vadd.f32 0.0, %v561
        %v563 = vpop.f32.mrf.mxu0
        %564 = vmatprep.mubr.bf16.mxu0 0
        %565 = vmatmul.mubr.bf16.gmra.mxu0 %v438
        %v566 = vpop.f32.mrf.mxu0
        %v567 = vadd.f32 0.0, %v566
        %v568 = vpop.f32.mrf.mxu0
        %v569 = vpop.f32.mrf.mxu0
        %v570 = vadd.f32 0.0, %v569
        %v571 = vpop.f32.mrf.mxu0
        %572 = vmatprep.mubr.bf16.mxu0 0
        %573 = vmatmul.mubr.bf16.gmra.mxu0 %v441
        %v574 = vpop.f32.mrf.mxu0
        %v575 = vadd.f32 0.0, %v574
        %v576 = vpop.f32.mrf.mxu0
        %v577 = vpop.f32.mrf.mxu0
        %v578 = vadd.f32 0.0, %v577
        %v579 = vpop.f32.mrf.mxu0
        %580 = vmatprep.mubr.bf16.mxu0 0
        %581 = vmatmul.mubr.bf16.gmra.mxu0 %v444
        %v582 = vpop.f32.mrf.mxu0
        %v583 = vadd.f32 0.0, %v582
        %v584 = vpop.f32.mrf.mxu0
        %v585 = vpop.f32.mrf.mxu0
        %v586 = vadd.f32 0.0, %v585
        %v587 = vpop.f32.mrf.mxu0
        %588 = vmatprep.mubr.bf16.mxu0 0
        %589 = vmatmul.mubr.bf16.gmra.mxu0 %v447
        %v590 = vpop.f32.mrf.mxu0
        %v591 = vadd.f32 0.0, %v590
        %v592 = vpop.f32.mrf.mxu0
        %v593 = vpop.f32.mrf.mxu0
        %v594 = vadd.f32 0.0, %v593
        %v595 = vpop.f32.mrf.mxu0
        %596 = vmatprep.mubr.bf16.mxu0 0
        %597 = vmatmul.mubr.bf16.gmra.mxu0 %v450
        %v598 = vpop.f32.mrf.mxu0
        %v599 = vadd.f32 0.0, %v598
        %v600 = vpop.f32.mrf.mxu0
        %v601 = vpop.f32.mrf.mxu0
        %v602 = vadd.f32 0.0, %v601
        %v603 = vpop.f32.mrf.mxu0
        %604 = vmatprep.mubr.bf16.mxu0 0
        %605 = vmatmul.mubr.bf16.gmra.mxu0 %v453
        %v606 = vpop.f32.mrf.mxu0
        %v607 = vadd.f32 0.0, %v606
        %v608 = vpop.f32.mrf.mxu0
        %v609 = vpop.f32.mrf.mxu0
        %v610 = vadd.f32 0.0, %v609
        %v611 = vpop.f32.mrf.mxu0
        %612 = vmatprep.mubr.bf16.mxu0 0
        %613 = vmatmul.mubr.bf16.gmra.mxu0 %v456
        %v614 = vpop.f32.mrf.mxu0
        %v615 = vadd.f32 0.0, %v614
        %v616 = vpop.f32.mrf.mxu0
        %v617 = vpop.f32.mrf.mxu0
        %v618 = vadd.f32 0.0, %v617
        %v619 = vpop.f32.mrf.mxu0
        %620 = vmatprep.mubr.bf16.mxu0 0
        %621 = vmatmul.mubr.bf16.gmra.mxu0 %v459
        %v622 = vpop.f32.mrf.mxu0
        %v623 = vadd.f32 0.0, %v622
        %v624 = vpop.f32.mrf.mxu0
        %v625 = vpop.f32.mrf.mxu0
        %v626 = vadd.f32 0.0, %v625
        %v627 = vpop.f32.mrf.mxu0
        %628 = vdwg.mxu0
        %v630 = vsel %vm412, %v345, 0
        %v633 = vsel %vm412, %v346, 0
        %v636 = vsel %vm412, %v347, 0
        %v639 = vsel %vm412, %v348, 0
        %v642 = vsel %vm412, %v349, 0
        %v645 = vsel %vm412, %v350, 0
        %v648 = vsel %vm412, %v351, 0
        %v651 = vsel %vm412, %v352, 0
        %v654 = vsel %vm412, %v353, 0
        %v657 = vsel %vm412, %v354, 0
        %v660 = vsel %vm412, %v355, 0
        %v663 = vsel %vm412, %v356, 0
        %v666 = vsel %vm412, %v357, 0
        %v669 = vsel %vm412, %v358, 0
        %v672 = vsel %vm412, %v359, 0
        %v675 = vsel %vm412, %v360, 0
        %v678 = vand.u32 %v361, %v464
        %680 = vmatprep.subr.bf16.mxu0 0
        %681 = vmatpush1.bf16.msra.mxu0 0
        %682 = vmatprep.subr.bf16.mxu0 0
        %683 = vmatpush1.bf16.msra.mxu0 0
        %684 = vmatprep.subr.bf16.mxu0 0
        %685 = vmatpush1.bf16.msra.mxu0 0
        %686 = vmatprep.subr.bf16.mxu0 0
        %687 = vmatpush1.bf16.msra.mxu0 0
        %688 = vmatprep.subr.bf16.mxu0 0
        %689 = vmatpush1.bf16.msra.mxu0 0
        %690 = vmatprep.subr.bf16.mxu0 0
        %691 = vmatpush1.bf16.msra.mxu0 0
        %692 = vmatprep.subr.bf16.mxu0 0
        %693 = vmatpush1.bf16.msra.mxu0 0
        %694 = vmatprep.subr.bf16.mxu0 0
        %695 = vmatpush1.bf16.msra.mxu0 %v678
        %696 = vmatprep.subr.bf16.mxu0 0
        %697 = vmatpush2.bf16.msra.mxu0 0
        %698 = vmatprep.subr.bf16.mxu0 0
        %699 = vmatpush2.bf16.msra.mxu0 0
        %700 = vmatprep.subr.bf16.mxu0 0
        %701 = vmatpush2.bf16.msra.mxu0 0
        %702 = vmatprep.subr.bf16.mxu0 0
        %703 = vmatpush2.bf16.msra.mxu0 0
        %704 = vmatprep.subr.bf16.mxu0 0
        %705 = vmatpush2.bf16.msra.mxu0 0
        %706 = vmatprep.subr.bf16.mxu0 0
        %707 = vmatpush2.bf16.msra.mxu0 0
        %708 = vmatprep.subr.bf16.mxu0 0
        %709 = vmatpush2.bf16.msra.mxu0 0
        %710 = vmatprep.subr.bf16.mxu0 0
        %711 = vmatpush2.bf16.msra.mxu0 0
        %712 = vmatprep.mubr.bf16.mxu0 0
        %713 = vmatmul.mubr.bf16.gmra.mxu0 %v630
        %v714 = vpop.f32.mrf.mxu0
        %v715 = vadd.f32 %v503, %v714
        %v716 = vpop.f32.mrf.mxu0
        %v717 = vpop.f32.mrf.mxu0
        %v718 = vadd.f32 %v506, %v717
        %v719 = vpop.f32.mrf.mxu0
        %720 = vmatprep.mubr.bf16.mxu0 0
        %721 = vmatmul.mubr.bf16.gmra.mxu0 %v633
        %v722 = vpop.f32.mrf.mxu0
        %v723 = vadd.f32 %v511, %v722
        %v724 = vpop.f32.mrf.mxu0
        %v725 = vpop.f32.mrf.mxu0
        %v726 = vadd.f32 %v514, %v725
        %v727 = vpop.f32.mrf.mxu0
        %728 = vmatprep.mubr.bf16.mxu0 0
        %729 = vmatmul.mubr.bf16.gmra.mxu0 %v636
        %v730 = vpop.f32.mrf.mxu0
        %v731 = vadd.f32 %v519, %v730
        %v732 = vpop.f32.mrf.mxu0
        %v733 = vpop.f32.mrf.mxu0
        %v734 = vadd.f32 %v522, %v733
        %v735 = vpop.f32.mrf.mxu0
        %736 = vmatprep.mubr.bf16.mxu0 0
        %737 = vmatmul.mubr.bf16.gmra.mxu0 %v639
        %v738 = vpop.f32.mrf.mxu0
        %v739 = vadd.f32 %v527, %v738
        %v740 = vpop.f32.mrf.mxu0
        %v741 = vpop.f32.mrf.mxu0
        %v742 = vadd.f32 %v530, %v741
        %v743 = vpop.f32.mrf.mxu0
        %744 = vmatprep.mubr.bf16.mxu0 0
        %745 = vmatmul.mubr.bf16.gmra.mxu0 %v642
        %v746 = vpop.f32.mrf.mxu0
        %v747 = vadd.f32 %v535, %v746
        %v748 = vpop.f32.mrf.mxu0
        %v749 = vpop.f32.mrf.mxu0
        %v750 = vadd.f32 %v538, %v749
        %v751 = vpop.f32.mrf.mxu0
        %752 = vmatprep.mubr.bf16.mxu0 0
        %753 = vmatmul.mubr.bf16.gmra.mxu0 %v645
        %v754 = vpop.f32.mrf.mxu0
        %v755 = vadd.f32 %v543, %v754
        %v756 = vpop.f32.mrf.mxu0
        %v757 = vpop.f32.mrf.mxu0
        %v758 = vadd.f32 %v546, %v757
        %v759 = vpop.f32.mrf.mxu0
        %760 = vmatprep.mubr.bf16.mxu0 0
        %761 = vmatmul.mubr.bf16.gmra.mxu0 %v648
        %v762 = vpop.f32.mrf.mxu0
        %v763 = vadd.f32 %v551, %v762
        %v764 = vpop.f32.mrf.mxu0
        %v765 = vpop.f32.mrf.mxu0
        %v766 = vadd.f32 %v554, %v765
        %v767 = vpop.f32.mrf.mxu0
        %768 = vmatprep.mubr.bf16.mxu0 0
        %769 = vmatmul.mubr.bf16.gmra.mxu0 %v651
        %v770 = vpop.f32.mrf.mxu0
        %v771 = vadd.f32 %v559, %v770
        %v772 = vpop.f32.mrf.mxu0
        %v773 = vpop.f32.mrf.mxu0
        %v774 = vadd.f32 %v562, %v773
        %v775 = vpop.f32.mrf.mxu0
        %776 = vmatprep.mubr.bf16.mxu0 0
        %777 = vmatmul.mubr.bf16.gmra.mxu0 %v654
        %v778 = vpop.f32.mrf.mxu0
        %v779 = vadd.f32 %v567, %v778
        %v780 = vpop.f32.mrf.mxu0
        %v781 = vpop.f32.mrf.mxu0
        %v782 = vadd.f32 %v570, %v781
        %v783 = vpop.f32.mrf.mxu0
        %784 = vmatprep.mubr.bf16.mxu0 0
        %785 = vmatmul.mubr.bf16.gmra.mxu0 %v657
        %v786 = vpop.f32.mrf.mxu0
        %v787 = vadd.f32 %v575, %v786
        %v788 = vpop.f32.mrf.mxu0
        %v789 = vpop.f32.mrf.mxu0
        %v790 = vadd.f32 %v578, %v789
        %v791 = vpop.f32.mrf.mxu0
        %792 = vmatprep.mubr.bf16.mxu0 0
        %793 = vmatmul.mubr.bf16.gmra.mxu0 %v660
        %v794 = vpop.f32.mrf.mxu0
        %v795 = vadd.f32 %v583, %v794
        %v796 = vpop.f32.mrf.mxu0
        %v797 = vpop.f32.mrf.mxu0
        %v798 = vadd.f32 %v586, %v797
        %v799 = vpop.f32.mrf.mxu0
        %800 = vmatprep.mubr.bf16.mxu0 0
        %801 = vmatmul.mubr.bf16.gmra.mxu0 %v663
        %v802 = vpop.f32.mrf.mxu0
        %v803 = vadd.f32 %v591, %v802
        %v804 = vpop.f32.mrf.mxu0
        %v805 = vpop.f32.mrf.mxu0
        %v806 = vadd.f32 %v594, %v805
        %v807 = vpop.f32.mrf.mxu0
        %808 = vmatprep.mubr.bf16.mxu0 0
        %809 = vmatmul.mubr.bf16.gmra.mxu0 %v666
        %v810 = vpop.f32.mrf.mxu0
        %v811 = vadd.f32 %v599, %v810
        %v812 = vpop.f32.mrf.mxu0
        %v813 = vpop.f32.mrf.mxu0
        %v814 = vadd.f32 %v602, %v813
        %v815 = vpop.f32.mrf.mxu0
        %816 = vmatprep.mubr.bf16.mxu0 0
        %817 = vmatmul.mubr.bf16.gmra.mxu0 %v669
        %v818 = vpop.f32.mrf.mxu0
        %v819 = vadd.f32 %v607, %v818
        %v820 = vpop.f32.mrf.mxu0
        %v821 = vpop.f32.mrf.mxu0
        %v822 = vadd.f32 %v610, %v821
        %v823 = vpop.f32.mrf.mxu0
        %824 = vmatprep.mubr.bf16.mxu0 0
        %825 = vmatmul.mubr.bf16.gmra.mxu0 %v672
        %v826 = vpop.f32.mrf.mxu0
        %v827 = vadd.f32 %v615, %v826
        %v828 = vpop.f32.mrf.mxu0
        %v829 = vpop.f32.mrf.mxu0
        %v830 = vadd.f32 %v618, %v829
        %v831 = vpop.f32.mrf.mxu0
        %832 = vmatprep.mubr.bf16.mxu0 0
        %833 = vmatmul.mubr.bf16.gmra.mxu0 %v675
        %v834 = vpop.f32.mrf.mxu0
        %v835 = vadd.f32 %v623, %v834
        %v836 = vpop.f32.mrf.mxu0
        %v837 = vpop.f32.mrf.mxu0
        %v838 = vadd.f32 %v626, %v837
        %v839 = vpop.f32.mrf.mxu0
        %840 = vdwg.mxu0
        %v841 = vld [vmem:[%s312 + $0x2] sm:$0xff]
        %v842 = vld [vmem:[%s312 + $0xa] sm:$0xff]
        %v843 = vld [vmem:[%s312 + $0x1a] sm:$0xff]
        %v844 = vld [vmem:[%s312 + $0x22] sm:$0xff]
        %v845 = vld [vmem:[%s312 + $0x32] sm:$0xff]
        %v846 = vld [vmem:[%s312 + $0x3a] sm:$0xff]
        %v847 = vld [vmem:[%s312 + $0x4a] sm:$0xff]
        %v848 = vld [vmem:[%s312 + $0x52] sm:$0xff]
        %v849 = vld [vmem:[%s312 + $0x62] sm:$0xff]
        %v850 = vld [vmem:[%s312 + $0x6a] sm:$0xff]
        %v851 = vld [vmem:[%s312 + $0x7a] sm:$0xff]
        %v852 = vld [vmem:[%s312 + $0x82] sm:$0xff]
        %v853 = vld [vmem:[%s312 + $0x92] sm:$0xff]
        %v854 = vld [vmem:[%s312 + $0x9a] sm:$0xff]
        %v855 = vld [vmem:[%s312 + $0xaa] sm:$0xff]
        %v856 = vld [vmem:[%s312 + $0xb2] sm:$0xff]
        %v857 = vld [vmem:[%s312 + $0xc2] sm:$0xff]
        %v858 = vld [vmem:[%s312 + $0xca] sm:$0xff]
        %v859 = vld [vmem:[%s312 + $0xda] sm:$0xff]
        %v860 = vld [vmem:[%s312 + $0xe2] sm:$0xff]
        %v861 = vld [vmem:[%s312 + $0xf2] sm:$0xff]
        %v862 = vld [vmem:[%s312 + $0xfa] sm:$0xff]
        %v863 = vld [vmem:[%s312 + $0x10a] sm:$0xff]
        %v864 = vld [vmem:[%s312 + $0x112] sm:$0xff]
        %v865 = vld [vmem:[%s312 + $0x122] sm:$0xff]
        %v866 = vld [vmem:[%s312 + $0x12a] sm:$0xff]
        %v867 = vld [vmem:[%s312 + $0x13a] sm:$0xff]
        %v868 = vld [vmem:[%s312 + $0x142] sm:$0xff]
        %v869 = vld [vmem:[%s312 + $0x152] sm:$0xff]
        %v870 = vld [vmem:[%s312 + $0x15a] sm:$0xff]
        %v871 = vld [vmem:[%s312 + $0x16a] sm:$0xff]
        %v872 = vld [vmem:[%s312 + $0x172] sm:$0xff]
        %v873 = vpack.c.bf16 %v842, %v841
        %v874 = vpack.c.bf16 %v844, %v843
        %v875 = vpack.c.bf16 %v846, %v845
        %v876 = vpack.c.bf16 %v848, %v847
        %v877 = vpack.c.bf16 %v850, %v849
        %v878 = vpack.c.bf16 %v852, %v851
        %v879 = vpack.c.bf16 %v854, %v853
        %v880 = vpack.c.bf16 %v856, %v855
        %v881 = vpack.c.bf16 %v858, %v857
        %v882 = vpack.c.bf16 %v860, %v859
        %v883 = vpack.c.bf16 %v862, %v861
        %v884 = vpack.c.bf16 %v864, %v863
        %v885 = vpack.c.bf16 %v866, %v865
        %v886 = vpack.c.bf16 %v868, %v867
        %v887 = vpack.c.bf16 %v870, %v869
        %v888 = vpack.c.bf16 %v872, %v871
        %s889 = scalar_lea.vmem %s1, 4
        %v890 = vld [vmem:[%s889] sm:$0x3]
        %v892 = vsel %vm412, %v873, 0
        %v895 = vsel %vm412, %v874, 0
        %v898 = vsel %vm412, %v875, 0
        %v901 = vsel %vm412, %v876, 0
        %v904 = vsel %vm412, %v877, 0
        %v907 = vsel %vm412, %v878, 0
        %v910 = vsel %vm412, %v879, 0
        %v913 = vsel %vm412, %v880, 0
        %v916 = vsel %vm412, %v881, 0
        %v919 = vsel %vm412, %v882, 0
        %v922 = vsel %vm412, %v883, 0
        %v925 = vsel %vm412, %v884, 0
        %v928 = vsel %vm412, %v885, 0
        %v931 = vsel %vm412, %v886, 0
        %v934 = vsel %vm412, %v887, 0
        %v937 = vsel %vm412, %v888, 0
        %v940 = vand.u32 %v890, %v464
        %942 = vmatprep.subr.bf16.mxu0 0
        %943 = vmatpush1.bf16.msra.mxu0 0
        %944 = vmatprep.subr.bf16.mxu0 0
        %945 = vmatpush1.bf16.msra.mxu0 0
        %946 = vmatprep.subr.bf16.mxu0 0
        %947 = vmatpush1.bf16.msra.mxu0 0
        %948 = vmatprep.subr.bf16.mxu0 0
        %949 = vmatpush1.bf16.msra.mxu0 0
        %950 = vmatprep.subr.bf16.mxu0 0
        %951 = vmatpush1.bf16.msra.mxu0 0
        %952 = vmatprep.subr.bf16.mxu0 0
        %953 = vmatpush1.bf16.msra.mxu0 0
        %954 = vmatprep.subr.bf16.mxu0 0
        %955 = vmatpush1.bf16.msra.mxu0 0
        %956 = vmatprep.subr.bf16.mxu0 0
        %957 = vmatpush1.bf16.msra.mxu0 %v940
        %958 = vmatprep.subr.bf16.mxu0 0
        %959 = vmatpush2.bf16.msra.mxu0 0
        %960 = vmatprep.subr.bf16.mxu0 0
        %961 = vmatpush2.bf16.msra.mxu0 0
        %962 = vmatprep.subr.bf16.mxu0 0
        %963 = vmatpush2.bf16.msra.mxu0 0
        %964 = vmatprep.subr.bf16.mxu0 0
        %965 = vmatpush2.bf16.msra.mxu0 0
        %966 = vmatprep.subr.bf16.mxu0 0
        %967 = vmatpush2.bf16.msra.mxu0 0
        %968 = vmatprep.subr.bf16.mxu0 0
        %969 = vmatpush2.bf16.msra.mxu0 0
        %970 = vmatprep.subr.bf16.mxu0 0
        %971 = vmatpush2.bf16.msra.mxu0 0
        %972 = vmatprep.subr.bf16.mxu0 0
        %973 = vmatpush2.bf16.msra.mxu0 0
        %974 = vmatprep.mubr.bf16.mxu0 0
        %975 = vmatmul.mubr.bf16.gmra.mxu0 %v892
        %v976 = vpop.f32.mrf.mxu0
        %v977 = vadd.f32 0.0, %v976
        %v978 = vpop.f32.mrf.mxu0
        %v979 = vpop.f32.mrf.mxu0
        %v980 = vadd.f32 0.0, %v979
        %v981 = vpop.f32.mrf.mxu0
        %982 = vmatprep.mubr.bf16.mxu0 0
        %983 = vmatmul.mubr.bf16.gmra.mxu0 %v895
        %v984 = vpop.f32.mrf.mxu0
        %v985 = vadd.f32 0.0, %v984
        %v986 = vpop.f32.mrf.mxu0
        %v987 = vpop.f32.mrf.mxu0
        %v988 = vadd.f32 0.0, %v987
        %v989 = vpop.f32.mrf.mxu0
        %990 = vmatprep.mubr.bf16.mxu0 0
        %991 = vmatmul.mubr.bf16.gmra.mxu0 %v898
        %v992 = vpop.f32.mrf.mxu0
        %v993 = vadd.f32 0.0, %v992
        %v994 = vpop.f32.mrf.mxu0
        %v995 = vpop.f32.mrf.mxu0
        %v996 = vadd.f32 0.0, %v995
        %v997 = vpop.f32.mrf.mxu0
        %998 = vmatprep.mubr.bf16.mxu0 0
        %999 = vmatmul.mubr.bf16.gmra.mxu0 %v901
        %v1000 = vpop.f32.mrf.mxu0
        %v1001 = vadd.f32 0.0, %v1000
        %v1002 = vpop.f32.mrf.mxu0
        %v1003 = vpop.f32.mrf.mxu0
        %v1004 = vadd.f32 0.0, %v1003
        %v1005 = vpop.f32.mrf.mxu0
        %1006 = vmatprep.mubr.bf16.mxu0 0
        %1007 = vmatmul.mubr.bf16.gmra.mxu0 %v904
        %v1008 = vpop.f32.mrf.mxu0
        %v1009 = vadd.f32 0.0, %v1008
        %v1010 = vpop.f32.mrf.mxu0
        %v1011 = vpop.f32.mrf.mxu0
        %v1012 = vadd.f32 0.0, %v1011
        %v1013 = vpop.f32.mrf.mxu0
        %1014 = vmatprep.mubr.bf16.mxu0 0
        %1015 = vmatmul.mubr.bf16.gmra.mxu0 %v907
        %v1016 = vpop.f32.mrf.mxu0
        %v1017 = vadd.f32 0.0, %v1016
        %v1018 = vpop.f32.mrf.mxu0
        %v1019 = vpop.f32.mrf.mxu0
        %v1020 = vadd.f32 0.0, %v1019
        %v1021 = vpop.f32.mrf.mxu0
        %1022 = vmatprep.mubr.bf16.mxu0 0
        %1023 = vmatmul.mubr.bf16.gmra.mxu0 %v910
        %v1024 = vpop.f32.mrf.mxu0
        %v1025 = vadd.f32 0.0, %v1024
        %v1026 = vpop.f32.mrf.mxu0
        %v1027 = vpop.f32.mrf.mxu0
        %v1028 = vadd.f32 0.0, %v1027
        %v1029 = vpop.f32.mrf.mxu0
        %1030 = vmatprep.mubr.bf16.mxu0 0
        %1031 = vmatmul.mubr.bf16.gmra.mxu0 %v913
        %v1032 = vpop.f32.mrf.mxu0
        %v1033 = vadd.f32 0.0, %v1032
        %v1034 = vpop.f32.mrf.mxu0
        %v1035 = vpop.f32.mrf.mxu0
        %v1036 = vadd.f32 0.0, %v1035
        %v1037 = vpop.f32.mrf.mxu0
        %1038 = vmatprep.mubr.bf16.mxu0 0
        %1039 = vmatmul.mubr.bf16.gmra.mxu0 %v916
        %v1040 = vpop.f32.mrf.mxu0
        %v1041 = vadd.f32 0.0, %v1040
        %v1042 = vpop.f32.mrf.mxu0
        %v1043 = vpop.f32.mrf.mxu0
        %v1044 = vadd.f32 0.0, %v1043
        %v1045 = vpop.f32.mrf.mxu0
        %1046 = vmatprep.mubr.bf16.mxu0 0
        %1047 = vmatmul.mubr.bf16.gmra.mxu0 %v919
        %v1048 = vpop.f32.mrf.mxu0
        %v1049 = vadd.f32 0.0, %v1048
        %v1050 = vpop.f32.mrf.mxu0
        %v1051 = vpop.f32.mrf.mxu0
        %v1052 = vadd.f32 0.0, %v1051
        %v1053 = vpop.f32.mrf.mxu0
        %1054 = vmatprep.mubr.bf16.mxu0 0
        %1055 = vmatmul.mubr.bf16.gmra.mxu0 %v922
        %v1056 = vpop.f32.mrf.mxu0
        %v1057 = vadd.f32 0.0, %v1056
        %v1058 = vpop.f32.mrf.mxu0
        %v1059 = vpop.f32.mrf.mxu0
        %v1060 = vadd.f32 0.0, %v1059
        %v1061 = vpop.f32.mrf.mxu0
        %1062 = vmatprep.mubr.bf16.mxu0 0
        %1063 = vmatmul.mubr.bf16.gmra.mxu0 %v925
        %v1064 = vpop.f32.mrf.mxu0
        %v1065 = vadd.f32 0.0, %v1064
        %v1066 = vpop.f32.mrf.mxu0
        %v1067 = vpop.f32.mrf.mxu0
        %v1068 = vadd.f32 0.0, %v1067
        %v1069 = vpop.f32.mrf.mxu0
        %1070 = vmatprep.mubr.bf16.mxu0 0
        %1071 = vmatmul.mubr.bf16.gmra.mxu0 %v928
        %v1072 = vpop.f32.mrf.mxu0
        %v1073 = vadd.f32 0.0, %v1072
        %v1074 = vpop.f32.mrf.mxu0
        %v1075 = vpop.f32.mrf.mxu0
        %v1076 = vadd.f32 0.0, %v1075
        %v1077 = vpop.f32.mrf.mxu0
        %1078 = vmatprep.mubr.bf16.mxu0 0
        %1079 = vmatmul.mubr.bf16.gmra.mxu0 %v931
        %v1080 = vpop.f32.mrf.mxu0
        %v1081 = vadd.f32 0.0, %v1080
        %v1082 = vpop.f32.mrf.mxu0
        %v1083 = vpop.f32.mrf.mxu0
        %v1084 = vadd.f32 0.0, %v1083
        %v1085 = vpop.f32.mrf.mxu0
        %1086 = vmatprep.mubr.bf16.mxu0 0
        %1087 = vmatmul.mubr.bf16.gmra.mxu0 %v934
        %v1088 = vpop.f32.mrf.mxu0
        %v1089 = vadd.f32 0.0, %v1088
        %v1090 = vpop.f32.mrf.mxu0
        %v1091 = vpop.f32.mrf.mxu0
        %v1092 = vadd.f32 0.0, %v1091
        %v1093 = vpop.f32.mrf.mxu0
        %1094 = vmatprep.mubr.bf16.mxu0 0
        %1095 = vmatmul.mubr.bf16.gmra.mxu0 %v937
        %v1096 = vpop.f32.mrf.mxu0
        %v1097 = vadd.f32 0.0, %v1096
        %v1098 = vpop.f32.mrf.mxu0
        %v1099 = vpop.f32.mrf.mxu0
        %v1100 = vadd.f32 0.0, %v1099
        %v1101 = vpop.f32.mrf.mxu0
        %1102 = vdwg.mxu0
        %v1103 = vadd.f32 %v715, %v977
        %v1104 = vadd.f32 %v718, %v980
        %v1105 = vadd.f32 %v723, %v985
        %v1106 = vadd.f32 %v726, %v988
        %v1107 = vadd.f32 %v731, %v993
        %v1108 = vadd.f32 %v734, %v996
        %v1109 = vadd.f32 %v739, %v1001
        %v1110 = vadd.f32 %v742, %v1004
        %v1111 = vadd.f32 %v747, %v1009
        %v1112 = vadd.f32 %v750, %v1012
        %v1113 = vadd.f32 %v755, %v1017
        %v1114 = vadd.f32 %v758, %v1020
        %v1115 = vadd.f32 %v763, %v1025
        %v1116 = vadd.f32 %v766, %v1028
        %v1117 = vadd.f32 %v771, %v1033
        %v1118 = vadd.f32 %v774, %v1036
        %v1119 = vadd.f32 %v779, %v1041
        %v1120 = vadd.f32 %v782, %v1044
        %v1121 = vadd.f32 %v787, %v1049
        %v1122 = vadd.f32 %v790, %v1052
        %v1123 = vadd.f32 %v795, %v1057
        %v1124 = vadd.f32 %v798, %v1060
        %v1125 = vadd.f32 %v803, %v1065
        %v1126 = vadd.f32 %v806, %v1068
        %v1127 = vadd.f32 %v811, %v1073
        %v1128 = vadd.f32 %v814, %v1076
        %v1129 = vadd.f32 %v819, %v1081
        %v1130 = vadd.f32 %v822, %v1084
        %v1131 = vadd.f32 %v827, %v1089
        %v1132 = vadd.f32 %v830, %v1092
        %v1133 = vadd.f32 %v835, %v1097
        %v1134 = vadd.f32 %v838, %v1100
        %s1135 = sadd.s32 %s310, 1
        %s1136 = smul.u32 %s1135, 24
        %s1137 = scalar_lea.vmem [#allocation2], %s1136
        %v1138 = vld [vmem:[%s1137] sm:$0xff]
        %v1139 = vld [vmem:[%s1137 + $0x8] sm:$0xff]
        %v1140 = vld [vmem:[%s1137 + $0x18] sm:$0xff]
        %v1141 = vld [vmem:[%s1137 + $0x20] sm:$0xff]
        %v1142 = vld [vmem:[%s1137 + $0x30] sm:$0xff]
        %v1143 = vld [vmem:[%s1137 + $0x38] sm:$0xff]
        %v1144 = vld [vmem:[%s1137 + $0x48] sm:$0xff]
        %v1145 = vld [vmem:[%s1137 + $0x50] sm:$0xff]
        %v1146 = vld [vmem:[%s1137 + $0x60] sm:$0xff]
        %v1147 = vld [vmem:[%s1137 + $0x68] sm:$0xff]
        %v1148 = vld [vmem:[%s1137 + $0x78] sm:$0xff]
        %v1149 = vld [vmem:[%s1137 + $0x80] sm:$0xff]
        %v1150 = vld [vmem:[%s1137 + $0x90] sm:$0xff]
        %v1151 = vld [vmem:[%s1137 + $0x98] sm:$0xff]
        %v1152 = vld [vmem:[%s1137 + $0xa8] sm:$0xff]
        %v1153 = vld [vmem:[%s1137 + $0xb0] sm:$0xff]
        %v1154 = vld [vmem:[%s1137 + $0xc0] sm:$0xff]
        %v1155 = vld [vmem:[%s1137 + $0xc8] sm:$0xff]
        %v1156 = vld [vmem:[%s1137 + $0xd8] sm:$0xff]
        %v1157 = vld [vmem:[%s1137 + $0xe0] sm:$0xff]
        %v1158 = vld [vmem:[%s1137 + $0xf0] sm:$0xff]
        %v1159 = vld [vmem:[%s1137 + $0xf8] sm:$0xff]
        %v1160 = vld [vmem:[%s1137 + $0x108] sm:$0xff]
        %v1161 = vld [vmem:[%s1137 + $0x110] sm:$0xff]
        %v1162 = vld [vmem:[%s1137 + $0x120] sm:$0xff]
        %v1163 = vld [vmem:[%s1137 + $0x128] sm:$0xff]
        %v1164 = vld [vmem:[%s1137 + $0x138] sm:$0xff]
        %v1165 = vld [vmem:[%s1137 + $0x140] sm:$0xff]
        %v1166 = vld [vmem:[%s1137 + $0x150] sm:$0xff]
        %v1167 = vld [vmem:[%s1137 + $0x158] sm:$0xff]
        %v1168 = vld [vmem:[%s1137 + $0x168] sm:$0xff]
        %v1169 = vld [vmem:[%s1137 + $0x170] sm:$0xff]
        %v1170 = vpack.c.bf16 %v1139, %v1138
        %v1171 = vpack.c.bf16 %v1141, %v1140
        %v1172 = vpack.c.bf16 %v1143, %v1142
        %v1173 = vpack.c.bf16 %v1145, %v1144
        %v1174 = vpack.c.bf16 %v1147, %v1146
        %v1175 = vpack.c.bf16 %v1149, %v1148
        %v1176 = vpack.c.bf16 %v1151, %v1150
        %v1177 = vpack.c.bf16 %v1153, %v1152
        %v1178 = vpack.c.bf16 %v1155, %v1154
        %v1179 = vpack.c.bf16 %v1157, %v1156
        %v1180 = vpack.c.bf16 %v1159, %v1158
        %v1181 = vpack.c.bf16 %v1161, %v1160
        %v1182 = vpack.c.bf16 %v1163, %v1162
        %v1183 = vpack.c.bf16 %v1165, %v1164
        %v1184 = vpack.c.bf16 %v1167, %v1166
        %v1185 = vpack.c.bf16 %v1169, %v1168
        %s1186 = scalar_lea.vmem %s1, 6
        %v1187 = vld [vmem:[%s1186] sm:$0x3]
        %v1189 = vsel %vm412, %v1170, 0
        %v1192 = vsel %vm412, %v1171, 0
        %v1195 = vsel %vm412, %v1172, 0
        %v1198 = vsel %vm412, %v1173, 0
        %v1201 = vsel %vm412, %v1174, 0
        %v1204 = vsel %vm412, %v1175, 0
        %v1207 = vsel %vm412, %v1176, 0
        %v1210 = vsel %vm412, %v1177, 0
        %v1213 = vsel %vm412, %v1178, 0
        %v1216 = vsel %vm412, %v1179, 0
        %v1219 = vsel %vm412, %v1180, 0
        %v1222 = vsel %vm412, %v1181, 0
        %v1225 = vsel %vm412, %v1182, 0
        %v1228 = vsel %vm412, %v1183, 0
        %v1231 = vsel %vm412, %v1184, 0
        %v1234 = vsel %vm412, %v1185, 0
        %v1237 = vand.u32 %v1187, %v464
        %1239 = vmatprep.subr.bf16.mxu0 0
        %1240 = vmatpush1.bf16.msra.mxu0 0
        %1241 = vmatprep.subr.bf16.mxu0 0
        %1242 = vmatpush1.bf16.msra.mxu0 0
        %1243 = vmatprep.subr.bf16.mxu0 0
        %1244 = vmatpush1.bf16.msra.mxu0 0
        %1245 = vmatprep.subr.bf16.mxu0 0
        %1246 = vmatpush1.bf16.msra.mxu0 0
        %1247 = vmatprep.subr.bf16.mxu0 0
        %1248 = vmatpush1.bf16.msra.mxu0 0
        %1249 = vmatprep.subr.bf16.mxu0 0
        %1250 = vmatpush1.bf16.msra.mxu0 0
        %1251 = vmatprep.subr.bf16.mxu0 0
        %1252 = vmatpush1.bf16.msra.mxu0 0
        %1253 = vmatprep.subr.bf16.mxu0 0
        %1254 = vmatpush1.bf16.msra.mxu0 %v1237
        %1255 = vmatprep.subr.bf16.mxu0 0
        %1256 = vmatpush2.bf16.msra.mxu0 0
        %1257 = vmatprep.subr.bf16.mxu0 0
        %1258 = vmatpush2.bf16.msra.mxu0 0
        %1259 = vmatprep.subr.bf16.mxu0 0
        %1260 = vmatpush2.bf16.msra.mxu0 0
        %1261 = vmatprep.subr.bf16.mxu0 0
        %1262 = vmatpush2.bf16.msra.mxu0 0
        %1263 = vmatprep.subr.bf16.mxu0 0
        %1264 = vmatpush2.bf16.msra.mxu0 0
        %1265 = vmatprep.subr.bf16.mxu0 0
        %1266 = vmatpush2.bf16.msra.mxu0 0
        %1267 = vmatprep.subr.bf16.mxu0 0
        %1268 = vmatpush2.bf16.msra.mxu0 0
        %1269 = vmatprep.subr.bf16.mxu0 0
        %1270 = vmatpush2.bf16.msra.mxu0 0
        %1271 = vmatprep.mubr.bf16.mxu0 0
        %1272 = vmatmul.mubr.bf16.gmra.mxu0 %v1189
        %v1273 = vpop.f32.mrf.mxu0
        %v1274 = vadd.f32 0.0, %v1273
        %v1275 = vpop.f32.mrf.mxu0
        %v1276 = vpop.f32.mrf.mxu0
        %v1277 = vadd.f32 0.0, %v1276
        %v1278 = vpop.f32.mrf.mxu0
        %1279 = vmatprep.mubr.bf16.mxu0 0
        %1280 = vmatmul.mubr.bf16.gmra.mxu0 %v1192
        %v1281 = vpop.f32.mrf.mxu0
        %v1282 = vadd.f32 0.0, %v1281
        %v1283 = vpop.f32.mrf.mxu0
        %v1284 = vpop.f32.mrf.mxu0
        %v1285 = vadd.f32 0.0, %v1284
        %v1286 = vpop.f32.mrf.mxu0
        %1287 = vmatprep.mubr.bf16.mxu0 0
        %1288 = vmatmul.mubr.bf16.gmra.mxu0 %v1195
        %v1289 = vpop.f32.mrf.mxu0
        %v1290 = vadd.f32 0.0, %v1289
        %v1291 = vpop.f32.mrf.mxu0
        %v1292 = vpop.f32.mrf.mxu0
        %v1293 = vadd.f32 0.0, %v1292
        %v1294 = vpop.f32.mrf.mxu0
        %1295 = vmatprep.mubr.bf16.mxu0 0
        %1296 = vmatmul.mubr.bf16.gmra.mxu0 %v1198
        %v1297 = vpop.f32.mrf.mxu0
        %v1298 = vadd.f32 0.0, %v1297
        %v1299 = vpop.f32.mrf.mxu0
        %v1300 = vpop.f32.mrf.mxu0
        %v1301 = vadd.f32 0.0, %v1300
        %v1302 = vpop.f32.mrf.mxu0
        %1303 = vmatprep.mubr.bf16.mxu0 0
        %1304 = vmatmul.mubr.bf16.gmra.mxu0 %v1201
        %v1305 = vpop.f32.mrf.mxu0
        %v1306 = vadd.f32 0.0, %v1305
        %v1307 = vpop.f32.mrf.mxu0
        %v1308 = vpop.f32.mrf.mxu0
        %v1309 = vadd.f32 0.0, %v1308
        %v1310 = vpop.f32.mrf.mxu0
        %1311 = vmatprep.mubr.bf16.mxu0 0
        %1312 = vmatmul.mubr.bf16.gmra.mxu0 %v1204
        %v1313 = vpop.f32.mrf.mxu0
        %v1314 = vadd.f32 0.0, %v1313
        %v1315 = vpop.f32.mrf.mxu0
        %v1316 = vpop.f32.mrf.mxu0
        %v1317 = vadd.f32 0.0, %v1316
        %v1318 = vpop.f32.mrf.mxu0
        %1319 = vmatprep.mubr.bf16.mxu0 0
        %1320 = vmatmul.mubr.bf16.gmra.mxu0 %v1207
        %v1321 = vpop.f32.mrf.mxu0
        %v1322 = vadd.f32 0.0, %v1321
        %v1323 = vpop.f32.mrf.mxu0
        %v1324 = vpop.f32.mrf.mxu0
        %v1325 = vadd.f32 0.0, %v1324
        %v1326 = vpop.f32.mrf.mxu0
        %1327 = vmatprep.mubr.bf16.mxu0 0
        %1328 = vmatmul.mubr.bf16.gmra.mxu0 %v1210
        %v1329 = vpop.f32.mrf.mxu0
        %v1330 = vadd.f32 0.0, %v1329
        %v1331 = vpop.f32.mrf.mxu0
        %v1332 = vpop.f32.mrf.mxu0
        %v1333 = vadd.f32 0.0, %v1332
        %v1334 = vpop.f32.mrf.mxu0
        %1335 = vmatprep.mubr.bf16.mxu0 0
        %1336 = vmatmul.mubr.bf16.gmra.mxu0 %v1213
        %v1337 = vpop.f32.mrf.mxu0
        %v1338 = vadd.f32 0.0, %v1337
        %v1339 = vpop.f32.mrf.mxu0
        %v1340 = vpop.f32.mrf.mxu0
        %v1341 = vadd.f32 0.0, %v1340
        %v1342 = vpop.f32.mrf.mxu0
        %1343 = vmatprep.mubr.bf16.mxu0 0
        %1344 = vmatmul.mubr.bf16.gmra.mxu0 %v1216
        %v1345 = vpop.f32.mrf.mxu0
        %v1346 = vadd.f32 0.0, %v1345
        %v1347 = vpop.f32.mrf.mxu0
        %v1348 = vpop.f32.mrf.mxu0
        %v1349 = vadd.f32 0.0, %v1348
        %v1350 = vpop.f32.mrf.mxu0
        %1351 = vmatprep.mubr.bf16.mxu0 0
        %1352 = vmatmul.mubr.bf16.gmra.mxu0 %v1219
        %v1353 = vpop.f32.mrf.mxu0
        %v1354 = vadd.f32 0.0, %v1353
        %v1355 = vpop.f32.mrf.mxu0
        %v1356 = vpop.f32.mrf.mxu0
        %v1357 = vadd.f32 0.0, %v1356
        %v1358 = vpop.f32.mrf.mxu0
        %1359 = vmatprep.mubr.bf16.mxu0 0
        %1360 = vmatmul.mubr.bf16.gmra.mxu0 %v1222
        %v1361 = vpop.f32.mrf.mxu0
        %v1362 = vadd.f32 0.0, %v1361
        %v1363 = vpop.f32.mrf.mxu0
        %v1364 = vpop.f32.mrf.mxu0
        %v1365 = vadd.f32 0.0, %v1364
        %v1366 = vpop.f32.mrf.mxu0
        %1367 = vmatprep.mubr.bf16.mxu0 0
        %1368 = vmatmul.mubr.bf16.gmra.mxu0 %v1225
        %v1369 = vpop.f32.mrf.mxu0
        %v1370 = vadd.f32 0.0, %v1369
        %v1371 = vpop.f32.mrf.mxu0
        %v1372 = vpop.f32.mrf.mxu0
        %v1373 = vadd.f32 0.0, %v1372
        %v1374 = vpop.f32.mrf.mxu0
        %1375 = vmatprep.mubr.bf16.mxu0 0
        %1376 = vmatmul.mubr.bf16.gmra.mxu0 %v1228
        %v1377 = vpop.f32.mrf.mxu0
        %v1378 = vadd.f32 0.0, %v1377
        %v1379 = vpop.f32.mrf.mxu0
        %v1380 = vpop.f32.mrf.mxu0
        %v1381 = vadd.f32 0.0, %v1380
        %v1382 = vpop.f32.mrf.mxu0
        %1383 = vmatprep.mubr.bf16.mxu0 0
        %1384 = vmatmul.mubr.bf16.gmra.mxu0 %v1231
        %v1385 = vpop.f32.mrf.mxu0
        %v1386 = vadd.f32 0.0, %v1385
        %v1387 = vpop.f32.mrf.mxu0
        %v1388 = vpop.f32.mrf.mxu0
        %v1389 = vadd.f32 0.0, %v1388
        %v1390 = vpop.f32.mrf.mxu0
        %1391 = vmatprep.mubr.bf16.mxu0 0
        %1392 = vmatmul.mubr.bf16.gmra.mxu0 %v1234
        %v1393 = vpop.f32.mrf.mxu0
        %v1394 = vadd.f32 0.0, %v1393
        %v1395 = vpop.f32.mrf.mxu0
        %v1396 = vpop.f32.mrf.mxu0
        %v1397 = vadd.f32 0.0, %v1396
        %v1398 = vpop.f32.mrf.mxu0
        %1399 = vdwg.mxu0
        %v1400 = vadd.f32 %v1103, %v1274
        %v1401 = vadd.f32 %v1104, %v1277
        %v1402 = vadd.f32 %v1105, %v1282
        %v1403 = vadd.f32 %v1106, %v1285
        %v1404 = vadd.f32 %v1107, %v1290
        %v1405 = vadd.f32 %v1108, %v1293
        %v1406 = vadd.f32 %v1109, %v1298
        %v1407 = vadd.f32 %v1110, %v1301
        %v1408 = vadd.f32 %v1111, %v1306
        %v1409 = vadd.f32 %v1112, %v1309
        %v1410 = vadd.f32 %v1113, %v1314
        %v1411 = vadd.f32 %v1114, %v1317
        %v1412 = vadd.f32 %v1115, %v1322
        %v1413 = vadd.f32 %v1116, %v1325
        %v1414 = vadd.f32 %v1117, %v1330
        %v1415 = vadd.f32 %v1118, %v1333
        %v1416 = vadd.f32 %v1119, %v1338
        %v1417 = vadd.f32 %v1120, %v1341
        %v1418 = vadd.f32 %v1121, %v1346
        %v1419 = vadd.f32 %v1122, %v1349
        %v1420 = vadd.f32 %v1123, %v1354
        %v1421 = vadd.f32 %v1124, %v1357
        %v1422 = vadd.f32 %v1125, %v1362
        %v1423 = vadd.f32 %v1126, %v1365
        %v1424 = vadd.f32 %v1127, %v1370
        %v1425 = vadd.f32 %v1128, %v1373
        %v1426 = vadd.f32 %v1129, %v1378
        %v1427 = vadd.f32 %v1130, %v1381
        %v1428 = vadd.f32 %v1131, %v1386
        %v1429 = vadd.f32 %v1132, %v1389
        %v1430 = vadd.f32 %v1133, %v1394
        %v1431 = vadd.f32 %v1134, %v1397
        %v1432 = vld [vmem:[%s1137 + $0x1] sm:$0xff]
        %v1433 = vld [vmem:[%s1137 + $0x9] sm:$0xff]
        %v1434 = vld [vmem:[%s1137 + $0x19] sm:$0xff]
        %v1435 = vld [vmem:[%s1137 + $0x21] sm:$0xff]
        %v1436 = vld [vmem:[%s1137 + $0x31] sm:$0xff]
        %v1437 = vld [vmem:[%s1137 + $0x39] sm:$0xff]
        %v1438 = vld [vmem:[%s1137 + $0x49] sm:$0xff]
        %v1439 = vld [vmem:[%s1137 + $0x51] sm:$0xff]
        %v1440 = vld [vmem:[%s1137 + $0x61] sm:$0xff]
        %v1441 = vld [vmem:[%s1137 + $0x69] sm:$0xff]
        %v1442 = vld [vmem:[%s1137 + $0x79] sm:$0xff]
        %v1443 = vld [vmem:[%s1137 + $0x81] sm:$0xff]
        %v1444 = vld [vmem:[%s1137 + $0x91] sm:$0xff]
        %v1445 = vld [vmem:[%s1137 + $0x99] sm:$0xff]
        %v1446 = vld [vmem:[%s1137 + $0xa9] sm:$0xff]
        %v1447 = vld [vmem:[%s1137 + $0xb1] sm:$0xff]
        %v1448 = vld [vmem:[%s1137 + $0xc1] sm:$0xff]
        %v1449 = vld [vmem:[%s1137 + $0xc9] sm:$0xff]
        %v1450 = vld [vmem:[%s1137 + $0xd9] sm:$0xff]
        %v1451 = vld [vmem:[%s1137 + $0xe1] sm:$0xff]
        %v1452 = vld [vmem:[%s1137 + $0xf1] sm:$0xff]
        %v1453 = vld [vmem:[%s1137 + $0xf9] sm:$0xff]
        %v1454 = vld [vmem:[%s1137 + $0x109] sm:$0xff]
        %v1455 = vld [vmem:[%s1137 + $0x111] sm:$0xff]
        %v1456 = vld [vmem:[%s1137 + $0x121] sm:$0xff]
        %v1457 = vld [vmem:[%s1137 + $0x129] sm:$0xff]
        %v1458 = vld [vmem:[%s1137 + $0x139] sm:$0xff]
        %v1459 = vld [vmem:[%s1137 + $0x141] sm:$0xff]
        %v1460 = vld [vmem:[%s1137 + $0x151] sm:$0xff]
        %v1461 = vld [vmem:[%s1137 + $0x159] sm:$0xff]
        %v1462 = vld [vmem:[%s1137 + $0x169] sm:$0xff]
        %v1463 = vld [vmem:[%s1137 + $0x171] sm:$0xff]
        %v1464 = vpack.c.bf16 %v1433, %v1432
        %v1465 = vpack.c.bf16 %v1435, %v1434
        %v1466 = vpack.c.bf16 %v1437, %v1436
        %v1467 = vpack.c.bf16 %v1439, %v1438
        %v1468 = vpack.c.bf16 %v1441, %v1440
        %v1469 = vpack.c.bf16 %v1443, %v1442
        %v1470 = vpack.c.bf16 %v1445, %v1444
        %v1471 = vpack.c.bf16 %v1447, %v1446
        %v1472 = vpack.c.bf16 %v1449, %v1448
        %v1473 = vpack.c.bf16 %v1451, %v1450
        %v1474 = vpack.c.bf16 %v1453, %v1452
        %v1475 = vpack.c.bf16 %v1455, %v1454
        %v1476 = vpack.c.bf16 %v1457, %v1456
        %v1477 = vpack.c.bf16 %v1459, %v1458
        %v1478 = vpack.c.bf16 %v1461, %v1460
        %v1479 = vpack.c.bf16 %v1463, %v1462
        %s1480 = scalar_lea.vmem %s1, 8
        %v1481 = vld [vmem:[%s1480] sm:$0x3]
        %v1483 = vsel %vm412, %v1464, 0
        %v1486 = vsel %vm412, %v1465, 0
        %v1489 = vsel %vm412, %v1466, 0
        %v1492 = vsel %vm412, %v1467, 0
        %v1495 = vsel %vm412, %v1468, 0
        %v1498 = vsel %vm412, %v1469, 0
        %v1501 = vsel %vm412, %v1470, 0
        %v1504 = vsel %vm412, %v1471, 0
        %v1507 = vsel %vm412, %v1472, 0
        %v1510 = vsel %vm412, %v1473, 0
        %v1513 = vsel %vm412, %v1474, 0
        %v1516 = vsel %vm412, %v1475, 0
        %v1519 = vsel %vm412, %v1476, 0
        %v1522 = vsel %vm412, %v1477, 0
        %v1525 = vsel %vm412, %v1478, 0
        %v1528 = vsel %vm412, %v1479, 0
        %v1531 = vand.u32 %v1481, %v464
        %1533 = vmatprep.subr.bf16.mxu0 0
        %1534 = vmatpush1.bf16.msra.mxu0 0
        %1535 = vmatprep.subr.bf16.mxu0 0
        %1536 = vmatpush1.bf16.msra.mxu0 0
        %1537 = vmatprep.subr.bf16.mxu0 0
        %1538 = vmatpush1.bf16.msra.mxu0 0
        %1539 = vmatprep.subr.bf16.mxu0 0
        %1540 = vmatpush1.bf16.msra.mxu0 0
        %1541 = vmatprep.subr.bf16.mxu0 0
        %1542 = vmatpush1.bf16.msra.mxu0 0
        %1543 = vmatprep.subr.bf16.mxu0 0
        %1544 = vmatpush1.bf16.msra.mxu0 0
        %1545 = vmatprep.subr.bf16.mxu0 0
        %1546 = vmatpush1.bf16.msra.mxu0 0
        %1547 = vmatprep.subr.bf16.mxu0 0
        %1548 = vmatpush1.bf16.msra.mxu0 %v1531
        %1549 = vmatprep.subr.bf16.mxu0 0
        %1550 = vmatpush2.bf16.msra.mxu0 0
        %1551 = vmatprep.subr.bf16.mxu0 0
        %1552 = vmatpush2.bf16.msra.mxu0 0
        %1553 = vmatprep.subr.bf16.mxu0 0
        %1554 = vmatpush2.bf16.msra.mxu0 0
        %1555 = vmatprep.subr.bf16.mxu0 0
        %1556 = vmatpush2.bf16.msra.mxu0 0
        %1557 = vmatprep.subr.bf16.mxu0 0
        %1558 = vmatpush2.bf16.msra.mxu0 0
        %1559 = vmatprep.subr.bf16.mxu0 0
        %1560 = vmatpush2.bf16.msra.mxu0 0
        %1561 = vmatprep.subr.bf16.mxu0 0
        %1562 = vmatpush2.bf16.msra.mxu0 0
        %1563 = vmatprep.subr.bf16.mxu0 0
        %1564 = vmatpush2.bf16.msra.mxu0 0
        %1565 = vmatprep.mubr.bf16.mxu0 0
        %1566 = vmatmul.mubr.bf16.gmra.mxu0 %v1483
        %v1567 = vpop.f32.mrf.mxu0
        %v1568 = vadd.f32 0.0, %v1567
        %v1569 = vpop.f32.mrf.mxu0
        %v1570 = vpop.f32.mrf.mxu0
        %v1571 = vadd.f32 0.0, %v1570
        %v1572 = vpop.f32.mrf.mxu0
        %1573 = vmatprep.mubr.bf16.mxu0 0
        %1574 = vmatmul.mubr.bf16.gmra.mxu0 %v1486
        %v1575 = vpop.f32.mrf.mxu0
        %v1576 = vadd.f32 0.0, %v1575
        %v1577 = vpop.f32.mrf.mxu0
        %v1578 = vpop.f32.mrf.mxu0
        %v1579 = vadd.f32 0.0, %v1578
        %v1580 = vpop.f32.mrf.mxu0
        %1581 = vmatprep.mubr.bf16.mxu0 0
        %1582 = vmatmul.mubr.bf16.gmra.mxu0 %v1489
        %v1583 = vpop.f32.mrf.mxu0
        %v1584 = vadd.f32 0.0, %v1583
        %v1585 = vpop.f32.mrf.mxu0
        %v1586 = vpop.f32.mrf.mxu0
        %v1587 = vadd.f32 0.0, %v1586
        %v1588 = vpop.f32.mrf.mxu0
        %1589 = vmatprep.mubr.bf16.mxu0 0
        %1590 = vmatmul.mubr.bf16.gmra.mxu0 %v1492
        %v1591 = vpop.f32.mrf.mxu0
        %v1592 = vadd.f32 0.0, %v1591
        %v1593 = vpop.f32.mrf.mxu0
        %v1594 = vpop.f32.mrf.mxu0
        %v1595 = vadd.f32 0.0, %v1594
        %v1596 = vpop.f32.mrf.mxu0
        %1597 = vmatprep.mubr.bf16.mxu0 0
        %1598 = vmatmul.mubr.bf16.gmra.mxu0 %v1495
        %v1599 = vpop.f32.mrf.mxu0
        %v1600 = vadd.f32 0.0, %v1599
        %v1601 = vpop.f32.mrf.mxu0
        %v1602 = vpop.f32.mrf.mxu0
        %v1603 = vadd.f32 0.0, %v1602
        %v1604 = vpop.f32.mrf.mxu0
        %1605 = vmatprep.mubr.bf16.mxu0 0
        %1606 = vmatmul.mubr.bf16.gmra.mxu0 %v1498
        %v1607 = vpop.f32.mrf.mxu0
        %v1608 = vadd.f32 0.0, %v1607
        %v1609 = vpop.f32.mrf.mxu0
        %v1610 = vpop.f32.mrf.mxu0
        %v1611 = vadd.f32 0.0, %v1610
        %v1612 = vpop.f32.mrf.mxu0
        %1613 = vmatprep.mubr.bf16.mxu0 0
        %1614 = vmatmul.mubr.bf16.gmra.mxu0 %v1501
        %v1615 = vpop.f32.mrf.mxu0
        %v1616 = vadd.f32 0.0, %v1615
        %v1617 = vpop.f32.mrf.mxu0
        %v1618 = vpop.f32.mrf.mxu0
        %v1619 = vadd.f32 0.0, %v1618
        %v1620 = vpop.f32.mrf.mxu0
        %1621 = vmatprep.mubr.bf16.mxu0 0
        %1622 = vmatmul.mubr.bf16.gmra.mxu0 %v1504
        %v1623 = vpop.f32.mrf.mxu0
        %v1624 = vadd.f32 0.0, %v1623
        %v1625 = vpop.f32.mrf.mxu0
        %v1626 = vpop.f32.mrf.mxu0
        %v1627 = vadd.f32 0.0, %v1626
        %v1628 = vpop.f32.mrf.mxu0
        %1629 = vmatprep.mubr.bf16.mxu0 0
        %1630 = vmatmul.mubr.bf16.gmra.mxu0 %v1507
        %v1631 = vpop.f32.mrf.mxu0
        %v1632 = vadd.f32 0.0, %v1631
        %v1633 = vpop.f32.mrf.mxu0
        %v1634 = vpop.f32.mrf.mxu0
        %v1635 = vadd.f32 0.0, %v1634
        %v1636 = vpop.f32.mrf.mxu0
        %1637 = vmatprep.mubr.bf16.mxu0 0
        %1638 = vmatmul.mubr.bf16.gmra.mxu0 %v1510
        %v1639 = vpop.f32.mrf.mxu0
        %v1640 = vadd.f32 0.0, %v1639
        %v1641 = vpop.f32.mrf.mxu0
        %v1642 = vpop.f32.mrf.mxu0
        %v1643 = vadd.f32 0.0, %v1642
        %v1644 = vpop.f32.mrf.mxu0
        %1645 = vmatprep.mubr.bf16.mxu0 0
        %1646 = vmatmul.mubr.bf16.gmra.mxu0 %v1513
        %v1647 = vpop.f32.mrf.mxu0
        %v1648 = vadd.f32 0.0, %v1647
        %v1649 = vpop.f32.mrf.mxu0
        %v1650 = vpop.f32.mrf.mxu0
        %v1651 = vadd.f32 0.0, %v1650
        %v1652 = vpop.f32.mrf.mxu0
        %1653 = vmatprep.mubr.bf16.mxu0 0
        %1654 = vmatmul.mubr.bf16.gmra.mxu0 %v1516
        %v1655 = vpop.f32.mrf.mxu0
        %v1656 = vadd.f32 0.0, %v1655
        %v1657 = vpop.f32.mrf.mxu0
        %v1658 = vpop.f32.mrf.mxu0
        %v1659 = vadd.f32 0.0, %v1658
        %v1660 = vpop.f32.mrf.mxu0
        %1661 = vmatprep.mubr.bf16.mxu0 0
        %1662 = vmatmul.mubr.bf16.gmra.mxu0 %v1519
        %v1663 = vpop.f32.mrf.mxu0
        %v1664 = vadd.f32 0.0, %v1663
        %v1665 = vpop.f32.mrf.mxu0
        %v1666 = vpop.f32.mrf.mxu0
        %v1667 = vadd.f32 0.0, %v1666
        %v1668 = vpop.f32.mrf.mxu0
        %1669 = vmatprep.mubr.bf16.mxu0 0
        %1670 = vmatmul.mubr.bf16.gmra.mxu0 %v1522
        %v1671 = vpop.f32.mrf.mxu0
        %v1672 = vadd.f32 0.0, %v1671
        %v1673 = vpop.f32.mrf.mxu0
        %v1674 = vpop.f32.mrf.mxu0
        %v1675 = vadd.f32 0.0, %v1674
        %v1676 = vpop.f32.mrf.mxu0
        %1677 = vmatprep.mubr.bf16.mxu0 0
        %1678 = vmatmul.mubr.bf16.gmra.mxu0 %v1525
        %v1679 = vpop.f32.mrf.mxu0
        %v1680 = vadd.f32 0.0, %v1679
        %v1681 = vpop.f32.mrf.mxu0
        %v1682 = vpop.f32.mrf.mxu0
        %v1683 = vadd.f32 0.0, %v1682
        %v1684 = vpop.f32.mrf.mxu0
        %1685 = vmatprep.mubr.bf16.mxu0 0
        %1686 = vmatmul.mubr.bf16.gmra.mxu0 %v1528
        %v1687 = vpop.f32.mrf.mxu0
        %v1688 = vadd.f32 0.0, %v1687
        %v1689 = vpop.f32.mrf.mxu0
        %v1690 = vpop.f32.mrf.mxu0
        %v1691 = vadd.f32 0.0, %v1690
        %v1692 = vpop.f32.mrf.mxu0
        %1693 = vdwg.mxu0
        %v1694 = vadd.f32 %v1400, %v1568
        %v1695 = vadd.f32 %v1401, %v1571
        %v1696 = vadd.f32 %v1402, %v1576
        %v1697 = vadd.f32 %v1403, %v1579
        %v1698 = vadd.f32 %v1404, %v1584
        %v1699 = vadd.f32 %v1405, %v1587
        %v1700 = vadd.f32 %v1406, %v1592
        %v1701 = vadd.f32 %v1407, %v1595
        %v1702 = vadd.f32 %v1408, %v1600
        %v1703 = vadd.f32 %v1409, %v1603
        %v1704 = vadd.f32 %v1410, %v1608
        %v1705 = vadd.f32 %v1411, %v1611
        %v1706 = vadd.f32 %v1412, %v1616
        %v1707 = vadd.f32 %v1413, %v1619
        %v1708 = vadd.f32 %v1414, %v1624
        %v1709 = vadd.f32 %v1415, %v1627
        %v1710 = vadd.f32 %v1416, %v1632
        %v1711 = vadd.f32 %v1417, %v1635
        %v1712 = vadd.f32 %v1418, %v1640
        %v1713 = vadd.f32 %v1419, %v1643
        %v1714 = vadd.f32 %v1420, %v1648
        %v1715 = vadd.f32 %v1421, %v1651
        %v1716 = vadd.f32 %v1422, %v1656
        %v1717 = vadd.f32 %v1423, %v1659
        %v1718 = vadd.f32 %v1424, %v1664
        %v1719 = vadd.f32 %v1425, %v1667
        %v1720 = vadd.f32 %v1426, %v1672
        %v1721 = vadd.f32 %v1427, %v1675
        %v1722 = vadd.f32 %v1428, %v1680
        %v1723 = vadd.f32 %v1429, %v1683
        %v1724 = vadd.f32 %v1430, %v1688
        %v1725 = vadd.f32 %v1431, %v1691
        %v1726 = vld [vmem:[%s1137 + $0x2] sm:$0xff]
        %v1727 = vld [vmem:[%s1137 + $0xa] sm:$0xff]
        %v1728 = vld [vmem:[%s1137 + $0x1a] sm:$0xff]
        %v1729 = vld [vmem:[%s1137 + $0x22] sm:$0xff]
        %v1730 = vld [vmem:[%s1137 + $0x32] sm:$0xff]
        %v1731 = vld [vmem:[%s1137 + $0x3a] sm:$0xff]
        %v1732 = vld [vmem:[%s1137 + $0x4a] sm:$0xff]
        %v1733 = vld [vmem:[%s1137 + $0x52] sm:$0xff]
        %v1734 = vld [vmem:[%s1137 + $0x62] sm:$0xff]
        %v1735 = vld [vmem:[%s1137 + $0x6a] sm:$0xff]
        %v1736 = vld [vmem:[%s1137 + $0x7a] sm:$0xff]
        %v1737 = vld [vmem:[%s1137 + $0x82] sm:$0xff]
        %v1738 = vld [vmem:[%s1137 + $0x92] sm:$0xff]
        %v1739 = vld [vmem:[%s1137 + $0x9a] sm:$0xff]
        %v1740 = vld [vmem:[%s1137 + $0xaa] sm:$0xff]
        %v1741 = vld [vmem:[%s1137 + $0xb2] sm:$0xff]
        %v1742 = vld [vmem:[%s1137 + $0xc2] sm:$0xff]
        %v1743 = vld [vmem:[%s1137 + $0xca] sm:$0xff]
        %v1744 = vld [vmem:[%s1137 + $0xda] sm:$0xff]
        %v1745 = vld [vmem:[%s1137 + $0xe2] sm:$0xff]
        %v1746 = vld [vmem:[%s1137 + $0xf2] sm:$0xff]
        %v1747 = vld [vmem:[%s1137 + $0xfa] sm:$0xff]
        %v1748 = vld [vmem:[%s1137 + $0x10a] sm:$0xff]
        %v1749 = vld [vmem:[%s1137 + $0x112] sm:$0xff]
        %v1750 = vld [vmem:[%s1137 + $0x122] sm:$0xff]
        %v1751 = vld [vmem:[%s1137 + $0x12a] sm:$0xff]
        %v1752 = vld [vmem:[%s1137 + $0x13a] sm:$0xff]
        %v1753 = vld [vmem:[%s1137 + $0x142] sm:$0xff]
        %v1754 = vld [vmem:[%s1137 + $0x152] sm:$0xff]
        %v1755 = vld [vmem:[%s1137 + $0x15a] sm:$0xff]
        %v1756 = vld [vmem:[%s1137 + $0x16a] sm:$0xff]
        %v1757 = vld [vmem:[%s1137 + $0x172] sm:$0xff]
        %v1758 = vpack.c.bf16 %v1727, %v1726
        %v1759 = vpack.c.bf16 %v1729, %v1728
        %v1760 = vpack.c.bf16 %v1731, %v1730
        %v1761 = vpack.c.bf16 %v1733, %v1732
        %v1762 = vpack.c.bf16 %v1735, %v1734
        %v1763 = vpack.c.bf16 %v1737, %v1736
        %v1764 = vpack.c.bf16 %v1739, %v1738
        %v1765 = vpack.c.bf16 %v1741, %v1740
        %v1766 = vpack.c.bf16 %v1743, %v1742
        %v1767 = vpack.c.bf16 %v1745, %v1744
        %v1768 = vpack.c.bf16 %v1747, %v1746
        %v1769 = vpack.c.bf16 %v1749, %v1748
        %v1770 = vpack.c.bf16 %v1751, %v1750
        %v1771 = vpack.c.bf16 %v1753, %v1752
        %v1772 = vpack.c.bf16 %v1755, %v1754
        %v1773 = vpack.c.bf16 %v1757, %v1756
        %s1774 = scalar_lea.vmem %s1, 10
        %v1775 = vld [vmem:[%s1774] sm:$0x3]
        %v1777 = vsel %vm412, %v1758, 0
        %v1780 = vsel %vm412, %v1759, 0
        %v1783 = vsel %vm412, %v1760, 0
        %v1786 = vsel %vm412, %v1761, 0
        %v1789 = vsel %vm412, %v1762, 0
        %v1792 = vsel %vm412, %v1763, 0
        %v1795 = vsel %vm412, %v1764, 0
        %v1798 = vsel %vm412, %v1765, 0
        %v1801 = vsel %vm412, %v1766, 0
        %v1804 = vsel %vm412, %v1767, 0
        %v1807 = vsel %vm412, %v1768, 0
        %v1810 = vsel %vm412, %v1769, 0
        %v1813 = vsel %vm412, %v1770, 0
        %v1816 = vsel %vm412, %v1771, 0
        %v1819 = vsel %vm412, %v1772, 0
        %v1822 = vsel %vm412, %v1773, 0
        %v1825 = vand.u32 %v1775, %v464
        %1827 = vmatprep.subr.bf16.mxu0 0
        %1828 = vmatpush1.bf16.msra.mxu0 0
        %1829 = vmatprep.subr.bf16.mxu0 0
        %1830 = vmatpush1.bf16.msra.mxu0 0
        %1831 = vmatprep.subr.bf16.mxu0 0
        %1832 = vmatpush1.bf16.msra.mxu0 0
        %1833 = vmatprep.subr.bf16.mxu0 0
        %1834 = vmatpush1.bf16.msra.mxu0 0
        %1835 = vmatprep.subr.bf16.mxu0 0
        %1836 = vmatpush1.bf16.msra.mxu0 0
        %1837 = vmatprep.subr.bf16.mxu0 0
        %1838 = vmatpush1.bf16.msra.mxu0 0
        %1839 = vmatprep.subr.bf16.mxu0 0
        %1840 = vmatpush1.bf16.msra.mxu0 0
        %1841 = vmatprep.subr.bf16.mxu0 0
        %1842 = vmatpush1.bf16.msra.mxu0 %v1825
        %1843 = vmatprep.subr.bf16.mxu0 0
        %1844 = vmatpush2.bf16.msra.mxu0 0
        %1845 = vmatprep.subr.bf16.mxu0 0
        %1846 = vmatpush2.bf16.msra.mxu0 0
        %1847 = vmatprep.subr.bf16.mxu0 0
        %1848 = vmatpush2.bf16.msra.mxu0 0
        %1849 = vmatprep.subr.bf16.mxu0 0
        %1850 = vmatpush2.bf16.msra.mxu0 0
        %1851 = vmatprep.subr.bf16.mxu0 0
        %1852 = vmatpush2.bf16.msra.mxu0 0
        %1853 = vmatprep.subr.bf16.mxu0 0
        %1854 = vmatpush2.bf16.msra.mxu0 0
        %1855 = vmatprep.subr.bf16.mxu0 0
        %1856 = vmatpush2.bf16.msra.mxu0 0
        %1857 = vmatprep.subr.bf16.mxu0 0
        %1858 = vmatpush2.bf16.msra.mxu0 0
        %1859 = vmatprep.mubr.bf16.mxu0 0
        %1860 = vmatmul.mubr.bf16.gmra.mxu0 %v1777
        %v1861 = vpop.f32.mrf.mxu0
        %v1862 = vadd.f32 0.0, %v1861
        %v1863 = vpop.f32.mrf.mxu0
        %v1864 = vpop.f32.mrf.mxu0
        %v1865 = vadd.f32 0.0, %v1864
        %v1866 = vpop.f32.mrf.mxu0
        %1867 = vmatprep.mubr.bf16.mxu0 0
        %1868 = vmatmul.mubr.bf16.gmra.mxu0 %v1780
        %v1869 = vpop.f32.mrf.mxu0
        %v1870 = vadd.f32 0.0, %v1869
        %v1871 = vpop.f32.mrf.mxu0
        %v1872 = vpop.f32.mrf.mxu0
        %v1873 = vadd.f32 0.0, %v1872
        %v1874 = vpop.f32.mrf.mxu0
        %1875 = vmatprep.mubr.bf16.mxu0 0
        %1876 = vmatmul.mubr.bf16.gmra.mxu0 %v1783
        %v1877 = vpop.f32.mrf.mxu0
        %v1878 = vadd.f32 0.0, %v1877
        %v1879 = vpop.f32.mrf.mxu0
        %v1880 = vpop.f32.mrf.mxu0
        %v1881 = vadd.f32 0.0, %v1880
        %v1882 = vpop.f32.mrf.mxu0
        %1883 = vmatprep.mubr.bf16.mxu0 0
        %1884 = vmatmul.mubr.bf16.gmra.mxu0 %v1786
        %v1885 = vpop.f32.mrf.mxu0
        %v1886 = vadd.f32 0.0, %v1885
        %v1887 = vpop.f32.mrf.mxu0
        %v1888 = vpop.f32.mrf.mxu0
        %v1889 = vadd.f32 0.0, %v1888
        %v1890 = vpop.f32.mrf.mxu0
        %1891 = vmatprep.mubr.bf16.mxu0 0
        %1892 = vmatmul.mubr.bf16.gmra.mxu0 %v1789
        %v1893 = vpop.f32.mrf.mxu0
        %v1894 = vadd.f32 0.0, %v1893
        %v1895 = vpop.f32.mrf.mxu0
        %v1896 = vpop.f32.mrf.mxu0
        %v1897 = vadd.f32 0.0, %v1896
        %v1898 = vpop.f32.mrf.mxu0
        %1899 = vmatprep.mubr.bf16.mxu0 0
        %1900 = vmatmul.mubr.bf16.gmra.mxu0 %v1792
        %v1901 = vpop.f32.mrf.mxu0
        %v1902 = vadd.f32 0.0, %v1901
        %v1903 = vpop.f32.mrf.mxu0
        %v1904 = vpop.f32.mrf.mxu0
        %v1905 = vadd.f32 0.0, %v1904
        %v1906 = vpop.f32.mrf.mxu0
        %1907 = vmatprep.mubr.bf16.mxu0 0
        %1908 = vmatmul.mubr.bf16.gmra.mxu0 %v1795
        %v1909 = vpop.f32.mrf.mxu0
        %v1910 = vadd.f32 0.0, %v1909
        %v1911 = vpop.f32.mrf.mxu0
        %v1912 = vpop.f32.mrf.mxu0
        %v1913 = vadd.f32 0.0, %v1912
        %v1914 = vpop.f32.mrf.mxu0
        %1915 = vmatprep.mubr.bf16.mxu0 0
        %1916 = vmatmul.mubr.bf16.gmra.mxu0 %v1798
        %v1917 = vpop.f32.mrf.mxu0
        %v1918 = vadd.f32 0.0, %v1917
        %v1919 = vpop.f32.mrf.mxu0
        %v1920 = vpop.f32.mrf.mxu0
        %v1921 = vadd.f32 0.0, %v1920
        %v1922 = vpop.f32.mrf.mxu0
        %1923 = vmatprep.mubr.bf16.mxu0 0
        %1924 = vmatmul.mubr.bf16.gmra.mxu0 %v1801
        %v1925 = vpop.f32.mrf.mxu0
        %v1926 = vadd.f32 0.0, %v1925
        %v1927 = vpop.f32.mrf.mxu0
        %v1928 = vpop.f32.mrf.mxu0
        %v1929 = vadd.f32 0.0, %v1928
        %v1930 = vpop.f32.mrf.mxu0
        %1931 = vmatprep.mubr.bf16.mxu0 0
        %1932 = vmatmul.mubr.bf16.gmra.mxu0 %v1804
        %v1933 = vpop.f32.mrf.mxu0
        %v1934 = vadd.f32 0.0, %v1933
        %v1935 = vpop.f32.mrf.mxu0
        %v1936 = vpop.f32.mrf.mxu0
        %v1937 = vadd.f32 0.0, %v1936
        %v1938 = vpop.f32.mrf.mxu0
        %1939 = vmatprep.mubr.bf16.mxu0 0
        %1940 = vmatmul.mubr.bf16.gmra.mxu0 %v1807
        %v1941 = vpop.f32.mrf.mxu0
        %v1942 = vadd.f32 0.0, %v1941
        %v1943 = vpop.f32.mrf.mxu0
        %v1944 = vpop.f32.mrf.mxu0
        %v1945 = vadd.f32 0.0, %v1944
        %v1946 = vpop.f32.mrf.mxu0
        %1947 = vmatprep.mubr.bf16.mxu0 0
        %1948 = vmatmul.mubr.bf16.gmra.mxu0 %v1810
        %v1949 = vpop.f32.mrf.mxu0
        %v1950 = vadd.f32 0.0, %v1949
        %v1951 = vpop.f32.mrf.mxu0
        %v1952 = vpop.f32.mrf.mxu0
        %v1953 = vadd.f32 0.0, %v1952
        %v1954 = vpop.f32.mrf.mxu0
        %1955 = vmatprep.mubr.bf16.mxu0 0
        %1956 = vmatmul.mubr.bf16.gmra.mxu0 %v1813
        %v1957 = vpop.f32.mrf.mxu0
        %v1958 = vadd.f32 0.0, %v1957
        %v1959 = vpop.f32.mrf.mxu0
        %v1960 = vpop.f32.mrf.mxu0
        %v1961 = vadd.f32 0.0, %v1960
        %v1962 = vpop.f32.mrf.mxu0
        %1963 = vmatprep.mubr.bf16.mxu0 0
        %1964 = vmatmul.mubr.bf16.gmra.mxu0 %v1816
        %v1965 = vpop.f32.mrf.mxu0
        %v1966 = vadd.f32 0.0, %v1965
        %v1967 = vpop.f32.mrf.mxu0
        %v1968 = vpop.f32.mrf.mxu0
        %v1969 = vadd.f32 0.0, %v1968
        %v1970 = vpop.f32.mrf.mxu0
        %1971 = vmatprep.mubr.bf16.mxu0 0
        %1972 = vmatmul.mubr.bf16.gmra.mxu0 %v1819
        %v1973 = vpop.f32.mrf.mxu0
        %v1974 = vadd.f32 0.0, %v1973
        %v1975 = vpop.f32.mrf.mxu0
        %v1976 = vpop.f32.mrf.mxu0
        %v1977 = vadd.f32 0.0, %v1976
        %v1978 = vpop.f32.mrf.mxu0
        %1979 = vmatprep.mubr.bf16.mxu0 0
        %1980 = vmatmul.mubr.bf16.gmra.mxu0 %v1822
        %v1981 = vpop.f32.mrf.mxu0
        %v1982 = vadd.f32 0.0, %v1981
        %v1983 = vpop.f32.mrf.mxu0
        %v1984 = vpop.f32.mrf.mxu0
        %v1985 = vadd.f32 0.0, %v1984
        %v1986 = vpop.f32.mrf.mxu0
        %1987 = vdwg.mxu0
        %v1988 = vadd.f32 %v1694, %v1862
        %v1989 = vadd.f32 %v1695, %v1865
        %v1990 = vadd.f32 %v1696, %v1870
        %v1991 = vadd.f32 %v1697, %v1873
        %v1992 = vadd.f32 %v1698, %v1878
        %v1993 = vadd.f32 %v1699, %v1881
        %v1994 = vadd.f32 %v1700, %v1886
        %v1995 = vadd.f32 %v1701, %v1889
        %v1996 = vadd.f32 %v1702, %v1894
        %v1997 = vadd.f32 %v1703, %v1897
        %v1998 = vadd.f32 %v1704, %v1902
        %v1999 = vadd.f32 %v1705, %v1905
        %v2000 = vadd.f32 %v1706, %v1910
        %v2001 = vadd.f32 %v1707, %v1913
        %v2002 = vadd.f32 %v1708, %v1918
        %v2003 = vadd.f32 %v1709, %v1921
        %v2004 = vadd.f32 %v1710, %v1926
        %v2005 = vadd.f32 %v1711, %v1929
        %v2006 = vadd.f32 %v1712, %v1934
        %v2007 = vadd.f32 %v1713, %v1937
        %v2008 = vadd.f32 %v1714, %v1942
        %v2009 = vadd.f32 %v1715, %v1945
        %v2010 = vadd.f32 %v1716, %v1950
        %v2011 = vadd.f32 %v1717, %v1953
        %v2012 = vadd.f32 %v1718, %v1958
        %v2013 = vadd.f32 %v1719, %v1961
        %v2014 = vadd.f32 %v1720, %v1966
        %v2015 = vadd.f32 %v1721, %v1969
        %v2016 = vadd.f32 %v1722, %v1974
        %v2017 = vadd.f32 %v1723, %v1977
        %v2018 = vadd.f32 %v1724, %v1982
        %v2019 = vadd.f32 %v1725, %v1985
        %s2020 = sadd.s32 %s310, 2
        %s2021 = smul.u32 %s2020, 24
        %s2022 = scalar_lea.vmem [#allocation2], %s2021
        %v2023 = vld [vmem:[%s2022] sm:$0xff]
        %v2024 = vld [vmem:[%s2022 + $0x8] sm:$0xff]
        %v2025 = vld [vmem:[%s2022 + $0x18] sm:$0xff]
        %v2026 = vld [vmem:[%s2022 + $0x20] sm:$0xff]
        %v2027 = vld [vmem:[%s2022 + $0x30] sm:$0xff]
        %v2028 = vld [vmem:[%s2022 + $0x38] sm:$0xff]
        %v2029 = vld [vmem:[%s2022 + $0x48] sm:$0xff]
        %v2030 = vld [vmem:[%s2022 + $0x50] sm:$0xff]
        %v2031 = vld [vmem:[%s2022 + $0x60] sm:$0xff]
        %v2032 = vld [vmem:[%s2022 + $0x68] sm:$0xff]
        %v2033 = vld [vmem:[%s2022 + $0x78] sm:$0xff]
        %v2034 = vld [vmem:[%s2022 + $0x80] sm:$0xff]
        %v2035 = vld [vmem:[%s2022 + $0x90] sm:$0xff]
        %v2036 = vld [vmem:[%s2022 + $0x98] sm:$0xff]
        %v2037 = vld [vmem:[%s2022 + $0xa8] sm:$0xff]
        %v2038 = vld [vmem:[%s2022 + $0xb0] sm:$0xff]
        %v2039 = vld [vmem:[%s2022 + $0xc0] sm:$0xff]
        %v2040 = vld [vmem:[%s2022 + $0xc8] sm:$0xff]
        %v2041 = vld [vmem:[%s2022 + $0xd8] sm:$0xff]
        %v2042 = vld [vmem:[%s2022 + $0xe0] sm:$0xff]
        %v2043 = vld [vmem:[%s2022 + $0xf0] sm:$0xff]
        %v2044 = vld [vmem:[%s2022 + $0xf8] sm:$0xff]
        %v2045 = vld [vmem:[%s2022 + $0x108] sm:$0xff]
        %v2046 = vld [vmem:[%s2022 + $0x110] sm:$0xff]
        %v2047 = vld [vmem:[%s2022 + $0x120] sm:$0xff]
        %v2048 = vld [vmem:[%s2022 + $0x128] sm:$0xff]
        %v2049 = vld [vmem:[%s2022 + $0x138] sm:$0xff]
        %v2050 = vld [vmem:[%s2022 + $0x140] sm:$0xff]
        %v2051 = vld [vmem:[%s2022 + $0x150] sm:$0xff]
        %v2052 = vld [vmem:[%s2022 + $0x158] sm:$0xff]
        %v2053 = vld [vmem:[%s2022 + $0x168] sm:$0xff]
        %v2054 = vld [vmem:[%s2022 + $0x170] sm:$0xff]
        %v2055 = vpack.c.bf16 %v2024, %v2023
        %v2056 = vpack.c.bf16 %v2026, %v2025
        %v2057 = vpack.c.bf16 %v2028, %v2027
        %v2058 = vpack.c.bf16 %v2030, %v2029
        %v2059 = vpack.c.bf16 %v2032, %v2031
        %v2060 = vpack.c.bf16 %v2034, %v2033
        %v2061 = vpack.c.bf16 %v2036, %v2035
        %v2062 = vpack.c.bf16 %v2038, %v2037
        %v2063 = vpack.c.bf16 %v2040, %v2039
        %v2064 = vpack.c.bf16 %v2042, %v2041
        %v2065 = vpack.c.bf16 %v2044, %v2043
        %v2066 = vpack.c.bf16 %v2046, %v2045
        %v2067 = vpack.c.bf16 %v2048, %v2047
        %v2068 = vpack.c.bf16 %v2050, %v2049
        %v2069 = vpack.c.bf16 %v2052, %v2051
        %v2070 = vpack.c.bf16 %v2054, %v2053
        %s2071 = scalar_lea.vmem %s1, 12
        %v2072 = vld [vmem:[%s2071] sm:$0x3]
        %v2074 = vsel %vm412, %v2055, 0
        %v2077 = vsel %vm412, %v2056, 0
        %v2080 = vsel %vm412, %v2057, 0
        %v2083 = vsel %vm412, %v2058, 0
        %v2086 = vsel %vm412, %v2059, 0
        %v2089 = vsel %vm412, %v2060, 0
        %v2092 = vsel %vm412, %v2061, 0
        %v2095 = vsel %vm412, %v2062, 0
        %v2098 = vsel %vm412, %v2063, 0
        %v2101 = vsel %vm412, %v2064, 0
        %v2104 = vsel %vm412, %v2065, 0
        %v2107 = vsel %vm412, %v2066, 0
        %v2110 = vsel %vm412, %v2067, 0
        %v2113 = vsel %vm412, %v2068, 0
        %v2116 = vsel %vm412, %v2069, 0
        %v2119 = vsel %vm412, %v2070, 0
        %v2122 = vand.u32 %v2072, %v464
        %2124 = vmatprep.subr.bf16.mxu0 0
        %2125 = vmatpush1.bf16.msra.mxu0 0
        %2126 = vmatprep.subr.bf16.mxu0 0
        %2127 = vmatpush1.bf16.msra.mxu0 0
        %2128 = vmatprep.subr.bf16.mxu0 0
        %2129 = vmatpush1.bf16.msra.mxu0 0
        %2130 = vmatprep.subr.bf16.mxu0 0
        %2131 = vmatpush1.bf16.msra.mxu0 0
        %2132 = vmatprep.subr.bf16.mxu0 0
        %2133 = vmatpush1.bf16.msra.mxu0 0
        %2134 = vmatprep.subr.bf16.mxu0 0
        %2135 = vmatpush1.bf16.msra.mxu0 0
        %2136 = vmatprep.subr.bf16.mxu0 0
        %2137 = vmatpush1.bf16.msra.mxu0 0
        %2138 = vmatprep.subr.bf16.mxu0 0
        %2139 = vmatpush1.bf16.msra.mxu0 %v2122
        %2140 = vmatprep.subr.bf16.mxu0 0
        %2141 = vmatpush2.bf16.msra.mxu0 0
        %2142 = vmatprep.subr.bf16.mxu0 0
        %2143 = vmatpush2.bf16.msra.mxu0 0
        %2144 = vmatprep.subr.bf16.mxu0 0
        %2145 = vmatpush2.bf16.msra.mxu0 0
        %2146 = vmatprep.subr.bf16.mxu0 0
        %2147 = vmatpush2.bf16.msra.mxu0 0
        %2148 = vmatprep.subr.bf16.mxu0 0
        %2149 = vmatpush2.bf16.msra.mxu0 0
        %2150 = vmatprep.subr.bf16.mxu0 0
        %2151 = vmatpush2.bf16.msra.mxu0 0
        %2152 = vmatprep.subr.bf16.mxu0 0
        %2153 = vmatpush2.bf16.msra.mxu0 0
        %2154 = vmatprep.subr.bf16.mxu0 0
        %2155 = vmatpush2.bf16.msra.mxu0 0
        %2156 = vmatprep.mubr.bf16.mxu0 0
        %2157 = vmatmul.mubr.bf16.gmra.mxu0 %v2074
        %v2158 = vpop.f32.mrf.mxu0
        %v2159 = vadd.f32 0.0, %v2158
        %v2160 = vpop.f32.mrf.mxu0
        %v2161 = vpop.f32.mrf.mxu0
        %v2162 = vadd.f32 0.0, %v2161
        %v2163 = vpop.f32.mrf.mxu0
        %2164 = vmatprep.mubr.bf16.mxu0 0
        %2165 = vmatmul.mubr.bf16.gmra.mxu0 %v2077
        %v2166 = vpop.f32.mrf.mxu0
        %v2167 = vadd.f32 0.0, %v2166
        %v2168 = vpop.f32.mrf.mxu0
        %v2169 = vpop.f32.mrf.mxu0
        %v2170 = vadd.f32 0.0, %v2169
        %v2171 = vpop.f32.mrf.mxu0
        %2172 = vmatprep.mubr.bf16.mxu0 0
        %2173 = vmatmul.mubr.bf16.gmra.mxu0 %v2080
        %v2174 = vpop.f32.mrf.mxu0
        %v2175 = vadd.f32 0.0, %v2174
        %v2176 = vpop.f32.mrf.mxu0
        %v2177 = vpop.f32.mrf.mxu0
        %v2178 = vadd.f32 0.0, %v2177
        %v2179 = vpop.f32.mrf.mxu0
        %2180 = vmatprep.mubr.bf16.mxu0 0
        %2181 = vmatmul.mubr.bf16.gmra.mxu0 %v2083
        %v2182 = vpop.f32.mrf.mxu0
        %v2183 = vadd.f32 0.0, %v2182
        %v2184 = vpop.f32.mrf.mxu0
        %v2185 = vpop.f32.mrf.mxu0
        %v2186 = vadd.f32 0.0, %v2185
        %v2187 = vpop.f32.mrf.mxu0
        %2188 = vmatprep.mubr.bf16.mxu0 0
        %2189 = vmatmul.mubr.bf16.gmra.mxu0 %v2086
        %v2190 = vpop.f32.mrf.mxu0
        %v2191 = vadd.f32 0.0, %v2190
        %v2192 = vpop.f32.mrf.mxu0
        %v2193 = vpop.f32.mrf.mxu0
        %v2194 = vadd.f32 0.0, %v2193
        %v2195 = vpop.f32.mrf.mxu0
        %2196 = vmatprep.mubr.bf16.mxu0 0
        %2197 = vmatmul.mubr.bf16.gmra.mxu0 %v2089
        %v2198 = vpop.f32.mrf.mxu0
        %v2199 = vadd.f32 0.0, %v2198
        %v2200 = vpop.f32.mrf.mxu0
        %v2201 = vpop.f32.mrf.mxu0
        %v2202 = vadd.f32 0.0, %v2201
        %v2203 = vpop.f32.mrf.mxu0
        %2204 = vmatprep.mubr.bf16.mxu0 0
        %2205 = vmatmul.mubr.bf16.gmra.mxu0 %v2092
        %v2206 = vpop.f32.mrf.mxu0
        %v2207 = vadd.f32 0.0, %v2206
        %v2208 = vpop.f32.mrf.mxu0
        %v2209 = vpop.f32.mrf.mxu0
        %v2210 = vadd.f32 0.0, %v2209
        %v2211 = vpop.f32.mrf.mxu0
        %2212 = vmatprep.mubr.bf16.mxu0 0
        %2213 = vmatmul.mubr.bf16.gmra.mxu0 %v2095
        %v2214 = vpop.f32.mrf.mxu0
        %v2215 = vadd.f32 0.0, %v2214
        %v2216 = vpop.f32.mrf.mxu0
        %v2217 = vpop.f32.mrf.mxu0
        %v2218 = vadd.f32 0.0, %v2217
        %v2219 = vpop.f32.mrf.mxu0
        %2220 = vmatprep.mubr.bf16.mxu0 0
        %2221 = vmatmul.mubr.bf16.gmra.mxu0 %v2098
        %v2222 = vpop.f32.mrf.mxu0
        %v2223 = vadd.f32 0.0, %v2222
        %v2224 = vpop.f32.mrf.mxu0
        %v2225 = vpop.f32.mrf.mxu0
        %v2226 = vadd.f32 0.0, %v2225
        %v2227 = vpop.f32.mrf.mxu0
        %2228 = vmatprep.mubr.bf16.mxu0 0
        %2229 = vmatmul.mubr.bf16.gmra.mxu0 %v2101
        %v2230 = vpop.f32.mrf.mxu0
        %v2231 = vadd.f32 0.0, %v2230
        %v2232 = vpop.f32.mrf.mxu0
        %v2233 = vpop.f32.mrf.mxu0
        %v2234 = vadd.f32 0.0, %v2233
        %v2235 = vpop.f32.mrf.mxu0
        %2236 = vmatprep.mubr.bf16.mxu0 0
        %2237 = vmatmul.mubr.bf16.gmra.mxu0 %v2104
        %v2238 = vpop.f32.mrf.mxu0
        %v2239 = vadd.f32 0.0, %v2238
        %v2240 = vpop.f32.mrf.mxu0
        %v2241 = vpop.f32.mrf.mxu0
        %v2242 = vadd.f32 0.0, %v2241
        %v2243 = vpop.f32.mrf.mxu0
        %2244 = vmatprep.mubr.bf16.mxu0 0
        %2245 = vmatmul.mubr.bf16.gmra.mxu0 %v2107
        %v2246 = vpop.f32.mrf.mxu0
        %v2247 = vadd.f32 0.0, %v2246
        %v2248 = vpop.f32.mrf.mxu0
        %v2249 = vpop.f32.mrf.mxu0
        %v2250 = vadd.f32 0.0, %v2249
        %v2251 = vpop.f32.mrf.mxu0
        %2252 = vmatprep.mubr.bf16.mxu0 0
        %2253 = vmatmul.mubr.bf16.gmra.mxu0 %v2110
        %v2254 = vpop.f32.mrf.mxu0
        %v2255 = vadd.f32 0.0, %v2254
        %v2256 = vpop.f32.mrf.mxu0
        %v2257 = vpop.f32.mrf.mxu0
        %v2258 = vadd.f32 0.0, %v2257
        %v2259 = vpop.f32.mrf.mxu0
        %2260 = vmatprep.mubr.bf16.mxu0 0
        %2261 = vmatmul.mubr.bf16.gmra.mxu0 %v2113
        %v2262 = vpop.f32.mrf.mxu0
        %v2263 = vadd.f32 0.0, %v2262
        %v2264 = vpop.f32.mrf.mxu0
        %v2265 = vpop.f32.mrf.mxu0
        %v2266 = vadd.f32 0.0, %v2265
        %v2267 = vpop.f32.mrf.mxu0
        %2268 = vmatprep.mubr.bf16.mxu0 0
        %2269 = vmatmul.mubr.bf16.gmra.mxu0 %v2116
        %v2270 = vpop.f32.mrf.mxu0
        %v2271 = vadd.f32 0.0, %v2270
        %v2272 = vpop.f32.mrf.mxu0
        %v2273 = vpop.f32.mrf.mxu0
        %v2274 = vadd.f32 0.0, %v2273
        %v2275 = vpop.f32.mrf.mxu0
        %2276 = vmatprep.mubr.bf16.mxu0 0
        %2277 = vmatmul.mubr.bf16.gmra.mxu0 %v2119
        %v2278 = vpop.f32.mrf.mxu0
        %v2279 = vadd.f32 0.0, %v2278
        %v2280 = vpop.f32.mrf.mxu0
        %v2281 = vpop.f32.mrf.mxu0
        %v2282 = vadd.f32 0.0, %v2281
        %v2283 = vpop.f32.mrf.mxu0
        %2284 = vdwg.mxu0
        %v2285 = vadd.f32 %v1988, %v2159
        %v2286 = vadd.f32 %v1989, %v2162
        %v2287 = vadd.f32 %v1990, %v2167
        %v2288 = vadd.f32 %v1991, %v2170
        %v2289 = vadd.f32 %v1992, %v2175
        %v2290 = vadd.f32 %v1993, %v2178
        %v2291 = vadd.f32 %v1994, %v2183
        %v2292 = vadd.f32 %v1995, %v2186
        %v2293 = vadd.f32 %v1996, %v2191
        %v2294 = vadd.f32 %v1997, %v2194
        %v2295 = vadd.f32 %v1998, %v2199
        %v2296 = vadd.f32 %v1999, %v2202
        %v2297 = vadd.f32 %v2000, %v2207
        %v2298 = vadd.f32 %v2001, %v2210
        %v2299 = vadd.f32 %v2002, %v2215
        %v2300 = vadd.f32 %v2003, %v2218
        %v2301 = vadd.f32 %v2004, %v2223
        %v2302 = vadd.f32 %v2005, %v2226
        %v2303 = vadd.f32 %v2006, %v2231
        %v2304 = vadd.f32 %v2007, %v2234
        %v2305 = vadd.f32 %v2008, %v2239
        %v2306 = vadd.f32 %v2009, %v2242
        %v2307 = vadd.f32 %v2010, %v2247
        %v2308 = vadd.f32 %v2011, %v2250
        %v2309 = vadd.f32 %v2012, %v2255
        %v2310 = vadd.f32 %v2013, %v2258
        %v2311 = vadd.f32 %v2014, %v2263
        %v2312 = vadd.f32 %v2015, %v2266
        %v2313 = vadd.f32 %v2016, %v2271
        %v2314 = vadd.f32 %v2017, %v2274
        %v2315 = vadd.f32 %v2018, %v2279
        %v2316 = vadd.f32 %v2019, %v2282
        %v2317 = vld [vmem:[%s2022 + $0x1] sm:$0xff]
        %v2318 = vld [vmem:[%s2022 + $0x9] sm:$0xff]
        %v2319 = vld [vmem:[%s2022 + $0x19] sm:$0xff]
        %v2320 = vld [vmem:[%s2022 + $0x21] sm:$0xff]
        %v2321 = vld [vmem:[%s2022 + $0x31] sm:$0xff]
        %v2322 = vld [vmem:[%s2022 + $0x39] sm:$0xff]
        %v2323 = vld [vmem:[%s2022 + $0x49] sm:$0xff]
        %v2324 = vld [vmem:[%s2022 + $0x51] sm:$0xff]
        %v2325 = vld [vmem:[%s2022 + $0x61] sm:$0xff]
        %v2326 = vld [vmem:[%s2022 + $0x69] sm:$0xff]
        %v2327 = vld [vmem:[%s2022 + $0x79] sm:$0xff]
        %v2328 = vld [vmem:[%s2022 + $0x81] sm:$0xff]
        %v2329 = vld [vmem:[%s2022 + $0x91] sm:$0xff]
        %v2330 = vld [vmem:[%s2022 + $0x99] sm:$0xff]
        %v2331 = vld [vmem:[%s2022 + $0xa9] sm:$0xff]
        %v2332 = vld [vmem:[%s2022 + $0xb1] sm:$0xff]
        %v2333 = vld [vmem:[%s2022 + $0xc1] sm:$0xff]
        %v2334 = vld [vmem:[%s2022 + $0xc9] sm:$0xff]
        %v2335 = vld [vmem:[%s2022 + $0xd9] sm:$0xff]
        %v2336 = vld [vmem:[%s2022 + $0xe1] sm:$0xff]
        %v2337 = vld [vmem:[%s2022 + $0xf1] sm:$0xff]
        %v2338 = vld [vmem:[%s2022 + $0xf9] sm:$0xff]
        %v2339 = vld [vmem:[%s2022 + $0x109] sm:$0xff]
        %v2340 = vld [vmem:[%s2022 + $0x111] sm:$0xff]
        %v2341 = vld [vmem:[%s2022 + $0x121] sm:$0xff]
        %v2342 = vld [vmem:[%s2022 + $0x129] sm:$0xff]
        %v2343 = vld [vmem:[%s2022 + $0x139] sm:$0xff]
        %v2344 = vld [vmem:[%s2022 + $0x141] sm:$0xff]
        %v2345 = vld [vmem:[%s2022 + $0x151] sm:$0xff]
        %v2346 = vld [vmem:[%s2022 + $0x159] sm:$0xff]
        %v2347 = vld [vmem:[%s2022 + $0x169] sm:$0xff]
        %v2348 = vld [vmem:[%s2022 + $0x171] sm:$0xff]
        %v2349 = vpack.c.bf16 %v2318, %v2317
        %v2350 = vpack.c.bf16 %v2320, %v2319
        %v2351 = vpack.c.bf16 %v2322, %v2321
        %v2352 = vpack.c.bf16 %v2324, %v2323
        %v2353 = vpack.c.bf16 %v2326, %v2325
        %v2354 = vpack.c.bf16 %v2328, %v2327
        %v2355 = vpack.c.bf16 %v2330, %v2329
        %v2356 = vpack.c.bf16 %v2332, %v2331
        %v2357 = vpack.c.bf16 %v2334, %v2333
        %v2358 = vpack.c.bf16 %v2336, %v2335
        %v2359 = vpack.c.bf16 %v2338, %v2337
        %v2360 = vpack.c.bf16 %v2340, %v2339
        %v2361 = vpack.c.bf16 %v2342, %v2341
        %v2362 = vpack.c.bf16 %v2344, %v2343
        %v2363 = vpack.c.bf16 %v2346, %v2345
        %v2364 = vpack.c.bf16 %v2348, %v2347
        %s2365 = scalar_lea.vmem %s1, 14
        %v2366 = vld [vmem:[%s2365] sm:$0x3]
        %v2368 = vsel %vm412, %v2349, 0
        %v2371 = vsel %vm412, %v2350, 0
        %v2374 = vsel %vm412, %v2351, 0
        %v2377 = vsel %vm412, %v2352, 0
        %v2380 = vsel %vm412, %v2353, 0
        %v2383 = vsel %vm412, %v2354, 0
        %v2386 = vsel %vm412, %v2355, 0
        %v2389 = vsel %vm412, %v2356, 0
        %v2392 = vsel %vm412, %v2357, 0
        %v2395 = vsel %vm412, %v2358, 0
        %v2398 = vsel %vm412, %v2359, 0
        %v2401 = vsel %vm412, %v2360, 0
        %v2404 = vsel %vm412, %v2361, 0
        %v2407 = vsel %vm412, %v2362, 0
        %v2410 = vsel %vm412, %v2363, 0
        %v2413 = vsel %vm412, %v2364, 0
        %v2416 = vand.u32 %v2366, %v464
        %2418 = vmatprep.subr.bf16.mxu0 0
        %2419 = vmatpush1.bf16.msra.mxu0 0
        %2420 = vmatprep.subr.bf16.mxu0 0
        %2421 = vmatpush1.bf16.msra.mxu0 0
        %2422 = vmatprep.subr.bf16.mxu0 0
        %2423 = vmatpush1.bf16.msra.mxu0 0
        %2424 = vmatprep.subr.bf16.mxu0 0
        %2425 = vmatpush1.bf16.msra.mxu0 0
        %2426 = vmatprep.subr.bf16.mxu0 0
        %2427 = vmatpush1.bf16.msra.mxu0 0
        %2428 = vmatprep.subr.bf16.mxu0 0
        %2429 = vmatpush1.bf16.msra.mxu0 0
        %2430 = vmatprep.subr.bf16.mxu0 0
        %2431 = vmatpush1.bf16.msra.mxu0 0
        %2432 = vmatprep.subr.bf16.mxu0 0
        %2433 = vmatpush1.bf16.msra.mxu0 %v2416
        %2434 = vmatprep.subr.bf16.mxu0 0
        %2435 = vmatpush2.bf16.msra.mxu0 0
        %2436 = vmatprep.subr.bf16.mxu0 0
        %2437 = vmatpush2.bf16.msra.mxu0 0
        %2438 = vmatprep.subr.bf16.mxu0 0
        %2439 = vmatpush2.bf16.msra.mxu0 0
        %2440 = vmatprep.subr.bf16.mxu0 0
        %2441 = vmatpush2.bf16.msra.mxu0 0
        %2442 = vmatprep.subr.bf16.mxu0 0
        %2443 = vmatpush2.bf16.msra.mxu0 0
        %2444 = vmatprep.subr.bf16.mxu0 0
        %2445 = vmatpush2.bf16.msra.mxu0 0
        %2446 = vmatprep.subr.bf16.mxu0 0
        %2447 = vmatpush2.bf16.msra.mxu0 0
        %2448 = vmatprep.subr.bf16.mxu0 0
        %2449 = vmatpush2.bf16.msra.mxu0 0
        %2450 = vmatprep.mubr.bf16.mxu0 0
        %2451 = vmatmul.mubr.bf16.gmra.mxu0 %v2368
        %v2452 = vpop.f32.mrf.mxu0
        %v2453 = vadd.f32 0.0, %v2452
        %v2454 = vpop.f32.mrf.mxu0
        %v2455 = vpop.f32.mrf.mxu0
        %v2456 = vadd.f32 0.0, %v2455
        %v2457 = vpop.f32.mrf.mxu0
        %2458 = vmatprep.mubr.bf16.mxu0 0
        %2459 = vmatmul.mubr.bf16.gmra.mxu0 %v2371
        %v2460 = vpop.f32.mrf.mxu0
        %v2461 = vadd.f32 0.0, %v2460
        %v2462 = vpop.f32.mrf.mxu0
        %v2463 = vpop.f32.mrf.mxu0
        %v2464 = vadd.f32 0.0, %v2463
        %v2465 = vpop.f32.mrf.mxu0
        %2466 = vmatprep.mubr.bf16.mxu0 0
        %2467 = vmatmul.mubr.bf16.gmra.mxu0 %v2374
        %v2468 = vpop.f32.mrf.mxu0
        %v2469 = vadd.f32 0.0, %v2468
        %v2470 = vpop.f32.mrf.mxu0
        %v2471 = vpop.f32.mrf.mxu0
        %v2472 = vadd.f32 0.0, %v2471
        %v2473 = vpop.f32.mrf.mxu0
        %2474 = vmatprep.mubr.bf16.mxu0 0
        %2475 = vmatmul.mubr.bf16.gmra.mxu0 %v2377
        %v2476 = vpop.f32.mrf.mxu0
        %v2477 = vadd.f32 0.0, %v2476
        %v2478 = vpop.f32.mrf.mxu0
        %v2479 = vpop.f32.mrf.mxu0
        %v2480 = vadd.f32 0.0, %v2479
        %v2481 = vpop.f32.mrf.mxu0
        %2482 = vmatprep.mubr.bf16.mxu0 0
        %2483 = vmatmul.mubr.bf16.gmra.mxu0 %v2380
        %v2484 = vpop.f32.mrf.mxu0
        %v2485 = vadd.f32 0.0, %v2484
        %v2486 = vpop.f32.mrf.mxu0
        %v2487 = vpop.f32.mrf.mxu0
        %v2488 = vadd.f32 0.0, %v2487
        %v2489 = vpop.f32.mrf.mxu0
        %2490 = vmatprep.mubr.bf16.mxu0 0
        %2491 = vmatmul.mubr.bf16.gmra.mxu0 %v2383
        %v2492 = vpop.f32.mrf.mxu0
        %v2493 = vadd.f32 0.0, %v2492
        %v2494 = vpop.f32.mrf.mxu0
        %v2495 = vpop.f32.mrf.mxu0
        %v2496 = vadd.f32 0.0, %v2495
        %v2497 = vpop.f32.mrf.mxu0
        %2498 = vmatprep.mubr.bf16.mxu0 0
        %2499 = vmatmul.mubr.bf16.gmra.mxu0 %v2386
        %v2500 = vpop.f32.mrf.mxu0
        %v2501 = vadd.f32 0.0, %v2500
        %v2502 = vpop.f32.mrf.mxu0
        %v2503 = vpop.f32.mrf.mxu0
        %v2504 = vadd.f32 0.0, %v2503
        %v2505 = vpop.f32.mrf.mxu0
        %2506 = vmatprep.mubr.bf16.mxu0 0
        %2507 = vmatmul.mubr.bf16.gmra.mxu0 %v2389
        %v2508 = vpop.f32.mrf.mxu0
        %v2509 = vadd.f32 0.0, %v2508
        %v2510 = vpop.f32.mrf.mxu0
        %v2511 = vpop.f32.mrf.mxu0
        %v2512 = vadd.f32 0.0, %v2511
        %v2513 = vpop.f32.mrf.mxu0
        %2514 = vmatprep.mubr.bf16.mxu0 0
        %2515 = vmatmul.mubr.bf16.gmra.mxu0 %v2392
        %v2516 = vpop.f32.mrf.mxu0
        %v2517 = vadd.f32 0.0, %v2516
        %v2518 = vpop.f32.mrf.mxu0
        %v2519 = vpop.f32.mrf.mxu0
        %v2520 = vadd.f32 0.0, %v2519
        %v2521 = vpop.f32.mrf.mxu0
        %2522 = vmatprep.mubr.bf16.mxu0 0
        %2523 = vmatmul.mubr.bf16.gmra.mxu0 %v2395
        %v2524 = vpop.f32.mrf.mxu0
        %v2525 = vadd.f32 0.0, %v2524
        %v2526 = vpop.f32.mrf.mxu0
        %v2527 = vpop.f32.mrf.mxu0
        %v2528 = vadd.f32 0.0, %v2527
        %v2529 = vpop.f32.mrf.mxu0
        %2530 = vmatprep.mubr.bf16.mxu0 0
        %2531 = vmatmul.mubr.bf16.gmra.mxu0 %v2398
        %v2532 = vpop.f32.mrf.mxu0
        %v2533 = vadd.f32 0.0, %v2532
        %v2534 = vpop.f32.mrf.mxu0
        %v2535 = vpop.f32.mrf.mxu0
        %v2536 = vadd.f32 0.0, %v2535
        %v2537 = vpop.f32.mrf.mxu0
        %2538 = vmatprep.mubr.bf16.mxu0 0
        %2539 = vmatmul.mubr.bf16.gmra.mxu0 %v2401
        %v2540 = vpop.f32.mrf.mxu0
        %v2541 = vadd.f32 0.0, %v2540
        %v2542 = vpop.f32.mrf.mxu0
        %v2543 = vpop.f32.mrf.mxu0
        %v2544 = vadd.f32 0.0, %v2543
        %v2545 = vpop.f32.mrf.mxu0
        %2546 = vmatprep.mubr.bf16.mxu0 0
        %2547 = vmatmul.mubr.bf16.gmra.mxu0 %v2404
        %v2548 = vpop.f32.mrf.mxu0
        %v2549 = vadd.f32 0.0, %v2548
        %v2550 = vpop.f32.mrf.mxu0
        %v2551 = vpop.f32.mrf.mxu0
        %v2552 = vadd.f32 0.0, %v2551
        %v2553 = vpop.f32.mrf.mxu0
        %2554 = vmatprep.mubr.bf16.mxu0 0
        %2555 = vmatmul.mubr.bf16.gmra.mxu0 %v2407
        %v2556 = vpop.f32.mrf.mxu0
        %v2557 = vadd.f32 0.0, %v2556
        %v2558 = vpop.f32.mrf.mxu0
        %v2559 = vpop.f32.mrf.mxu0
        %v2560 = vadd.f32 0.0, %v2559
        %v2561 = vpop.f32.mrf.mxu0
        %2562 = vmatprep.mubr.bf16.mxu0 0
        %2563 = vmatmul.mubr.bf16.gmra.mxu0 %v2410
        %v2564 = vpop.f32.mrf.mxu0
        %v2565 = vadd.f32 0.0, %v2564
        %v2566 = vpop.f32.mrf.mxu0
        %v2567 = vpop.f32.mrf.mxu0
        %v2568 = vadd.f32 0.0, %v2567
        %v2569 = vpop.f32.mrf.mxu0
        %2570 = vmatprep.mubr.bf16.mxu0 0
        %2571 = vmatmul.mubr.bf16.gmra.mxu0 %v2413
        %v2572 = vpop.f32.mrf.mxu0
        %v2573 = vadd.f32 0.0, %v2572
        %v2574 = vpop.f32.mrf.mxu0
        %v2575 = vpop.f32.mrf.mxu0
        %v2576 = vadd.f32 0.0, %v2575
        %v2577 = vpop.f32.mrf.mxu0
        %2578 = vdwg.mxu0
        %v2579 = vadd.f32 %v2285, %v2453
        %v2580 = vadd.f32 %v2286, %v2456
        %v2581 = vadd.f32 %v2287, %v2461
        %v2582 = vadd.f32 %v2288, %v2464
        %v2583 = vadd.f32 %v2289, %v2469
        %v2584 = vadd.f32 %v2290, %v2472
        %v2585 = vadd.f32 %v2291, %v2477
        %v2586 = vadd.f32 %v2292, %v2480
        %v2587 = vadd.f32 %v2293, %v2485
        %v2588 = vadd.f32 %v2294, %v2488
        %v2589 = vadd.f32 %v2295, %v2493
        %v2590 = vadd.f32 %v2296, %v2496
        %v2591 = vadd.f32 %v2297, %v2501
        %v2592 = vadd.f32 %v2298, %v2504
        %v2593 = vadd.f32 %v2299, %v2509
        %v2594 = vadd.f32 %v2300, %v2512
        %v2595 = vadd.f32 %v2301, %v2517
        %v2596 = vadd.f32 %v2302, %v2520
        %v2597 = vadd.f32 %v2303, %v2525
        %v2598 = vadd.f32 %v2304, %v2528
        %v2599 = vadd.f32 %v2305, %v2533
        %v2600 = vadd.f32 %v2306, %v2536
        %v2601 = vadd.f32 %v2307, %v2541
        %v2602 = vadd.f32 %v2308, %v2544
        %v2603 = vadd.f32 %v2309, %v2549
        %v2604 = vadd.f32 %v2310, %v2552
        %v2605 = vadd.f32 %v2311, %v2557
        %v2606 = vadd.f32 %v2312, %v2560
        %v2607 = vadd.f32 %v2313, %v2565
        %v2608 = vadd.f32 %v2314, %v2568
        %v2609 = vadd.f32 %v2315, %v2573
        %v2610 = vadd.f32 %v2316, %v2576
        %v2611 = vld [vmem:[%s2022 + $0x2] sm:$0xff]
        %v2612 = vld [vmem:[%s2022 + $0xa] sm:$0xff]
        %v2613 = vld [vmem:[%s2022 + $0x1a] sm:$0xff]
        %v2614 = vld [vmem:[%s2022 + $0x22] sm:$0xff]
        %v2615 = vld [vmem:[%s2022 + $0x32] sm:$0xff]
        %v2616 = vld [vmem:[%s2022 + $0x3a] sm:$0xff]
        %v2617 = vld [vmem:[%s2022 + $0x4a] sm:$0xff]
        %v2618 = vld [vmem:[%s2022 + $0x52] sm:$0xff]
        %v2619 = vld [vmem:[%s2022 + $0x62] sm:$0xff]
        %v2620 = vld [vmem:[%s2022 + $0x6a] sm:$0xff]
        %v2621 = vld [vmem:[%s2022 + $0x7a] sm:$0xff]
        %v2622 = vld [vmem:[%s2022 + $0x82] sm:$0xff]
        %v2623 = vld [vmem:[%s2022 + $0x92] sm:$0xff]
        %v2624 = vld [vmem:[%s2022 + $0x9a] sm:$0xff]
        %v2625 = vld [vmem:[%s2022 + $0xaa] sm:$0xff]
        %v2626 = vld [vmem:[%s2022 + $0xb2] sm:$0xff]
        %v2627 = vld [vmem:[%s2022 + $0xc2] sm:$0xff]
        %v2628 = vld [vmem:[%s2022 + $0xca] sm:$0xff]
        %v2629 = vld [vmem:[%s2022 + $0xda] sm:$0xff]
        %v2630 = vld [vmem:[%s2022 + $0xe2] sm:$0xff]
        %v2631 = vld [vmem:[%s2022 + $0xf2] sm:$0xff]
        %v2632 = vld [vmem:[%s2022 + $0xfa] sm:$0xff]
        %v2633 = vld [vmem:[%s2022 + $0x10a] sm:$0xff]
        %v2634 = vld [vmem:[%s2022 + $0x112] sm:$0xff]
        %v2635 = vld [vmem:[%s2022 + $0x122] sm:$0xff]
        %v2636 = vld [vmem:[%s2022 + $0x12a] sm:$0xff]
        %v2637 = vld [vmem:[%s2022 + $0x13a] sm:$0xff]
        %v2638 = vld [vmem:[%s2022 + $0x142] sm:$0xff]
        %v2639 = vld [vmem:[%s2022 + $0x152] sm:$0xff]
        %v2640 = vld [vmem:[%s2022 + $0x15a] sm:$0xff]
        %v2641 = vld [vmem:[%s2022 + $0x16a] sm:$0xff]
        %v2642 = vld [vmem:[%s2022 + $0x172] sm:$0xff]
        %v2643 = vpack.c.bf16 %v2612, %v2611
        %v2644 = vpack.c.bf16 %v2614, %v2613
        %v2645 = vpack.c.bf16 %v2616, %v2615
        %v2646 = vpack.c.bf16 %v2618, %v2617
        %v2647 = vpack.c.bf16 %v2620, %v2619
        %v2648 = vpack.c.bf16 %v2622, %v2621
        %v2649 = vpack.c.bf16 %v2624, %v2623
        %v2650 = vpack.c.bf16 %v2626, %v2625
        %v2651 = vpack.c.bf16 %v2628, %v2627
        %v2652 = vpack.c.bf16 %v2630, %v2629
        %v2653 = vpack.c.bf16 %v2632, %v2631
        %v2654 = vpack.c.bf16 %v2634, %v2633
        %v2655 = vpack.c.bf16 %v2636, %v2635
        %v2656 = vpack.c.bf16 %v2638, %v2637
        %v2657 = vpack.c.bf16 %v2640, %v2639
        %v2658 = vpack.c.bf16 %v2642, %v2641
        %s2659 = scalar_lea.vmem %s1, 16
        %v2660 = vld [vmem:[%s2659] sm:$0x3]
        %v2662 = vsel %vm412, %v2643, 0
        %v2665 = vsel %vm412, %v2644, 0
        %v2668 = vsel %vm412, %v2645, 0
        %v2671 = vsel %vm412, %v2646, 0
        %v2674 = vsel %vm412, %v2647, 0
        %v2677 = vsel %vm412, %v2648, 0
        %v2680 = vsel %vm412, %v2649, 0
        %v2683 = vsel %vm412, %v2650, 0
        %v2686 = vsel %vm412, %v2651, 0
        %v2689 = vsel %vm412, %v2652, 0
        %v2692 = vsel %vm412, %v2653, 0
        %v2695 = vsel %vm412, %v2654, 0
        %v2698 = vsel %vm412, %v2655, 0
        %v2701 = vsel %vm412, %v2656, 0
        %v2704 = vsel %vm412, %v2657, 0
        %v2707 = vsel %vm412, %v2658, 0
        %v2710 = vand.u32 %v2660, %v464
        %2712 = vmatprep.subr.bf16.mxu0 0
        %2713 = vmatpush1.bf16.msra.mxu0 0
        %2714 = vmatprep.subr.bf16.mxu0 0
        %2715 = vmatpush1.bf16.msra.mxu0 0
        %2716 = vmatprep.subr.bf16.mxu0 0
        %2717 = vmatpush1.bf16.msra.mxu0 0
        %2718 = vmatprep.subr.bf16.mxu0 0
        %2719 = vmatpush1.bf16.msra.mxu0 0
        %2720 = vmatprep.subr.bf16.mxu0 0
        %2721 = vmatpush1.bf16.msra.mxu0 0
        %2722 = vmatprep.subr.bf16.mxu0 0
        %2723 = vmatpush1.bf16.msra.mxu0 0
        %2724 = vmatprep.subr.bf16.mxu0 0
        %2725 = vmatpush1.bf16.msra.mxu0 0
        %2726 = vmatprep.subr.bf16.mxu0 0
        %2727 = vmatpush1.bf16.msra.mxu0 %v2710
        %2728 = vmatprep.subr.bf16.mxu0 0
        %2729 = vmatpush2.bf16.msra.mxu0 0
        %2730 = vmatprep.subr.bf16.mxu0 0
        %2731 = vmatpush2.bf16.msra.mxu0 0
        %2732 = vmatprep.subr.bf16.mxu0 0
        %2733 = vmatpush2.bf16.msra.mxu0 0
        %2734 = vmatprep.subr.bf16.mxu0 0
        %2735 = vmatpush2.bf16.msra.mxu0 0
        %2736 = vmatprep.subr.bf16.mxu0 0
        %2737 = vmatpush2.bf16.msra.mxu0 0
        %2738 = vmatprep.subr.bf16.mxu0 0
        %2739 = vmatpush2.bf16.msra.mxu0 0
        %2740 = vmatprep.subr.bf16.mxu0 0
        %2741 = vmatpush2.bf16.msra.mxu0 0
        %2742 = vmatprep.subr.bf16.mxu0 0
        %2743 = vmatpush2.bf16.msra.mxu0 0
        %2744 = vmatprep.mubr.bf16.mxu0 0
        %2745 = vmatmul.mubr.bf16.gmra.mxu0 %v2662
        %v2746 = vpop.f32.mrf.mxu0
        %v2747 = vadd.f32 0.0, %v2746
        %v2748 = vpop.f32.mrf.mxu0
        %v2749 = vpop.f32.mrf.mxu0
        %v2750 = vadd.f32 0.0, %v2749
        %v2751 = vpop.f32.mrf.mxu0
        %2752 = vmatprep.mubr.bf16.mxu0 0
        %2753 = vmatmul.mubr.bf16.gmra.mxu0 %v2665
        %v2754 = vpop.f32.mrf.mxu0
        %v2755 = vadd.f32 0.0, %v2754
        %v2756 = vpop.f32.mrf.mxu0
        %v2757 = vpop.f32.mrf.mxu0
        %v2758 = vadd.f32 0.0, %v2757
        %v2759 = vpop.f32.mrf.mxu0
        %2760 = vmatprep.mubr.bf16.mxu0 0
        %2761 = vmatmul.mubr.bf16.gmra.mxu0 %v2668
        %v2762 = vpop.f32.mrf.mxu0
        %v2763 = vadd.f32 0.0, %v2762
        %v2764 = vpop.f32.mrf.mxu0
        %v2765 = vpop.f32.mrf.mxu0
        %v2766 = vadd.f32 0.0, %v2765
        %v2767 = vpop.f32.mrf.mxu0
        %2768 = vmatprep.mubr.bf16.mxu0 0
        %2769 = vmatmul.mubr.bf16.gmra.mxu0 %v2671
        %v2770 = vpop.f32.mrf.mxu0
        %v2771 = vadd.f32 0.0, %v2770
        %v2772 = vpop.f32.mrf.mxu0
        %v2773 = vpop.f32.mrf.mxu0
        %v2774 = vadd.f32 0.0, %v2773
        %v2775 = vpop.f32.mrf.mxu0
        %2776 = vmatprep.mubr.bf16.mxu0 0
        %2777 = vmatmul.mubr.bf16.gmra.mxu0 %v2674
        %v2778 = vpop.f32.mrf.mxu0
        %v2779 = vadd.f32 0.0, %v2778
        %v2780 = vpop.f32.mrf.mxu0
        %v2781 = vpop.f32.mrf.mxu0
        %v2782 = vadd.f32 0.0, %v2781
        %v2783 = vpop.f32.mrf.mxu0
        %2784 = vmatprep.mubr.bf16.mxu0 0
        %2785 = vmatmul.mubr.bf16.gmra.mxu0 %v2677
        %v2786 = vpop.f32.mrf.mxu0
        %v2787 = vadd.f32 0.0, %v2786
        %v2788 = vpop.f32.mrf.mxu0
        %v2789 = vpop.f32.mrf.mxu0
        %v2790 = vadd.f32 0.0, %v2789
        %v2791 = vpop.f32.mrf.mxu0
        %2792 = vmatprep.mubr.bf16.mxu0 0
        %2793 = vmatmul.mubr.bf16.gmra.mxu0 %v2680
        %v2794 = vpop.f32.mrf.mxu0
        %v2795 = vadd.f32 0.0, %v2794
        %v2796 = vpop.f32.mrf.mxu0
        %v2797 = vpop.f32.mrf.mxu0
        %v2798 = vadd.f32 0.0, %v2797
        %v2799 = vpop.f32.mrf.mxu0
        %2800 = vmatprep.mubr.bf16.mxu0 0
        %2801 = vmatmul.mubr.bf16.gmra.mxu0 %v2683
        %v2802 = vpop.f32.mrf.mxu0
        %v2803 = vadd.f32 0.0, %v2802
        %v2804 = vpop.f32.mrf.mxu0
        %v2805 = vpop.f32.mrf.mxu0
        %v2806 = vadd.f32 0.0, %v2805
        %v2807 = vpop.f32.mrf.mxu0
        %2808 = vmatprep.mubr.bf16.mxu0 0
        %2809 = vmatmul.mubr.bf16.gmra.mxu0 %v2686
        %v2810 = vpop.f32.mrf.mxu0
        %v2811 = vadd.f32 0.0, %v2810
        %v2812 = vpop.f32.mrf.mxu0
        %v2813 = vpop.f32.mrf.mxu0
        %v2814 = vadd.f32 0.0, %v2813
        %v2815 = vpop.f32.mrf.mxu0
        %2816 = vmatprep.mubr.bf16.mxu0 0
        %2817 = vmatmul.mubr.bf16.gmra.mxu0 %v2689
        %v2818 = vpop.f32.mrf.mxu0
        %v2819 = vadd.f32 0.0, %v2818
        %v2820 = vpop.f32.mrf.mxu0
        %v2821 = vpop.f32.mrf.mxu0
        %v2822 = vadd.f32 0.0, %v2821
        %v2823 = vpop.f32.mrf.mxu0
        %2824 = vmatprep.mubr.bf16.mxu0 0
        %2825 = vmatmul.mubr.bf16.gmra.mxu0 %v2692
        %v2826 = vpop.f32.mrf.mxu0
        %v2827 = vadd.f32 0.0, %v2826
        %v2828 = vpop.f32.mrf.mxu0
        %v2829 = vpop.f32.mrf.mxu0
        %v2830 = vadd.f32 0.0, %v2829
        %v2831 = vpop.f32.mrf.mxu0
        %2832 = vmatprep.mubr.bf16.mxu0 0
        %2833 = vmatmul.mubr.bf16.gmra.mxu0 %v2695
        %v2834 = vpop.f32.mrf.mxu0
        %v2835 = vadd.f32 0.0, %v2834
        %v2836 = vpop.f32.mrf.mxu0
        %v2837 = vpop.f32.mrf.mxu0
        %v2838 = vadd.f32 0.0, %v2837
        %v2839 = vpop.f32.mrf.mxu0
        %2840 = vmatprep.mubr.bf16.mxu0 0
        %2841 = vmatmul.mubr.bf16.gmra.mxu0 %v2698
        %v2842 = vpop.f32.mrf.mxu0
        %v2843 = vadd.f32 0.0, %v2842
        %v2844 = vpop.f32.mrf.mxu0
        %v2845 = vpop.f32.mrf.mxu0
        %v2846 = vadd.f32 0.0, %v2845
        %v2847 = vpop.f32.mrf.mxu0
        %2848 = vmatprep.mubr.bf16.mxu0 0
        %2849 = vmatmul.mubr.bf16.gmra.mxu0 %v2701
        %v2850 = vpop.f32.mrf.mxu0
        %v2851 = vadd.f32 0.0, %v2850
        %v2852 = vpop.f32.mrf.mxu0
        %v2853 = vpop.f32.mrf.mxu0
        %v2854 = vadd.f32 0.0, %v2853
        %v2855 = vpop.f32.mrf.mxu0
        %2856 = vmatprep.mubr.bf16.mxu0 0
        %2857 = vmatmul.mubr.bf16.gmra.mxu0 %v2704
        %v2858 = vpop.f32.mrf.mxu0
        %v2859 = vadd.f32 0.0, %v2858
        %v2860 = vpop.f32.mrf.mxu0
        %v2861 = vpop.f32.mrf.mxu0
        %v2862 = vadd.f32 0.0, %v2861
        %v2863 = vpop.f32.mrf.mxu0
        %2864 = vmatprep.mubr.bf16.mxu0 0
        %2865 = vmatmul.mubr.bf16.gmra.mxu0 %v2707
        %v2866 = vpop.f32.mrf.mxu0
        %v2867 = vadd.f32 0.0, %v2866
        %v2868 = vpop.f32.mrf.mxu0
        %v2869 = vpop.f32.mrf.mxu0
        %v2870 = vadd.f32 0.0, %v2869
        %v2871 = vpop.f32.mrf.mxu0
        %2872 = vdwg.mxu0
        %v2873 = vadd.f32 %v2579, %v2747
        %v2874 = vadd.f32 %v2580, %v2750
        %v2875 = vadd.f32 %v2581, %v2755
        %v2876 = vadd.f32 %v2582, %v2758
        %v2877 = vadd.f32 %v2583, %v2763
        %v2878 = vadd.f32 %v2584, %v2766
        %v2879 = vadd.f32 %v2585, %v2771
        %v2880 = vadd.f32 %v2586, %v2774
        %v2881 = vadd.f32 %v2587, %v2779
        %v2882 = vadd.f32 %v2588, %v2782
        %v2883 = vadd.f32 %v2589, %v2787
        %v2884 = vadd.f32 %v2590, %v2790
        %v2885 = vadd.f32 %v2591, %v2795
        %v2886 = vadd.f32 %v2592, %v2798
        %v2887 = vadd.f32 %v2593, %v2803
        %v2888 = vadd.f32 %v2594, %v2806
        %v2889 = vadd.f32 %v2595, %v2811
        %v2890 = vadd.f32 %v2596, %v2814
        %v2891 = vadd.f32 %v2597, %v2819
        %v2892 = vadd.f32 %v2598, %v2822
        %v2893 = vadd.f32 %v2599, %v2827
        %v2894 = vadd.f32 %v2600, %v2830
        %v2895 = vadd.f32 %v2601, %v2835
        %v2896 = vadd.f32 %v2602, %v2838
        %v2897 = vadd.f32 %v2603, %v2843
        %v2898 = vadd.f32 %v2604, %v2846
        %v2899 = vadd.f32 %v2605, %v2851
        %v2900 = vadd.f32 %v2606, %v2854
        %v2901 = vadd.f32 %v2607, %v2859
        %v2902 = vadd.f32 %v2608, %v2862
        %v2903 = vadd.f32 %v2609, %v2867
        %v2904 = vadd.f32 %v2610, %v2870
        %v2905 = vld [vmem:[%s2] sm:$0x1]
        %v2907 = vlaneseq
        %v2908 = vshrl.u32 %v2907, 7
        %v2909 = vsub.s32 0, %v2908
        %v2910 = vrot.slane %v2905, %v2909
        %v2912 = vadd.f32 %v2873, %v2910
        %v2913 = vadd.f32 %v2874, %v2910
        %v2914 = vadd.f32 %v2875, %v2910
        %v2915 = vadd.f32 %v2876, %v2910
        %v2916 = vadd.f32 %v2877, %v2910
        %v2917 = vadd.f32 %v2878, %v2910
        %v2918 = vadd.f32 %v2879, %v2910
        %v2919 = vadd.f32 %v2880, %v2910
        %v2920 = vadd.f32 %v2881, %v2910
        %v2921 = vadd.f32 %v2882, %v2910
        %v2922 = vadd.f32 %v2883, %v2910
        %v2923 = vadd.f32 %v2884, %v2910
        %v2924 = vadd.f32 %v2885, %v2910
        %v2925 = vadd.f32 %v2886, %v2910
        %v2926 = vadd.f32 %v2887, %v2910
        %v2927 = vadd.f32 %v2888, %v2910
        %v2928 = vadd.f32 %v2889, %v2910
        %v2929 = vadd.f32 %v2890, %v2910
        %v2930 = vadd.f32 %v2891, %v2910
        %v2931 = vadd.f32 %v2892, %v2910
        %v2932 = vadd.f32 %v2893, %v2910
        %v2933 = vadd.f32 %v2894, %v2910
        %v2934 = vadd.f32 %v2895, %v2910
        %v2935 = vadd.f32 %v2896, %v2910
        %v2936 = vadd.f32 %v2897, %v2910
        %v2937 = vadd.f32 %v2898, %v2910
        %v2938 = vadd.f32 %v2899, %v2910
        %v2939 = vadd.f32 %v2900, %v2910
        %v2940 = vadd.f32 %v2901, %v2910
        %v2941 = vadd.f32 %v2902, %v2910
        %v2942 = vadd.f32 %v2903, %v2910
        %v2943 = vadd.f32 %v2904, %v2910
        %vm2944 = vcmask 261120
        %2945 = vst.msk [vmem:[%s177] sm:$0xff] %vm2944, %v2912
        %2946 = vst.msk [vmem:[%s177 + $0x8] sm:$0xff] %vm2944, %v2913
        %2947 = vst.msk [vmem:[%s177 + $0x10] sm:$0xff] %vm2944, %v2914
        %2948 = vst.msk [vmem:[%s177 + $0x18] sm:$0xff] %vm2944, %v2915
        %2949 = vst.msk [vmem:[%s177 + $0x20] sm:$0xff] %vm2944, %v2916
        %2950 = vst.msk [vmem:[%s177 + $0x28] sm:$0xff] %vm2944, %v2917
        %2951 = vst.msk [vmem:[%s177 + $0x30] sm:$0xff] %vm2944, %v2918
        %2952 = vst.msk [vmem:[%s177 + $0x38] sm:$0xff] %vm2944, %v2919
        %2953 = vst.msk [vmem:[%s177 + $0x40] sm:$0xff] %vm2944, %v2920
        %2954 = vst.msk [vmem:[%s177 + $0x48] sm:$0xff] %vm2944, %v2921
        %2955 = vst.msk [vmem:[%s177 + $0x50] sm:$0xff] %vm2944, %v2922
        %2956 = vst.msk [vmem:[%s177 + $0x58] sm:$0xff] %vm2944, %v2923
        %2957 = vst.msk [vmem:[%s177 + $0x60] sm:$0xff] %vm2944, %v2924
        %2958 = vst.msk [vmem:[%s177 + $0x68] sm:$0xff] %vm2944, %v2925
        %2959 = vst.msk [vmem:[%s177 + $0x70] sm:$0xff] %vm2944, %v2926
        %2960 = vst.msk [vmem:[%s177 + $0x78] sm:$0xff] %vm2944, %v2927
        %2961 = vst.msk [vmem:[%s177 + $0x80] sm:$0xff] %vm2944, %v2928
        %2962 = vst.msk [vmem:[%s177 + $0x88] sm:$0xff] %vm2944, %v2929
        %2963 = vst.msk [vmem:[%s177 + $0x90] sm:$0xff] %vm2944, %v2930
        %2964 = vst.msk [vmem:[%s177 + $0x98] sm:$0xff] %vm2944, %v2931
        %2965 = vst.msk [vmem:[%s177 + $0xa0] sm:$0xff] %vm2944, %v2932
        %2966 = vst.msk [vmem:[%s177 + $0xa8] sm:$0xff] %vm2944, %v2933
        %2967 = vst.msk [vmem:[%s177 + $0xb0] sm:$0xff] %vm2944, %v2934
        %2968 = vst.msk [vmem:[%s177 + $0xb8] sm:$0xff] %vm2944, %v2935
        %2969 = vst.msk [vmem:[%s177 + $0xc0] sm:$0xff] %vm2944, %v2936
        %2970 = vst.msk [vmem:[%s177 + $0xc8] sm:$0xff] %vm2944, %v2937
        %2971 = vst.msk [vmem:[%s177 + $0xd0] sm:$0xff] %vm2944, %v2938
        %2972 = vst.msk [vmem:[%s177 + $0xd8] sm:$0xff] %vm2944, %v2939
        %2973 = vst.msk [vmem:[%s177 + $0xe0] sm:$0xff] %vm2944, %v2940
        %2974 = vst.msk [vmem:[%s177 + $0xe8] sm:$0xff] %vm2944, %v2941
        %2975 = vst.msk [vmem:[%s177 + $0xf0] sm:$0xff] %vm2944, %v2942
        %2976 = vst.msk [vmem:[%s177 + $0xf8] sm:$0xff] %vm2944, %v2943
        %s2977 = sand.u32 %s107, 1
        %s2978 = scalar_lea.sflag [#allocation4], %s2977
        %s2979 = sand.u32 %s107, 1
        %s2980 = smul.addr %s2979, 256
        %s2981 = scalar_lea.vmem [#allocation3], %s2980
        // Predicated region
        $region37: #{_lambda_.1} parent=31 // pred_check
          %p2982 = pneg %p117
        $region38: #{_lambda_.1} parent=31 // pred_check_branch
          %2984 = sbr.rel (%p2982) target = $region40
        $region39: #{_lambda_.1} parent=31 // pred_region
          %s2985 = smul.u32 16, %s22
          %s2987 = ssub.s32 4096, 4096
          %2988 = vsyncadd %s2978, %s2987
          %s2989 = smul.addr %s2985, 2
          %s2990 = smul.addr %s21, 32
          %s2991 = sadd.s32 %s2989, %s2990
          %s2992 = smul.addr %s2991, 128
          %s2993 = scalar_lea.hbm %s3, %s2992
          %s2994 = sshll.u32 %s2981, 4
          %s2995 = int_to_ptr.vmem [resolvable:$true] %s2994
          %3000 = dma.vmem_to_hbm [thread:$0]  %s2995, 4096, %s2993, %s2978, 128, 128, 8
        $region40: #{_lambda_.1} parent=31 // pred_fallthru
          _
      $region32: #{_lambda_.1} parent=5 // pred_fallthru
        _
      %p3001 = scmp.le.s32.totalorder 2, %s12
      // Predicated region
      $region41: #{_lambda_.1} parent=5 // pred_check
        %p3002 = pneg %p3001
      $region42: #{_lambda_.1} parent=5 // pred_check_branch
        %3004 = sbr.rel (%p3002) target = $region44
      $region43: #{_lambda_.1} parent=5 // pred_region
        %s3005 = ssub.s32 %s12, 2
        // Predicated region
        $region45: #{_lambda_.1} parent=43 // pred_check
          %p3006 = pneg %p123
        $region46: #{_lambda_.1} parent=43 // pred_check_branch
          %3008 = sbr.rel (%p3006) target = $region48
        $region47: #{_lambda_.1} parent=43 // pred_region
          %s3009 = sand.u32 %s108, 1
          %s3010 = scalar_lea.sflag [#allocation4], %s3009
          %s3011 = sand.u32 %s108, 1
          %s3012 = smul.addr %s3011, 256
          %s3013 = scalar_lea.vmem [#allocation3], %s3012
          %3014 = dma.done %s3010, 4096
        $region48: #{_lambda_.1} parent=43 // pred_fallthru
          _
      $region44: #{_lambda_.1} parent=5 // pred_fallthru
        _
    $region6: #{_lambda_.1} parent=1 // loop_footer
      %s16 = sadd.s32 1, %s12
    $region7: #{_lambda_.1} parent=1 // loop_footer_branch
      %11 = sbr.rel target = $region3
    $region8: #{_lambda_.1} parent=1 // loop_exit
      _
    %3015 = vsyncpa [#allocation4], 1
    %s3016 = scalar_lea.sflag [#allocation4], 1
    %3017 = vsyncpa %s3016, 1

</llo_original>
